<compile_context>
chip_gen: v7x
topology: tpu7x:2x2x1
jax: 0.10.0
libtpu: 0.0.40
codegen_flags: <defaults>
</compile_context>

<pallas_src>
import jax
import jax.numpy as jnp
import numpy as np
from jax import lax
from jax.experimental import pallas as pl
from jax.experimental.pallas import tpu as pltpu

# Small, module-consistent shapes.
B = 2        # batch
T = 8        # sequence length
D_IN = 8     # input_dim
H = 32       # hidden_dim
H2 = 2 * H   # bidirectional encoder feature size
H4 = 4 * H   # gate width of the encoder LSTM
D4 = 4 * D_IN
ATTN_H = 64  # hidden width of the attention MLP


def autoenc_kernel(x_ref, wih_cat_ref, whh_cat_ref, b_cat_ref,
                   conv_w_ref, conv_b_ref,
                   a1_w_ref, a1_b_ref, a2_row_ref, a2_b_ref,
                   dwih_ref, dwhh_ref, db_ref,
                   out_ref):
    f32 = jnp.float32

    # ---------------- bidirectional LSTM encoder (interleaved, fused) ----------------
    # Hoisted input projection for both directions at once:
    #   G[:, :4H] = x @ wih_f + b_f,   G[:, 4H:] = x @ wih_b + b_b
    x_flat = x_ref[...]                                               # (T*B, D_IN)
    G = jnp.dot(x_flat, wih_cat_ref[...],
                preferred_element_type=f32) + b_cat_ref[...]          # (T*B, 8H)
    whh_cat = whh_cat_ref[...]                                        # (H, 8H) = [whh_f | whh_b]

    # Loop-invariant lane/row masks (hoisted).
    lane_e = lax.broadcasted_iota(jnp.int32, (2 * B, H4), 1)
    gmask_e = jnp.logical_and(lane_e >= 2 * H, lane_e < 3 * H)        # "g" gate lanes (tanh)
    scale_e = jnp.where(gmask_e, f32(1.0), f32(0.5))
    row_e = lax.broadcasted_iota(jnp.int32, (2 * B, H4), 0)
    fwd_rows = row_e < B                                              # rows [0:B] = forward dir

    hstack = jnp.zeros((2 * B, H), f32)    # rows [0:B] forward state, [B:2B] backward state
    cstack = jnp.zeros((2 * B, H), f32)
    hf = [None] * T
    hb = [None] * T
    for s in range(T):                     # fwd step t=s interleaved with bwd step t=T-1-s
        tf, tb = s, T - 1 - s
        rec = jnp.dot(hstack, whh_cat, preferred_element_type=f32)    # (2B, 8H), one MXU push
        rec_sel = jnp.where(fwd_rows, rec[:, :H4], rec[:, H4:])       # each dir picks its whh
        gin = jnp.concatenate([G[tf * B:(tf + 1) * B, :H4],
                               G[tb * B:(tb + 1) * B, H4:]], axis=0)  # (2B, 4H)
        gates = gin + rec_sel
        # sigmoid(x) = 0.5*(1 + tanh(x/2))  ->  one full-width tanh for all 4 gates.
        t_all = jnp.tanh(gates * scale_e)
        act = jnp.where(gmask_e, t_all, 0.5 * (1.0 + t_all))
        i = act[:, :H]
        f = act[:, H:2 * H]
        g = act[:, 2 * H:3 * H]
        o = act[:, 3 * H:]
        cstack = f * cstack + i * g
        hstack = o * jnp.tanh(cstack)
        hf[tf] = hstack[:B]
        hb[tb] = hstack[B:]

    # enc_flat[t*B + b] = [h_fwd[t, b] | h_bwd[t, b]]   (T*B, 2H), register value only.
    enc_flat = jnp.concatenate(
        [jnp.concatenate([hf[t], hb[t]], axis=1) for t in range(T)], axis=0)

    # ---------------- Conv1d(2H->2H, k=3, pad=1) as 3 batched matmuls + shift-add ----------------
    P0 = jnp.dot(enc_flat, conv_w_ref[0], preferred_element_type=f32)
    P1 = jnp.dot(enc_flat, conv_w_ref[1], preferred_element_type=f32)
    P2 = jnp.dot(enc_flat, conv_w_ref[2], preferred_element_type=f32)
    zpad = jnp.zeros((B, H2), f32)
    P0s = jnp.concatenate([zpad, P0[:(T - 1) * B]], axis=0)           # enc[t-1] contribution
    P2s = jnp.concatenate([P2[B:], zpad], axis=0)                     # enc[t+1] contribution
    cnn_flat = P1 + P0s + P2s + conv_b_ref[...]                       # (T*B, 2H)

    # ---------------- attention (softmax over time) ----------------
    h1 = jnp.tanh(jnp.dot(cnn_flat, a1_w_ref[...],
                          preferred_element_type=f32) + a1_b_ref[...])  # (T*B, 64)
    # (T*B,64)@(64,1) would be a nearly-empty MXU op -> VPU multiply + lane reduce instead.
    scores = jnp.sum(h1 * a2_row_ref[...], axis=1, keepdims=True) + a2_b_ref[...]  # (T*B, 1)
    scores3 = scores.reshape(T, B, 1)
    m = jnp.max(scores3, axis=0, keepdims=True)
    e = jnp.exp(scores3 - m)
    w = e / jnp.sum(e, axis=0, keepdims=True)                         # softmax over time
    cnn3 = cnn_flat.reshape(T, B, H2)
    attended = jnp.sum(cnn3 * w, axis=0)                              # (B, 2H)

    # ---------------- decoder LSTM (same attended vector fed at every step) ----------------
    gx = jnp.dot(attended, dwih_ref[...], preferred_element_type=f32) + db_ref[...]  # (B, 4*D_IN)
    dwhh = dwhh_ref[...]
    lane_d = lax.broadcasted_iota(jnp.int32, (B, D4), 1)
    gmask_d = jnp.logical_and(lane_d >= 2 * D_IN, lane_d < 3 * D_IN)
    scale_d = jnp.where(gmask_d, f32(1.0), f32(0.5))
    h = jnp.zeros((B, D_IN), f32)
    c = jnp.zeros((B, D_IN), f32)
    outs = []
    for t in range(T):
        gates = gx + jnp.dot(h, dwhh, preferred_element_type=f32)
        t_all = jnp.tanh(gates * scale_d)
        act = jnp.where(gmask_d, t_all, 0.5 * (1.0 + t_all))
        i = act[:, :D_IN]
        f = act[:, D_IN:2 * D_IN]
        g = act[:, 2 * D_IN:3 * D_IN]
        o = act[:, 3 * D_IN:]
        c = f * c + i * g
        h = o * jnp.tanh(c)
        outs.append(h)
    # Single consolidated store: (B, T*D_IN); wrapper reshapes to (B, T, D_IN).
    out_ref[...] = jnp.concatenate(outs, axis=1)


def autoencoder_forward(x, p):
    """x: (B, T, D_IN) -> (B, T, D_IN), like the PyTorch module."""
    x_flat = jnp.transpose(x, (1, 0, 2)).reshape(T * B, D_IN).astype(jnp.float32)
    # Fuse per-direction encoder weights side-by-side so the in-kernel matmuls are 256-wide.
    wih_cat = jnp.concatenate([p['wih_f'], p['wih_b']], axis=1)       # (D_IN, 8H)
    whh_cat = jnp.concatenate([p['whh_f'], p['whh_b']], axis=1)       # (H, 8H)
    b_cat = jnp.concatenate([p['b_f'], p['b_b']], axis=1)             # (1, 8H)
    a2_row = jnp.transpose(p['a2_w'])                                 # (1, ATTN_H)
    args = (x_flat, wih_cat, whh_cat, b_cat,
            p['conv_w'], p['conv_b'],
            p['a1_w'], p['a1_b'], a2_row, p['a2_b'],
            p['dwih'], p['dwhh'], p['db'])
    vmem = pl.BlockSpec(memory_space=pltpu.MemorySpace.VMEM)
    out = pl.pallas_call(
        autoenc_kernel,
        out_shape=jax.ShapeDtypeStruct((B, T * D_IN), jnp.float32),
        in_specs=[vmem] * len(args),
        out_specs=vmem,
    )(*args)
    return out.reshape(B, T, D_IN)


def init_params(key):
    ks = jax.random.split(key, 16)
    s = 0.1

    def rn(k, shape):
        return s * jax.random.normal(k, shape, jnp.float32)

    return {
        # encoder LSTM, forward dir: weight_ih^T, weight_hh^T, (b_ih + b_hh)
        'wih_f': rn(ks[0], (D_IN, 4 * H)),
        'whh_f': rn(ks[1], (H, 4 * H)),
        'b_f':   rn(ks[2], (1, 4 * H)),
        # encoder LSTM, reverse dir
        'wih_b': rn(ks[3], (D_IN, 4 * H)),
        'whh_b': rn(ks[4], (H, 4 * H)),
        'b_b':   rn(ks[5], (1, 4 * H)),
        # Conv1d weight stored as (3, in_ch, out_ch) = W[:, :, k].T per tap
        'conv_w': rn(ks[6], (3, H2, H2)),
        'conv_b': rn(ks[7], (1, H2)),
        # attention MLP: Linear(2H,64) then Linear(64,1), weights transposed
        'a1_w': rn(ks[8], (H2, ATTN_H)),
        'a1_b': rn(ks[9], (1, ATTN_H)),
        'a2_w': rn(ks[10], (ATTN_H, 1)),
        'a2_b': rn(ks[11], (1, 1)),
        # decoder LSTM (2H -> D_IN)
        'dwih': rn(ks[12], (H2, 4 * D_IN)),
        'dwhh': rn(ks[13], (D_IN, 4 * D_IN)),
        'db':   rn(ks[14], (1, 4 * D_IN)),
    }


def reference_forward(x, p):
    """Pure-JAX reference with identical math (for correctness check)."""
    def cell(x_t, h, c, wih, whh, b, hid):
        g = x_t @ wih + h @ whh + b
        i = jax.nn.sigmoid(g[:, :hid]); f = jax.nn.sigmoid(g[:, hid:2 * hid])
        gg = jnp.tanh(g[:, 2 * hid:3 * hid]); o = jax.nn.sigmoid(g[:, 3 * hid:])
        c = f * c + i * gg
        return o * jnp.tanh(c), c

    h = jnp.zeros((B, H)); c = jnp.zeros((B, H)); fwd = []
    for t in range(T):
        h, c = cell(x[:, t], h, c, p['wih_f'], p['whh_f'], p['b_f'], H)
        fwd.append(h)
    h = jnp.zeros((B, H)); c = jnp.zeros((B, H)); bwd = [None] * T
    for t in range(T - 1, -1, -1):
        h, c = cell(x[:, t], h, c, p['wih_b'], p['whh_b'], p['b_b'], H)
        bwd[t] = h
    enc = jnp.stack([jnp.concatenate([fwd[t], bwd[t]], -1) for t in range(T)], 0)

    cnn = []
    for t in range(T):
        acc = jnp.zeros((B, H2)) + p['conv_b']
        for k in range(3):
            src = t + k - 1
            if 0 <= src < T:
                acc = acc + enc[src] @ p['conv_w'][k]
        cnn.append(acc)
    cnn = jnp.stack(cnn, 0)                                           # (T, B, 2H)

    h1 = jnp.tanh(cnn @ p['a1_w'] + p['a1_b'])
    scores = h1 @ p['a2_w'] + p['a2_b']                               # (T, B, 1)
    w = jax.nn.softmax(scores, axis=0)
    attended = jnp.sum(cnn * w, axis=0)                               # (B, 2H)

    gx = attended @ p['dwih'] + p['db']
    h = jnp.zeros((B, D_IN)); c = jnp.zeros((B, D_IN)); outs = []
    for t in range(T):
        g = gx + h @ p['dwhh']
        i = jax.nn.sigmoid(g[:, :D_IN]); f = jax.nn.sigmoid(g[:, D_IN:2 * D_IN])
        gg = jnp.tanh(g[:, 2 * D_IN:3 * D_IN]); o = jax.nn.sigmoid(g[:, 3 * D_IN:])
        c = f * c + i * gg
        h = o * jnp.tanh(c)
        outs.append(h)
    return jnp.stack(outs, axis=1)                                    # (B, T, D_IN)


if __name__ == "__main__":
    key = jax.random.PRNGKey(0)
    kx, kp = jax.random.split(key)
    x = jax.random.normal(kx, (B, T, D_IN), jnp.float32)
    params = init_params(kp)

    out = autoencoder_forward(x, params)
    out = jax.block_until_ready(out)
    assert out.shape == (B, T, D_IN)

    with jax.default_matmul_precision('highest'):
        ref = jax.block_until_ready(reference_forward(x, params))
    np.testing.assert_allclose(np.asarray(out), np.asarray(ref), rtol=5e-3, atol=5e-3)

    print("KERNEL_OK")
</pallas_src>

<mosaic_0001>
module attributes {stable_mosaic.version = 11 : i64} {
  func.func @autoenc_kernel(%arg0: memref<16x8xf32, #tpu.memory_space<vmem>>, %arg1: memref<8x256xf32, #tpu.memory_space<vmem>>, %arg2: memref<32x256xf32, #tpu.memory_space<vmem>>, %arg3: memref<1x256xf32, #tpu.memory_space<vmem>>, %arg4: memref<3x64x64xf32, #tpu.memory_space<vmem>>, %arg5: memref<1x64xf32, #tpu.memory_space<vmem>>, %arg6: memref<64x64xf32, #tpu.memory_space<vmem>>, %arg7: memref<1x64xf32, #tpu.memory_space<vmem>>, %arg8: memref<1x64xf32, #tpu.memory_space<vmem>>, %arg9: memref<1x1xf32, #tpu.memory_space<vmem>>, %arg10: memref<64x32xf32, #tpu.memory_space<vmem>>, %arg11: memref<8x32xf32, #tpu.memory_space<vmem>>, %arg12: memref<1x32xf32, #tpu.memory_space<vmem>>, %arg13: memref<2x64xf32, #tpu.memory_space<vmem>>) attributes {dimension_semantics = [], scalar_prefetch = 0 : i64, scratch_operands = 0 : i64, tpu.core_type = #tpu.core_type<tc>} {
    %c0 = arith.constant 0 : index
    %c0_0 = arith.constant 0 : index
    %0 = vector.load %arg0[%c0, %c0_0] : memref<16x8xf32, #tpu.memory_space<vmem>>, vector<16x8xf32>
    %c0_1 = arith.constant 0 : index
    %c0_2 = arith.constant 0 : index
    %1 = vector.load %arg1[%c0_1, %c0_2] : memref<8x256xf32, #tpu.memory_space<vmem>>, vector<8x256xf32>
    %cst = arith.constant dense<0.000000e+00> : vector<16x256xf32>
    %2 = tpu.matmul %0, %1, %cst {dimension_numbers = #tpu.dot_dimension_numbers<[1], [0], [0], [1], [0, 0, 1, 1], [], []>} : vector<16x8xf32>, vector<8x256xf32>, vector<16x256xf32> -> vector<16x256xf32>
    %c0_3 = arith.constant 0 : index
    %c0_4 = arith.constant 0 : index
    %3 = vector.load %arg3[%c0_3, %c0_4] : memref<1x256xf32, #tpu.memory_space<vmem>>, vector<1x256xf32>
    %4 = vector.broadcast %3 : vector<1x256xf32> to vector<16x256xf32>
    %5 = arith.addf %2, %4 : vector<16x256xf32>
    %c0_5 = arith.constant 0 : index
    %c0_6 = arith.constant 0 : index
    %6 = vector.load %arg2[%c0_5, %c0_6] : memref<32x256xf32, #tpu.memory_space<vmem>>, vector<32x256xf32>
    %7 = tpu.iota {dimensions = array<i32: 1>} : vector<4x128xi32>
    %c64_i32 = arith.constant 64 : i32
    %8 = vector.broadcast %c64_i32 : i32 to vector<4x128xi32>
    %9 = arith.cmpi sge, %7, %8 : vector<4x128xi32>
    %c96_i32 = arith.constant 96 : i32
    %10 = vector.broadcast %c96_i32 : i32 to vector<4x128xi32>
    %11 = arith.cmpi slt, %7, %10 : vector<4x128xi32>
    %12 = arith.andi %9, %11 : vector<4x128xi1>
    %cst_7 = arith.constant 1.000000e+00 : f32
    %cst_8 = arith.constant 5.000000e-01 : f32
    %13 = vector.broadcast %cst_7 : f32 to vector<4x128xf32>
    %14 = vector.broadcast %cst_8 : f32 to vector<4x128xf32>
    %15 = arith.select %12, %13, %14 : vector<4x128xi1>, vector<4x128xf32>
    %16 = tpu.iota {dimensions = array<i32: 0>} : vector<4x128xi32>
    %c2_i32 = arith.constant 2 : i32
    %17 = vector.broadcast %c2_i32 : i32 to vector<4x128xi32>
    %18 = arith.cmpi slt, %16, %17 : vector<4x128xi32>
    %cst_9 = arith.constant 0.000000e+00 : f32
    %19 = vector.broadcast %cst_9 : f32 to vector<4x32xf32>
    %cst_10 = arith.constant 0.000000e+00 : f32
    %20 = vector.broadcast %cst_10 : f32 to vector<4x32xf32>
    %cst_11 = arith.constant dense<0.000000e+00> : vector<4x256xf32>
    %21 = tpu.matmul %19, %6, %cst_11 {dimension_numbers = #tpu.dot_dimension_numbers<[1], [0], [0], [1], [0, 0, 1, 1], [], []>} : vector<4x32xf32>, vector<32x256xf32>, vector<4x256xf32> -> vector<4x256xf32>
    %22 = vector.extract_strided_slice %21 {offsets = [0, 0], sizes = [4, 128], strides = [1, 1]} : vector<4x256xf32> to vector<4x128xf32>
    %23 = vector.extract_strided_slice %21 {offsets = [0, 128], sizes = [4, 128], strides = [1, 1]} : vector<4x256xf32> to vector<4x128xf32>
    %24 = arith.select %18, %22, %23 : vector<4x128xi1>, vector<4x128xf32>
    %25 = vector.extract_strided_slice %5 {offsets = [0, 0], sizes = [2, 128], strides = [1, 1]} : vector<16x256xf32> to vector<2x128xf32>
    %26 = vector.extract_strided_slice %5 {offsets = [14, 128], sizes = [2, 128], strides = [1, 1]} : vector<16x256xf32> to vector<2x128xf32>
    %27 = tpu.concatenate %25, %26 in 0 : vector<2x128xf32>, vector<2x128xf32> -> vector<4x128xf32>
    %28 = arith.addf %27, %24 : vector<4x128xf32>
    %29 = arith.mulf %28, %15 : vector<4x128xf32>
    %30 = math.tanh %29 : vector<4x128xf32>
    %cst_12 = arith.constant 1.000000e+00 : f32
    %31 = vector.broadcast %cst_12 : f32 to vector<4x128xf32>
    %32 = arith.addf %31, %30 : vector<4x128xf32>
    %cst_13 = arith.constant 5.000000e-01 : f32
    %33 = vector.broadcast %cst_13 : f32 to vector<4x128xf32>
    %34 = arith.mulf %33, %32 : vector<4x128xf32>
    %35 = arith.select %12, %30, %34 : vector<4x128xi1>, vector<4x128xf32>
    %36 = vector.extract_strided_slice %35 {offsets = [0, 0], sizes = [4, 32], strides = [1, 1]} : vector<4x128xf32> to vector<4x32xf32>
    %37 = vector.extract_strided_slice %35 {offsets = [0, 32], sizes = [4, 32], strides = [1, 1]} : vector<4x128xf32> to vector<4x32xf32>
    %38 = vector.extract_strided_slice %35 {offsets = [0, 64], sizes = [4, 32], strides = [1, 1]} : vector<4x128xf32> to vector<4x32xf32>
    %39 = vector.extract_strided_slice %35 {offsets = [0, 96], sizes = [4, 32], strides = [1, 1]} : vector<4x128xf32> to vector<4x32xf32>
    %40 = arith.mulf %37, %20 : vector<4x32xf32>
    %41 = arith.mulf %36, %38 : vector<4x32xf32>
    %42 = arith.addf %40, %41 : vector<4x32xf32>
    %43 = math.tanh %42 : vector<4x32xf32>
    %44 = arith.mulf %39, %43 : vector<4x32xf32>
    %45 = vector.extract_strided_slice %44 {offsets = [0, 0], sizes = [2, 32], strides = [1, 1]} : vector<4x32xf32> to vector<2x32xf32>
    %46 = vector.extract_strided_slice %44 {offsets = [2, 0], sizes = [2, 32], strides = [1, 1]} : vector<4x32xf32> to vector<2x32xf32>
    %cst_14 = arith.constant dense<0.000000e+00> : vector<4x256xf32>
    %47 = tpu.matmul %44, %6, %cst_14 {dimension_numbers = #tpu.dot_dimension_numbers<[1], [0], [0], [1], [0, 0, 1, 1], [], []>} : vector<4x32xf32>, vector<32x256xf32>, vector<4x256xf32> -> vector<4x256xf32>
    %48 = vector.extract_strided_slice %47 {offsets = [0, 0], sizes = [4, 128], strides = [1, 1]} : vector<4x256xf32> to vector<4x128xf32>
    %49 = vector.extract_strided_slice %47 {offsets = [0, 128], sizes = [4, 128], strides = [1, 1]} : vector<4x256xf32> to vector<4x128xf32>
    %50 = arith.select %18, %48, %49 : vector<4x128xi1>, vector<4x128xf32>
    %51 = vector.extract_strided_slice %5 {offsets = [2, 0], sizes = [2, 128], strides = [1, 1]} : vector<16x256xf32> to vector<2x128xf32>
    %52 = vector.extract_strided_slice %5 {offsets = [12, 128], sizes = [2, 128], strides = [1, 1]} : vector<16x256xf32> to vector<2x128xf32>
    %53 = tpu.concatenate %51, %52 in 0 : vector<2x128xf32>, vector<2x128xf32> -> vector<4x128xf32>
    %54 = arith.addf %53, %50 : vector<4x128xf32>
    %55 = arith.mulf %54, %15 : vector<4x128xf32>
    %56 = math.tanh %55 : vector<4x128xf32>
    %cst_15 = arith.constant 1.000000e+00 : f32
    %57 = vector.broadcast %cst_15 : f32 to vector<4x128xf32>
    %58 = arith.addf %57, %56 : vector<4x128xf32>
    %cst_16 = arith.constant 5.000000e-01 : f32
    %59 = vector.broadcast %cst_16 : f32 to vector<4x128xf32>
    %60 = arith.mulf %59, %58 : vector<4x128xf32>
    %61 = arith.select %12, %56, %60 : vector<4x128xi1>, vector<4x128xf32>
    %62 = vector.extract_strided_slice %61 {offsets = [0, 0], sizes = [4, 32], strides = [1, 1]} : vector<4x128xf32> to vector<4x32xf32>
    %63 = vector.extract_strided_slice %61 {offsets = [0, 32], sizes = [4, 32], strides = [1, 1]} : vector<4x128xf32> to vector<4x32xf32>
    %64 = vector.extract_strided_slice %61 {offsets = [0, 64], sizes = [4, 32], strides = [1, 1]} : vector<4x128xf32> to vector<4x32xf32>
    %65 = vector.extract_strided_slice %61 {offsets = [0, 96], sizes = [4, 32], strides = [1, 1]} : vector<4x128xf32> to vector<4x32xf32>
    %66 = arith.mulf %63, %42 : vector<4x32xf32>
    %67 = arith.mulf %62, %64 : vector<4x32xf32>
    %68 = arith.addf %66, %67 : vector<4x32xf32>
    %69 = math.tanh %68 : vector<4x32xf32>
    %70 = arith.mulf %65, %69 : vector<4x32xf32>
    %71 = vector.extract_strided_slice %70 {offsets = [0, 0], sizes = [2, 32], strides = [1, 1]} : vector<4x32xf32> to vector<2x32xf32>
    %72 = vector.extract_strided_slice %70 {offsets = [2, 0], sizes = [2, 32], strides = [1, 1]} : vector<4x32xf32> to vector<2x32xf32>
    %cst_17 = arith.constant dense<0.000000e+00> : vector<4x256xf32>
    %73 = tpu.matmul %70, %6, %cst_17 {dimension_numbers = #tpu.dot_dimension_numbers<[1], [0], [0], [1], [0, 0, 1, 1], [], []>} : vector<4x32xf32>, vector<32x256xf32>, vector<4x256xf32> -> vector<4x256xf32>
    %74 = vector.extract_strided_slice %73 {offsets = [0, 0], sizes = [4, 128], strides = [1, 1]} : vector<4x256xf32> to vector<4x128xf32>
    %75 = vector.extract_strided_slice %73 {offsets = [0, 128], sizes = [4, 128], strides = [1, 1]} : vector<4x256xf32> to vector<4x128xf32>
    %76 = arith.select %18, %74, %75 : vector<4x128xi1>, vector<4x128xf32>
    %77 = vector.extract_strided_slice %5 {offsets = [4, 0], sizes = [2, 128], strides = [1, 1]} : vector<16x256xf32> to vector<2x128xf32>
    %78 = vector.extract_strided_slice %5 {offsets = [10, 128], sizes = [2, 128], strides = [1, 1]} : vector<16x256xf32> to vector<2x128xf32>
    %79 = tpu.concatenate %77, %78 in 0 : vector<2x128xf32>, vector<2x128xf32> -> vector<4x128xf32>
    %80 = arith.addf %79, %76 : vector<4x128xf32>
    %81 = arith.mulf %80, %15 : vector<4x128xf32>
    %82 = math.tanh %81 : vector<4x128xf32>
    %cst_18 = arith.constant 1.000000e+00 : f32
    %83 = vector.broadcast %cst_18 : f32 to vector<4x128xf32>
    %84 = arith.addf %83, %82 : vector<4x128xf32>
    %cst_19 = arith.constant 5.000000e-01 : f32
    %85 = vector.broadcast %cst_19 : f32 to vector<4x128xf32>
    %86 = arith.mulf %85, %84 : vector<4x128xf32>
    %87 = arith.select %12, %82, %86 : vector<4x128xi1>, vector<4x128xf32>
    %88 = vector.extract_strided_slice %87 {offsets = [0, 0], sizes = [4, 32], strides = [1, 1]} : vector<4x128xf32> to vector<4x32xf32>
    %89 = vector.extract_strided_slice %87 {offsets = [0, 32], sizes = [4, 32], strides = [1, 1]} : vector<4x128xf32> to vector<4x32xf32>
    %90 = vector.extract_strided_slice %87 {offsets = [0, 64], sizes = [4, 32], strides = [1, 1]} : vector<4x128xf32> to vector<4x32xf32>
    %91 = vector.extract_strided_slice %87 {offsets = [0, 96], sizes = [4, 32], strides = [1, 1]} : vector<4x128xf32> to vector<4x32xf32>
    %92 = arith.mulf %89, %68 : vector<4x32xf32>
    %93 = arith.mulf %88, %90 : vector<4x32xf32>
    %94 = arith.addf %92, %93 : vector<4x32xf32>
    %95 = math.tanh %94 : vector<4x32xf32>
    %96 = arith.mulf %91, %95 : vector<4x32xf32>
    %97 = vector.extract_strided_slice %96 {offsets = [0, 0], sizes = [2, 32], strides = [1, 1]} : vector<4x32xf32> to vector<2x32xf32>
    %98 = vector.extract_strided_slice %96 {offsets = [2, 0], sizes = [2, 32], strides = [1, 1]} : vector<4x32xf32> to vector<2x32xf32>
    %cst_20 = arith.constant dense<0.000000e+00> : vector<4x256xf32>
    %99 = tpu.matmul %96, %6, %cst_20 {dimension_numbers = #tpu.dot_dimension_numbers<[1], [0], [0], [1], [0, 0, 1, 1], [], []>} : vector<4x32xf32>, vector<32x256xf32>, vector<4x256xf32> -> vector<4x256xf32>
    %100 = vector.extract_strided_slice %99 {offsets = [0, 0], sizes = [4, 128], strides = [1, 1]} : vector<4x256xf32> to vector<4x128xf32>
    %101 = vector.extract_strided_slice %99 {offsets = [0, 128], sizes = [4, 128], strides = [1, 1]} : vector<4x256xf32> to vector<4x128xf32>
    %102 = arith.select %18, %100, %101 : vector<4x128xi1>, vector<4x128xf32>
    %103 = vector.extract_strided_slice %5 {offsets = [6, 0], sizes = [2, 128], strides = [1, 1]} : vector<16x256xf32> to vector<2x128xf32>
    %104 = vector.extract_strided_slice %5 {offsets = [8, 128], sizes = [2, 128], strides = [1, 1]} : vector<16x256xf32> to vector<2x128xf32>
    %105 = tpu.concatenate %103, %104 in 0 : vector<2x128xf32>, vector<2x128xf32> -> vector<4x128xf32>
    %106 = arith.addf %105, %102 : vector<4x128xf32>
    %107 = arith.mulf %106, %15 : vector<4x128xf32>
    %108 = math.tanh %107 : vector<4x128xf32>
    %cst_21 = arith.constant 1.000000e+00 : f32
    %109 = vector.broadcast %cst_21 : f32 to vector<4x128xf32>
    %110 = arith.addf %109, %108 : vector<4x128xf32>
    %cst_22 = arith.constant 5.000000e-01 : f32
    %111 = vector.broadcast %cst_22 : f32 to vector<4x128xf32>
    %112 = arith.mulf %111, %110 : vector<4x128xf32>
    %113 = arith.select %12, %108, %112 : vector<4x128xi1>, vector<4x128xf32>
    %114 = vector.extract_strided_slice %113 {offsets = [0, 0], sizes = [4, 32], strides = [1, 1]} : vector<4x128xf32> to vector<4x32xf32>
    %115 = vector.extract_strided_slice %113 {offsets = [0, 32], sizes = [4, 32], strides = [1, 1]} : vector<4x128xf32> to vector<4x32xf32>
    %116 = vector.extract_strided_slice %113 {offsets = [0, 64], sizes = [4, 32], strides = [1, 1]} : vector<4x128xf32> to vector<4x32xf32>
    %117 = vector.extract_strided_slice %113 {offsets = [0, 96], sizes = [4, 32], strides = [1, 1]} : vector<4x128xf32> to vector<4x32xf32>
    %118 = arith.mulf %115, %94 : vector<4x32xf32>
    %119 = arith.mulf %114, %116 : vector<4x32xf32>
    %120 = arith.addf %118, %119 : vector<4x32xf32>
    %121 = math.tanh %120 : vector<4x32xf32>
    %122 = arith.mulf %117, %121 : vector<4x32xf32>
    %123 = vector.extract_strided_slice %122 {offsets = [0, 0], sizes = [2, 32], strides = [1, 1]} : vector<4x32xf32> to vector<2x32xf32>
    %124 = vector.extract_strided_slice %122 {offsets = [2, 0], sizes = [2, 32], strides = [1, 1]} : vector<4x32xf32> to vector<2x32xf32>
    %cst_23 = arith.constant dense<0.000000e+00> : vector<4x256xf32>
    %125 = tpu.matmul %122, %6, %cst_23 {dimension_numbers = #tpu.dot_dimension_numbers<[1], [0], [0], [1], [0, 0, 1, 1], [], []>} : vector<4x32xf32>, vector<32x256xf32>, vector<4x256xf32> -> vector<4x256xf32>
    %126 = vector.extract_strided_slice %125 {offsets = [0, 0], sizes = [4, 128], strides = [1, 1]} : vector<4x256xf32> to vector<4x128xf32>
    %127 = vector.extract_strided_slice %125 {offsets = [0, 128], sizes = [4, 128], strides = [1, 1]} : vector<4x256xf32> to vector<4x128xf32>
    %128 = arith.select %18, %126, %127 : vector<4x128xi1>, vector<4x128xf32>
    %129 = vector.extract_strided_slice %5 {offsets = [8, 0], sizes = [2, 128], strides = [1, 1]} : vector<16x256xf32> to vector<2x128xf32>
    %130 = vector.extract_strided_slice %5 {offsets = [6, 128], sizes = [2, 128], strides = [1, 1]} : vector<16x256xf32> to vector<2x128xf32>
    %131 = tpu.concatenate %129, %130 in 0 : vector<2x128xf32>, vector<2x128xf32> -> vector<4x128xf32>
    %132 = arith.addf %131, %128 : vector<4x128xf32>
    %133 = arith.mulf %132, %15 : vector<4x128xf32>
    %134 = math.tanh %133 : vector<4x128xf32>
    %cst_24 = arith.constant 1.000000e+00 : f32
    %135 = vector.broadcast %cst_24 : f32 to vector<4x128xf32>
    %136 = arith.addf %135, %134 : vector<4x128xf32>
    %cst_25 = arith.constant 5.000000e-01 : f32
    %137 = vector.broadcast %cst_25 : f32 to vector<4x128xf32>
    %138 = arith.mulf %137, %136 : vector<4x128xf32>
    %139 = arith.select %12, %134, %138 : vector<4x128xi1>, vector<4x128xf32>
    %140 = vector.extract_strided_slice %139 {offsets = [0, 0], sizes = [4, 32], strides = [1, 1]} : vector<4x128xf32> to vector<4x32xf32>
    %141 = vector.extract_strided_slice %139 {offsets = [0, 32], sizes = [4, 32], strides = [1, 1]} : vector<4x128xf32> to vector<4x32xf32>
    %142 = vector.extract_strided_slice %139 {offsets = [0, 64], sizes = [4, 32], strides = [1, 1]} : vector<4x128xf32> to vector<4x32xf32>
    %143 = vector.extract_strided_slice %139 {offsets = [0, 96], sizes = [4, 32], strides = [1, 1]} : vector<4x128xf32> to vector<4x32xf32>
    %144 = arith.mulf %141, %120 : vector<4x32xf32>
    %145 = arith.mulf %140, %142 : vector<4x32xf32>
    %146 = arith.addf %144, %145 : vector<4x32xf32>
    %147 = math.tanh %146 : vector<4x32xf32>
    %148 = arith.mulf %143, %147 : vector<4x32xf32>
    %149 = vector.extract_strided_slice %148 {offsets = [0, 0], sizes = [2, 32], strides = [1, 1]} : vector<4x32xf32> to vector<2x32xf32>
    %150 = vector.extract_strided_slice %148 {offsets = [2, 0], sizes = [2, 32], strides = [1, 1]} : vector<4x32xf32> to vector<2x32xf32>
    %cst_26 = arith.constant dense<0.000000e+00> : vector<4x256xf32>
    %151 = tpu.matmul %148, %6, %cst_26 {dimension_numbers = #tpu.dot_dimension_numbers<[1], [0], [0], [1], [0, 0, 1, 1], [], []>} : vector<4x32xf32>, vector<32x256xf32>, vector<4x256xf32> -> vector<4x256xf32>
    %152 = vector.extract_strided_slice %151 {offsets = [0, 0], sizes = [4, 128], strides = [1, 1]} : vector<4x256xf32> to vector<4x128xf32>
    %153 = vector.extract_strided_slice %151 {offsets = [0, 128], sizes = [4, 128], strides = [1, 1]} : vector<4x256xf32> to vector<4x128xf32>
    %154 = arith.select %18, %152, %153 : vector<4x128xi1>, vector<4x128xf32>
    %155 = vector.extract_strided_slice %5 {offsets = [10, 0], sizes = [2, 128], strides = [1, 1]} : vector<16x256xf32> to vector<2x128xf32>
    %156 = vector.extract_strided_slice %5 {offsets = [4, 128], sizes = [2, 128], strides = [1, 1]} : vector<16x256xf32> to vector<2x128xf32>
    %157 = tpu.concatenate %155, %156 in 0 : vector<2x128xf32>, vector<2x128xf32> -> vector<4x128xf32>
    %158 = arith.addf %157, %154 : vector<4x128xf32>
    %159 = arith.mulf %158, %15 : vector<4x128xf32>
    %160 = math.tanh %159 : vector<4x128xf32>
    %cst_27 = arith.constant 1.000000e+00 : f32
    %161 = vector.broadcast %cst_27 : f32 to vector<4x128xf32>
    %162 = arith.addf %161, %160 : vector<4x128xf32>
    %cst_28 = arith.constant 5.000000e-01 : f32
    %163 = vector.broadcast %cst_28 : f32 to vector<4x128xf32>
    %164 = arith.mulf %163, %162 : vector<4x128xf32>
    %165 = arith.select %12, %160, %164 : vector<4x128xi1>, vector<4x128xf32>
    %166 = vector.extract_strided_slice %165 {offsets = [0, 0], sizes = [4, 32], strides = [1, 1]} : vector<4x128xf32> to vector<4x32xf32>
    %167 = vector.extract_strided_slice %165 {offsets = [0, 32], sizes = [4, 32], strides = [1, 1]} : vector<4x128xf32> to vector<4x32xf32>
    %168 = vector.extract_strided_slice %165 {offsets = [0, 64], sizes = [4, 32], strides = [1, 1]} : vector<4x128xf32> to vector<4x32xf32>
    %169 = vector.extract_strided_slice %165 {offsets = [0, 96], sizes = [4, 32], strides = [1, 1]} : vector<4x128xf32> to vector<4x32xf32>
    %170 = arith.mulf %167, %146 : vector<4x32xf32>
    %171 = arith.mulf %166, %168 : vector<4x32xf32>
    %172 = arith.addf %170, %171 : vector<4x32xf32>
    %173 = math.tanh %172 : vector<4x32xf32>
    %174 = arith.mulf %169, %173 : vector<4x32xf32>
    %175 = vector.extract_strided_slice %174 {offsets = [0, 0], sizes = [2, 32], strides = [1, 1]} : vector<4x32xf32> to vector<2x32xf32>
    %176 = vector.extract_strided_slice %174 {offsets = [2, 0], sizes = [2, 32], strides = [1, 1]} : vector<4x32xf32> to vector<2x32xf32>
    %cst_29 = arith.constant dense<0.000000e+00> : vector<4x256xf32>
    %177 = tpu.matmul %174, %6, %cst_29 {dimension_numbers = #tpu.dot_dimension_numbers<[1], [0], [0], [1], [0, 0, 1, 1], [], []>} : vector<4x32xf32>, vector<32x256xf32>, vector<4x256xf32> -> vector<4x256xf32>
    %178 = vector.extract_strided_slice %177 {offsets = [0, 0], sizes = [4, 128], strides = [1, 1]} : vector<4x256xf32> to vector<4x128xf32>
    %179 = vector.extract_strided_slice %177 {offsets = [0, 128], sizes = [4, 128], strides = [1, 1]} : vector<4x256xf32> to vector<4x128xf32>
    %180 = arith.select %18, %178, %179 : vector<4x128xi1>, vector<4x128xf32>
    %181 = vector.extract_strided_slice %5 {offsets = [12, 0], sizes = [2, 128], strides = [1, 1]} : vector<16x256xf32> to vector<2x128xf32>
    %182 = vector.extract_strided_slice %5 {offsets = [2, 128], sizes = [2, 128], strides = [1, 1]} : vector<16x256xf32> to vector<2x128xf32>
    %183 = tpu.concatenate %181, %182 in 0 : vector<2x128xf32>, vector<2x128xf32> -> vector<4x128xf32>
    %184 = arith.addf %183, %180 : vector<4x128xf32>
    %185 = arith.mulf %184, %15 : vector<4x128xf32>
    %186 = math.tanh %185 : vector<4x128xf32>
    %cst_30 = arith.constant 1.000000e+00 : f32
    %187 = vector.broadcast %cst_30 : f32 to vector<4x128xf32>
    %188 = arith.addf %187, %186 : vector<4x128xf32>
    %cst_31 = arith.constant 5.000000e-01 : f32
    %189 = vector.broadcast %cst_31 : f32 to vector<4x128xf32>
    %190 = arith.mulf %189, %188 : vector<4x128xf32>
    %191 = arith.select %12, %186, %190 : vector<4x128xi1>, vector<4x128xf32>
    %192 = vector.extract_strided_slice %191 {offsets = [0, 0], sizes = [4, 32], strides = [1, 1]} : vector<4x128xf32> to vector<4x32xf32>
    %193 = vector.extract_strided_slice %191 {offsets = [0, 32], sizes = [4, 32], strides = [1, 1]} : vector<4x128xf32> to vector<4x32xf32>
    %194 = vector.extract_strided_slice %191 {offsets = [0, 64], sizes = [4, 32], strides = [1, 1]} : vector<4x128xf32> to vector<4x32xf32>
    %195 = vector.extract_strided_slice %191 {offsets = [0, 96], sizes = [4, 32], strides = [1, 1]} : vector<4x128xf32> to vector<4x32xf32>
    %196 = arith.mulf %193, %172 : vector<4x32xf32>
    %197 = arith.mulf %192, %194 : vector<4x32xf32>
    %198 = arith.addf %196, %197 : vector<4x32xf32>
    %199 = math.tanh %198 : vector<4x32xf32>
    %200 = arith.mulf %195, %199 : vector<4x32xf32>
    %201 = vector.extract_strided_slice %200 {offsets = [0, 0], sizes = [2, 32], strides = [1, 1]} : vector<4x32xf32> to vector<2x32xf32>
    %202 = vector.extract_strided_slice %200 {offsets = [2, 0], sizes = [2, 32], strides = [1, 1]} : vector<4x32xf32> to vector<2x32xf32>
    %cst_32 = arith.constant dense<0.000000e+00> : vector<4x256xf32>
    %203 = tpu.matmul %200, %6, %cst_32 {dimension_numbers = #tpu.dot_dimension_numbers<[1], [0], [0], [1], [0, 0, 1, 1], [], []>} : vector<4x32xf32>, vector<32x256xf32>, vector<4x256xf32> -> vector<4x256xf32>
    %204 = vector.extract_strided_slice %203 {offsets = [0, 0], sizes = [4, 128], strides = [1, 1]} : vector<4x256xf32> to vector<4x128xf32>
    %205 = vector.extract_strided_slice %203 {offsets = [0, 128], sizes = [4, 128], strides = [1, 1]} : vector<4x256xf32> to vector<4x128xf32>
    %206 = arith.select %18, %204, %205 : vector<4x128xi1>, vector<4x128xf32>
    %207 = vector.extract_strided_slice %5 {offsets = [14, 0], sizes = [2, 128], strides = [1, 1]} : vector<16x256xf32> to vector<2x128xf32>
    %208 = vector.extract_strided_slice %5 {offsets = [0, 128], sizes = [2, 128], strides = [1, 1]} : vector<16x256xf32> to vector<2x128xf32>
    %209 = tpu.concatenate %207, %208 in 0 : vector<2x128xf32>, vector<2x128xf32> -> vector<4x128xf32>
    %210 = arith.addf %209, %206 : vector<4x128xf32>
    %211 = arith.mulf %210, %15 : vector<4x128xf32>
    %212 = math.tanh %211 : vector<4x128xf32>
    %cst_33 = arith.constant 1.000000e+00 : f32
    %213 = vector.broadcast %cst_33 : f32 to vector<4x128xf32>
    %214 = arith.addf %213, %212 : vector<4x128xf32>
    %cst_34 = arith.constant 5.000000e-01 : f32
    %215 = vector.broadcast %cst_34 : f32 to vector<4x128xf32>
    %216 = arith.mulf %215, %214 : vector<4x128xf32>
    %217 = arith.select %12, %212, %216 : vector<4x128xi1>, vector<4x128xf32>
    %218 = vector.extract_strided_slice %217 {offsets = [0, 0], sizes = [4, 32], strides = [1, 1]} : vector<4x128xf32> to vector<4x32xf32>
    %219 = vector.extract_strided_slice %217 {offsets = [0, 32], sizes = [4, 32], strides = [1, 1]} : vector<4x128xf32> to vector<4x32xf32>
    %220 = vector.extract_strided_slice %217 {offsets = [0, 64], sizes = [4, 32], strides = [1, 1]} : vector<4x128xf32> to vector<4x32xf32>
    %221 = vector.extract_strided_slice %217 {offsets = [0, 96], sizes = [4, 32], strides = [1, 1]} : vector<4x128xf32> to vector<4x32xf32>
    %222 = arith.mulf %219, %198 : vector<4x32xf32>
    %223 = arith.mulf %218, %220 : vector<4x32xf32>
    %224 = arith.addf %222, %223 : vector<4x32xf32>
    %225 = math.tanh %224 : vector<4x32xf32>
    %226 = arith.mulf %221, %225 : vector<4x32xf32>
    %227 = vector.extract_strided_slice %226 {offsets = [0, 0], sizes = [2, 32], strides = [1, 1]} : vector<4x32xf32> to vector<2x32xf32>
    %228 = vector.extract_strided_slice %226 {offsets = [2, 0], sizes = [2, 32], strides = [1, 1]} : vector<4x32xf32> to vector<2x32xf32>
    %229 = tpu.concatenate %45, %228 in 1 : vector<2x32xf32>, vector<2x32xf32> -> vector<2x64xf32>
    %230 = tpu.concatenate %71, %202 in 1 : vector<2x32xf32>, vector<2x32xf32> -> vector<2x64xf32>
    %231 = tpu.concatenate %97, %176 in 1 : vector<2x32xf32>, vector<2x32xf32> -> vector<2x64xf32>
    %232 = tpu.concatenate %123, %150 in 1 : vector<2x32xf32>, vector<2x32xf32> -> vector<2x64xf32>
    %233 = tpu.concatenate %149, %124 in 1 : vector<2x32xf32>, vector<2x32xf32> -> vector<2x64xf32>
    %234 = tpu.concatenate %175, %98 in 1 : vector<2x32xf32>, vector<2x32xf32> -> vector<2x64xf32>
    %235 = tpu.concatenate %201, %72 in 1 : vector<2x32xf32>, vector<2x32xf32> -> vector<2x64xf32>
    %236 = tpu.concatenate %227, %46 in 1 : vector<2x32xf32>, vector<2x32xf32> -> vector<2x64xf32>
    %237 = tpu.concatenate %229, %230, %231, %232, %233, %234, %235, %236 in 0 : vector<2x64xf32>, vector<2x64xf32>, vector<2x64xf32>, vector<2x64xf32>, vector<2x64xf32>, vector<2x64xf32>, vector<2x64xf32>, vector<2x64xf32> -> vector<16x64xf32>
    %c0_35 = arith.constant 0 : index
    %c0_36 = arith.constant 0 : index
    %c0_37 = arith.constant 0 : index
    %238 = vector.load %arg4[%c0_35, %c0_36, %c0_37] : memref<3x64x64xf32, #tpu.memory_space<vmem>>, vector<1x64x64xf32>
    %239 = vector.shape_cast %238 : vector<1x64x64xf32> to vector<64x64xf32>
    %cst_38 = arith.constant dense<0.000000e+00> : vector<16x64xf32>
    %240 = tpu.matmul %237, %239, %cst_38 {dimension_numbers = #tpu.dot_dimension_numbers<[1], [0], [0], [1], [0, 0, 1, 1], [], []>} : vector<16x64xf32>, vector<64x64xf32>, vector<16x64xf32> -> vector<16x64xf32>
    %c1 = arith.constant 1 : index
    %c0_39 = arith.constant 0 : index
    %c0_40 = arith.constant 0 : index
    %241 = vector.load %arg4[%c1, %c0_39, %c0_40] : memref<3x64x64xf32, #tpu.memory_space<vmem>>, vector<1x64x64xf32>
    %242 = vector.shape_cast %241 : vector<1x64x64xf32> to vector<64x64xf32>
    %cst_41 = arith.constant dense<0.000000e+00> : vector<16x64xf32>
    %243 = tpu.matmul %237, %242, %cst_41 {dimension_numbers = #tpu.dot_dimension_numbers<[1], [0], [0], [1], [0, 0, 1, 1], [], []>} : vector<16x64xf32>, vector<64x64xf32>, vector<16x64xf32> -> vector<16x64xf32>
    %c2 = arith.constant 2 : index
    %c0_42 = arith.constant 0 : index
    %c0_43 = arith.constant 0 : index
    %244 = vector.load %arg4[%c2, %c0_42, %c0_43] : memref<3x64x64xf32, #tpu.memory_space<vmem>>, vector<1x64x64xf32>
    %245 = vector.shape_cast %244 : vector<1x64x64xf32> to vector<64x64xf32>
    %cst_44 = arith.constant dense<0.000000e+00> : vector<16x64xf32>
    %246 = tpu.matmul %237, %245, %cst_44 {dimension_numbers = #tpu.dot_dimension_numbers<[1], [0], [0], [1], [0, 0, 1, 1], [], []>} : vector<16x64xf32>, vector<64x64xf32>, vector<16x64xf32> -> vector<16x64xf32>
    %cst_45 = arith.constant 0.000000e+00 : f32
    %247 = vector.broadcast %cst_45 : f32 to vector<2x64xf32>
    %248 = vector.extract_strided_slice %240 {offsets = [0, 0], sizes = [14, 64], strides = [1, 1]} : vector<16x64xf32> to vector<14x64xf32>
    %249 = tpu.concatenate %247, %248 in 0 : vector<2x64xf32>, vector<14x64xf32> -> vector<16x64xf32>
    %250 = vector.extract_strided_slice %246 {offsets = [2, 0], sizes = [14, 64], strides = [1, 1]} : vector<16x64xf32> to vector<14x64xf32>
    %251 = tpu.concatenate %250, %247 in 0 : vector<14x64xf32>, vector<2x64xf32> -> vector<16x64xf32>
    %252 = arith.addf %243, %249 : vector<16x64xf32>
    %253 = arith.addf %252, %251 : vector<16x64xf32>
    %c0_46 = arith.constant 0 : index
    %c0_47 = arith.constant 0 : index
    %254 = vector.load %arg5[%c0_46, %c0_47] : memref<1x64xf32, #tpu.memory_space<vmem>>, vector<1x64xf32>
    %255 = vector.broadcast %254 : vector<1x64xf32> to vector<16x64xf32>
    %256 = arith.addf %253, %255 : vector<16x64xf32>
    %c0_48 = arith.constant 0 : index
    %c0_49 = arith.constant 0 : index
    %257 = vector.load %arg6[%c0_48, %c0_49] : memref<64x64xf32, #tpu.memory_space<vmem>>, vector<64x64xf32>
    %cst_50 = arith.constant dense<0.000000e+00> : vector<16x64xf32>
    %258 = tpu.matmul %256, %257, %cst_50 {dimension_numbers = #tpu.dot_dimension_numbers<[1], [0], [0], [1], [0, 0, 1, 1], [], []>} : vector<16x64xf32>, vector<64x64xf32>, vector<16x64xf32> -> vector<16x64xf32>
    %c0_51 = arith.constant 0 : index
    %c0_52 = arith.constant 0 : index
    %259 = vector.load %arg7[%c0_51, %c0_52] : memref<1x64xf32, #tpu.memory_space<vmem>>, vector<1x64xf32>
    %260 = vector.broadcast %259 : vector<1x64xf32> to vector<16x64xf32>
    %261 = arith.addf %258, %260 : vector<16x64xf32>
    %262 = math.tanh %261 : vector<16x64xf32>
    %c0_53 = arith.constant 0 : index
    %c0_54 = arith.constant 0 : index
    %263 = vector.load %arg8[%c0_53, %c0_54] : memref<1x64xf32, #tpu.memory_space<vmem>>, vector<1x64xf32>
    %264 = vector.broadcast %263 : vector<1x64xf32> to vector<16x64xf32>
    %265 = arith.mulf %262, %264 : vector<16x64xf32>
    %cst_55 = arith.constant dense<0.000000e+00> : vector<16xf32>
    %266 = vector.multi_reduction <add>, %265, %cst_55 [1] : vector<16x64xf32> to vector<16xf32>
    %267 = vector.shape_cast %266 : vector<16xf32> to vector<16x1xf32>
    %c0_56 = arith.constant 0 : index
    %c0_57 = arith.constant 0 : index
    %268 = vector.load %arg9[%c0_56, %c0_57] : memref<1x1xf32, #tpu.memory_space<vmem>>, vector<1x1xf32>
    %269 = vector.broadcast %268 : vector<1x1xf32> to vector<16x1xf32>
    %270 = arith.addf %267, %269 : vector<16x1xf32>
    %271 = vector.shape_cast %270 : vector<16x1xf32> to vector<8x2x1xf32>
    %cst_58 = arith.constant dense<0xFF800000> : vector<2x1xf32>
    %272 = vector.multi_reduction <maximumf>, %271, %cst_58 [0] : vector<8x2x1xf32> to vector<2x1xf32>
    %273 = vector.shape_cast %272 : vector<2x1xf32> to vector<1x2x1xf32>
    %274 = vector.broadcast %273 : vector<1x2x1xf32> to vector<8x2x1xf32>
    %275 = arith.subf %271, %274 : vector<8x2x1xf32>
    %276 = math.exp %275 : vector<8x2x1xf32>
    %cst_59 = arith.constant dense<0.000000e+00> : vector<2x1xf32>
    %277 = vector.multi_reduction <add>, %276, %cst_59 [0] : vector<8x2x1xf32> to vector<2x1xf32>
    %278 = vector.shape_cast %277 : vector<2x1xf32> to vector<1x2x1xf32>
    %279 = vector.broadcast %278 : vector<1x2x1xf32> to vector<8x2x1xf32>
    %280 = arith.divf %276, %279 : vector<8x2x1xf32>
    %281 = vector.shape_cast %256 : vector<16x64xf32> to vector<8x2x64xf32>
    %282 = vector.broadcast %280 : vector<8x2x1xf32> to vector<8x2x64xf32>
    %283 = arith.mulf %281, %282 : vector<8x2x64xf32>
    %cst_60 = arith.constant dense<0.000000e+00> : vector<2x64xf32>
    %284 = vector.multi_reduction <add>, %283, %cst_60 [0] : vector<8x2x64xf32> to vector<2x64xf32>
    %c0_61 = arith.constant 0 : index
    %c0_62 = arith.constant 0 : index
    %285 = vector.load %arg10[%c0_61, %c0_62] : memref<64x32xf32, #tpu.memory_space<vmem>>, vector<64x32xf32>
    %cst_63 = arith.constant dense<0.000000e+00> : vector<2x32xf32>
    %286 = tpu.matmul %284, %285, %cst_63 {dimension_numbers = #tpu.dot_dimension_numbers<[1], [0], [0], [1], [0, 0, 1, 1], [], []>} : vector<2x64xf32>, vector<64x32xf32>, vector<2x32xf32> -> vector<2x32xf32>
    %c0_64 = arith.constant 0 : index
    %c0_65 = arith.constant 0 : index
    %287 = vector.load %arg12[%c0_64, %c0_65] : memref<1x32xf32, #tpu.memory_space<vmem>>, vector<1x32xf32>
    %288 = vector.broadcast %287 : vector<1x32xf32> to vector<2x32xf32>
    %289 = arith.addf %286, %288 : vector<2x32xf32>
    %c0_66 = arith.constant 0 : index
    %c0_67 = arith.constant 0 : index
    %290 = vector.load %arg11[%c0_66, %c0_67] : memref<8x32xf32, #tpu.memory_space<vmem>>, vector<8x32xf32>
    %291 = tpu.iota {dimensions = array<i32: 1>} : vector<2x32xi32>
    %c16_i32 = arith.constant 16 : i32
    %292 = vector.broadcast %c16_i32 : i32 to vector<2x32xi32>
    %293 = arith.cmpi sge, %291, %292 : vector<2x32xi32>
    %c24_i32 = arith.constant 24 : i32
    %294 = vector.broadcast %c24_i32 : i32 to vector<2x32xi32>
    %295 = arith.cmpi slt, %291, %294 : vector<2x32xi32>
    %296 = arith.andi %293, %295 : vector<2x32xi1>
    %cst_68 = arith.constant 1.000000e+00 : f32
    %cst_69 = arith.constant 5.000000e-01 : f32
    %297 = vector.broadcast %cst_68 : f32 to vector<2x32xf32>
    %298 = vector.broadcast %cst_69 : f32 to vector<2x32xf32>
    %299 = arith.select %296, %297, %298 : vector<2x32xi1>, vector<2x32xf32>
    %cst_70 = arith.constant 0.000000e+00 : f32
    %300 = vector.broadcast %cst_70 : f32 to vector<2x8xf32>
    %cst_71 = arith.constant 0.000000e+00 : f32
    %301 = vector.broadcast %cst_71 : f32 to vector<2x8xf32>
    %cst_72 = arith.constant dense<0.000000e+00> : vector<2x32xf32>
    %302 = tpu.matmul %300, %290, %cst_72 {dimension_numbers = #tpu.dot_dimension_numbers<[1], [0], [0], [1], [0, 0, 1, 1], [], []>} : vector<2x8xf32>, vector<8x32xf32>, vector<2x32xf32> -> vector<2x32xf32>
    %303 = arith.addf %289, %302 : vector<2x32xf32>
    %304 = arith.mulf %303, %299 : vector<2x32xf32>
    %305 = math.tanh %304 : vector<2x32xf32>
    %cst_73 = arith.constant 1.000000e+00 : f32
    %306 = vector.broadcast %cst_73 : f32 to vector<2x32xf32>
    %307 = arith.addf %306, %305 : vector<2x32xf32>
    %cst_74 = arith.constant 5.000000e-01 : f32
    %308 = vector.broadcast %cst_74 : f32 to vector<2x32xf32>
    %309 = arith.mulf %308, %307 : vector<2x32xf32>
    %310 = arith.select %296, %305, %309 : vector<2x32xi1>, vector<2x32xf32>
    %311 = vector.extract_strided_slice %310 {offsets = [0, 0], sizes = [2, 8], strides = [1, 1]} : vector<2x32xf32> to vector<2x8xf32>
    %312 = vector.extract_strided_slice %310 {offsets = [0, 8], sizes = [2, 8], strides = [1, 1]} : vector<2x32xf32> to vector<2x8xf32>
    %313 = vector.extract_strided_slice %310 {offsets = [0, 16], sizes = [2, 8], strides = [1, 1]} : vector<2x32xf32> to vector<2x8xf32>
    %314 = vector.extract_strided_slice %310 {offsets = [0, 24], sizes = [2, 8], strides = [1, 1]} : vector<2x32xf32> to vector<2x8xf32>
    %315 = arith.mulf %312, %301 : vector<2x8xf32>
    %316 = arith.mulf %311, %313 : vector<2x8xf32>
    %317 = arith.addf %315, %316 : vector<2x8xf32>
    %318 = math.tanh %317 : vector<2x8xf32>
    %319 = arith.mulf %314, %318 : vector<2x8xf32>
    %cst_75 = arith.constant dense<0.000000e+00> : vector<2x32xf32>
    %320 = tpu.matmul %319, %290, %cst_75 {dimension_numbers = #tpu.dot_dimension_numbers<[1], [0], [0], [1], [0, 0, 1, 1], [], []>} : vector<2x8xf32>, vector<8x32xf32>, vector<2x32xf32> -> vector<2x32xf32>
    %321 = arith.addf %289, %320 : vector<2x32xf32>
    %322 = arith.mulf %321, %299 : vector<2x32xf32>
    %323 = math.tanh %322 : vector<2x32xf32>
    %cst_76 = arith.constant 1.000000e+00 : f32
    %324 = vector.broadcast %cst_76 : f32 to vector<2x32xf32>
    %325 = arith.addf %324, %323 : vector<2x32xf32>
    %cst_77 = arith.constant 5.000000e-01 : f32
    %326 = vector.broadcast %cst_77 : f32 to vector<2x32xf32>
    %327 = arith.mulf %326, %325 : vector<2x32xf32>
    %328 = arith.select %296, %323, %327 : vector<2x32xi1>, vector<2x32xf32>
    %329 = vector.extract_strided_slice %328 {offsets = [0, 0], sizes = [2, 8], strides = [1, 1]} : vector<2x32xf32> to vector<2x8xf32>
    %330 = vector.extract_strided_slice %328 {offsets = [0, 8], sizes = [2, 8], strides = [1, 1]} : vector<2x32xf32> to vector<2x8xf32>
    %331 = vector.extract_strided_slice %328 {offsets = [0, 16], sizes = [2, 8], strides = [1, 1]} : vector<2x32xf32> to vector<2x8xf32>
    %332 = vector.extract_strided_slice %328 {offsets = [0, 24], sizes = [2, 8], strides = [1, 1]} : vector<2x32xf32> to vector<2x8xf32>
    %333 = arith.mulf %330, %317 : vector<2x8xf32>
    %334 = arith.mulf %329, %331 : vector<2x8xf32>
    %335 = arith.addf %333, %334 : vector<2x8xf32>
    %336 = math.tanh %335 : vector<2x8xf32>
    %337 = arith.mulf %332, %336 : vector<2x8xf32>
    %cst_78 = arith.constant dense<0.000000e+00> : vector<2x32xf32>
    %338 = tpu.matmul %337, %290, %cst_78 {dimension_numbers = #tpu.dot_dimension_numbers<[1], [0], [0], [1], [0, 0, 1, 1], [], []>} : vector<2x8xf32>, vector<8x32xf32>, vector<2x32xf32> -> vector<2x32xf32>
    %339 = arith.addf %289, %338 : vector<2x32xf32>
    %340 = arith.mulf %339, %299 : vector<2x32xf32>
    %341 = math.tanh %340 : vector<2x32xf32>
    %cst_79 = arith.constant 1.000000e+00 : f32
    %342 = vector.broadcast %cst_79 : f32 to vector<2x32xf32>
    %343 = arith.addf %342, %341 : vector<2x32xf32>
    %cst_80 = arith.constant 5.000000e-01 : f32
    %344 = vector.broadcast %cst_80 : f32 to vector<2x32xf32>
    %345 = arith.mulf %344, %343 : vector<2x32xf32>
    %346 = arith.select %296, %341, %345 : vector<2x32xi1>, vector<2x32xf32>
    %347 = vector.extract_strided_slice %346 {offsets = [0, 0], sizes = [2, 8], strides = [1, 1]} : vector<2x32xf32> to vector<2x8xf32>
    %348 = vector.extract_strided_slice %346 {offsets = [0, 8], sizes = [2, 8], strides = [1, 1]} : vector<2x32xf32> to vector<2x8xf32>
    %349 = vector.extract_strided_slice %346 {offsets = [0, 16], sizes = [2, 8], strides = [1, 1]} : vector<2x32xf32> to vector<2x8xf32>
    %350 = vector.extract_strided_slice %346 {offsets = [0, 24], sizes = [2, 8], strides = [1, 1]} : vector<2x32xf32> to vector<2x8xf32>
    %351 = arith.mulf %348, %335 : vector<2x8xf32>
    %352 = arith.mulf %347, %349 : vector<2x8xf32>
    %353 = arith.addf %351, %352 : vector<2x8xf32>
    %354 = math.tanh %353 : vector<2x8xf32>
    %355 = arith.mulf %350, %354 : vector<2x8xf32>
    %cst_81 = arith.constant dense<0.000000e+00> : vector<2x32xf32>
    %356 = tpu.matmul %355, %290, %cst_81 {dimension_numbers = #tpu.dot_dimension_numbers<[1], [0], [0], [1], [0, 0, 1, 1], [], []>} : vector<2x8xf32>, vector<8x32xf32>, vector<2x32xf32> -> vector<2x32xf32>
    %357 = arith.addf %289, %356 : vector<2x32xf32>
    %358 = arith.mulf %357, %299 : vector<2x32xf32>
    %359 = math.tanh %358 : vector<2x32xf32>
    %cst_82 = arith.constant 1.000000e+00 : f32
    %360 = vector.broadcast %cst_82 : f32 to vector<2x32xf32>
    %361 = arith.addf %360, %359 : vector<2x32xf32>
    %cst_83 = arith.constant 5.000000e-01 : f32
    %362 = vector.broadcast %cst_83 : f32 to vector<2x32xf32>
    %363 = arith.mulf %362, %361 : vector<2x32xf32>
    %364 = arith.select %296, %359, %363 : vector<2x32xi1>, vector<2x32xf32>
    %365 = vector.extract_strided_slice %364 {offsets = [0, 0], sizes = [2, 8], strides = [1, 1]} : vector<2x32xf32> to vector<2x8xf32>
    %366 = vector.extract_strided_slice %364 {offsets = [0, 8], sizes = [2, 8], strides = [1, 1]} : vector<2x32xf32> to vector<2x8xf32>
    %367 = vector.extract_strided_slice %364 {offsets = [0, 16], sizes = [2, 8], strides = [1, 1]} : vector<2x32xf32> to vector<2x8xf32>
    %368 = vector.extract_strided_slice %364 {offsets = [0, 24], sizes = [2, 8], strides = [1, 1]} : vector<2x32xf32> to vector<2x8xf32>
    %369 = arith.mulf %366, %353 : vector<2x8xf32>
    %370 = arith.mulf %365, %367 : vector<2x8xf32>
    %371 = arith.addf %369, %370 : vector<2x8xf32>
    %372 = math.tanh %371 : vector<2x8xf32>
    %373 = arith.mulf %368, %372 : vector<2x8xf32>
    %cst_84 = arith.constant dense<0.000000e+00> : vector<2x32xf32>
    %374 = tpu.matmul %373, %290, %cst_84 {dimension_numbers = #tpu.dot_dimension_numbers<[1], [0], [0], [1], [0, 0, 1, 1], [], []>} : vector<2x8xf32>, vector<8x32xf32>, vector<2x32xf32> -> vector<2x32xf32>
    %375 = arith.addf %289, %374 : vector<2x32xf32>
    %376 = arith.mulf %375, %299 : vector<2x32xf32>
    %377 = math.tanh %376 : vector<2x32xf32>
    %cst_85 = arith.constant 1.000000e+00 : f32
    %378 = vector.broadcast %cst_85 : f32 to vector<2x32xf32>
    %379 = arith.addf %378, %377 : vector<2x32xf32>
    %cst_86 = arith.constant 5.000000e-01 : f32
    %380 = vector.broadcast %cst_86 : f32 to vector<2x32xf32>
    %381 = arith.mulf %380, %379 : vector<2x32xf32>
    %382 = arith.select %296, %377, %381 : vector<2x32xi1>, vector<2x32xf32>
    %383 = vector.extract_strided_slice %382 {offsets = [0, 0], sizes = [2, 8], strides = [1, 1]} : vector<2x32xf32> to vector<2x8xf32>
    %384 = vector.extract_strided_slice %382 {offsets = [0, 8], sizes = [2, 8], strides = [1, 1]} : vector<2x32xf32> to vector<2x8xf32>
    %385 = vector.extract_strided_slice %382 {offsets = [0, 16], sizes = [2, 8], strides = [1, 1]} : vector<2x32xf32> to vector<2x8xf32>
    %386 = vector.extract_strided_slice %382 {offsets = [0, 24], sizes = [2, 8], strides = [1, 1]} : vector<2x32xf32> to vector<2x8xf32>
    %387 = arith.mulf %384, %371 : vector<2x8xf32>
    %388 = arith.mulf %383, %385 : vector<2x8xf32>
    %389 = arith.addf %387, %388 : vector<2x8xf32>
    %390 = math.tanh %389 : vector<2x8xf32>
    %391 = arith.mulf %386, %390 : vector<2x8xf32>
    %cst_87 = arith.constant dense<0.000000e+00> : vector<2x32xf32>
    %392 = tpu.matmul %391, %290, %cst_87 {dimension_numbers = #tpu.dot_dimension_numbers<[1], [0], [0], [1], [0, 0, 1, 1], [], []>} : vector<2x8xf32>, vector<8x32xf32>, vector<2x32xf32> -> vector<2x32xf32>
    %393 = arith.addf %289, %392 : vector<2x32xf32>
    %394 = arith.mulf %393, %299 : vector<2x32xf32>
    %395 = math.tanh %394 : vector<2x32xf32>
    %cst_88 = arith.constant 1.000000e+00 : f32
    %396 = vector.broadcast %cst_88 : f32 to vector<2x32xf32>
    %397 = arith.addf %396, %395 : vector<2x32xf32>
    %cst_89 = arith.constant 5.000000e-01 : f32
    %398 = vector.broadcast %cst_89 : f32 to vector<2x32xf32>
    %399 = arith.mulf %398, %397 : vector<2x32xf32>
    %400 = arith.select %296, %395, %399 : vector<2x32xi1>, vector<2x32xf32>
    %401 = vector.extract_strided_slice %400 {offsets = [0, 0], sizes = [2, 8], strides = [1, 1]} : vector<2x32xf32> to vector<2x8xf32>
    %402 = vector.extract_strided_slice %400 {offsets = [0, 8], sizes = [2, 8], strides = [1, 1]} : vector<2x32xf32> to vector<2x8xf32>
    %403 = vector.extract_strided_slice %400 {offsets = [0, 16], sizes = [2, 8], strides = [1, 1]} : vector<2x32xf32> to vector<2x8xf32>
    %404 = vector.extract_strided_slice %400 {offsets = [0, 24], sizes = [2, 8], strides = [1, 1]} : vector<2x32xf32> to vector<2x8xf32>
    %405 = arith.mulf %402, %389 : vector<2x8xf32>
    %406 = arith.mulf %401, %403 : vector<2x8xf32>
    %407 = arith.addf %405, %406 : vector<2x8xf32>
    %408 = math.tanh %407 : vector<2x8xf32>
    %409 = arith.mulf %404, %408 : vector<2x8xf32>
    %cst_90 = arith.constant dense<0.000000e+00> : vector<2x32xf32>
    %410 = tpu.matmul %409, %290, %cst_90 {dimension_numbers = #tpu.dot_dimension_numbers<[1], [0], [0], [1], [0, 0, 1, 1], [], []>} : vector<2x8xf32>, vector<8x32xf32>, vector<2x32xf32> -> vector<2x32xf32>
    %411 = arith.addf %289, %410 : vector<2x32xf32>
    %412 = arith.mulf %411, %299 : vector<2x32xf32>
    %413 = math.tanh %412 : vector<2x32xf32>
    %cst_91 = arith.constant 1.000000e+00 : f32
    %414 = vector.broadcast %cst_91 : f32 to vector<2x32xf32>
    %415 = arith.addf %414, %413 : vector<2x32xf32>
    %cst_92 = arith.constant 5.000000e-01 : f32
    %416 = vector.broadcast %cst_92 : f32 to vector<2x32xf32>
    %417 = arith.mulf %416, %415 : vector<2x32xf32>
    %418 = arith.select %296, %413, %417 : vector<2x32xi1>, vector<2x32xf32>
    %419 = vector.extract_strided_slice %418 {offsets = [0, 0], sizes = [2, 8], strides = [1, 1]} : vector<2x32xf32> to vector<2x8xf32>
    %420 = vector.extract_strided_slice %418 {offsets = [0, 8], sizes = [2, 8], strides = [1, 1]} : vector<2x32xf32> to vector<2x8xf32>
    %421 = vector.extract_strided_slice %418 {offsets = [0, 16], sizes = [2, 8], strides = [1, 1]} : vector<2x32xf32> to vector<2x8xf32>
    %422 = vector.extract_strided_slice %418 {offsets = [0, 24], sizes = [2, 8], strides = [1, 1]} : vector<2x32xf32> to vector<2x8xf32>
    %423 = arith.mulf %420, %407 : vector<2x8xf32>
    %424 = arith.mulf %419, %421 : vector<2x8xf32>
    %425 = arith.addf %423, %424 : vector<2x8xf32>
    %426 = math.tanh %425 : vector<2x8xf32>
    %427 = arith.mulf %422, %426 : vector<2x8xf32>
    %cst_93 = arith.constant dense<0.000000e+00> : vector<2x32xf32>
    %428 = tpu.matmul %427, %290, %cst_93 {dimension_numbers = #tpu.dot_dimension_numbers<[1], [0], [0], [1], [0, 0, 1, 1], [], []>} : vector<2x8xf32>, vector<8x32xf32>, vector<2x32xf32> -> vector<2x32xf32>
    %429 = arith.addf %289, %428 : vector<2x32xf32>
    %430 = arith.mulf %429, %299 : vector<2x32xf32>
    %431 = math.tanh %430 : vector<2x32xf32>
    %cst_94 = arith.constant 1.000000e+00 : f32
    %432 = vector.broadcast %cst_94 : f32 to vector<2x32xf32>
    %433 = arith.addf %432, %431 : vector<2x32xf32>
    %cst_95 = arith.constant 5.000000e-01 : f32
    %434 = vector.broadcast %cst_95 : f32 to vector<2x32xf32>
    %435 = arith.mulf %434, %433 : vector<2x32xf32>
    %436 = arith.select %296, %431, %435 : vector<2x32xi1>, vector<2x32xf32>
    %437 = vector.extract_strided_slice %436 {offsets = [0, 0], sizes = [2, 8], strides = [1, 1]} : vector<2x32xf32> to vector<2x8xf32>
    %438 = vector.extract_strided_slice %436 {offsets = [0, 8], sizes = [2, 8], strides = [1, 1]} : vector<2x32xf32> to vector<2x8xf32>
    %439 = vector.extract_strided_slice %436 {offsets = [0, 16], sizes = [2, 8], strides = [1, 1]} : vector<2x32xf32> to vector<2x8xf32>
    %440 = vector.extract_strided_slice %436 {offsets = [0, 24], sizes = [2, 8], strides = [1, 1]} : vector<2x32xf32> to vector<2x8xf32>
    %441 = arith.mulf %438, %425 : vector<2x8xf32>
    %442 = arith.mulf %437, %439 : vector<2x8xf32>
    %443 = arith.addf %441, %442 : vector<2x8xf32>
    %444 = math.tanh %443 : vector<2x8xf32>
    %445 = arith.mulf %440, %444 : vector<2x8xf32>
    %446 = tpu.concatenate %319, %337, %355, %373, %391, %409, %427, %445 in 1 : vector<2x8xf32>, vector<2x8xf32>, vector<2x8xf32>, vector<2x8xf32>, vector<2x8xf32>, vector<2x8xf32>, vector<2x8xf32>, vector<2x8xf32> -> vector<2x64xf32>
    %c0_96 = arith.constant 0 : index
    %c0_97 = arith.constant 0 : index
    %447 = vector.load %arg13[%c0_96, %c0_97] : memref<2x64xf32, #tpu.memory_space<vmem>>, vector<2x64xf32>
    tpu.vector_store %arg13[%c0_96, %c0_97], %446 {strides = array<i32>} : memref<2x64xf32, #tpu.memory_space<vmem>>, vector<2x64xf32>,
    return
  }
}

</mosaic_0001>

<llo_original>
// kernel: tpu_custom_call.1
$region0: #{tpu_custom_call.1}
  #allocation0 [shape = 'u32[]', space=smem, size = 0x4, offset = 0x4, fixed_abs, tag = 'smem constant byte address 0x4 - core index']
  #allocation1 [shape = 'u32[144,128]{1,0:T(1,128)}', space=vmem, size = 0x12000, scoped, tag = 'internal scratch']
  #allocation2 [shape = 'f32[1,1]{1,0:T(1,128)S(1)}', space=vmem, size = 0x200, scoped, tag = 'scoped memory for tpu_custom_call.1']
  %s0 = inlined_call_operand.vmem [shape: f32[16,8], index: 0, kind: input, shape index: {}]
  %s1 = inlined_call_operand.hbm [shape: f32[8,256], index: 1, kind: input, shape index: {}]
  %s2 = inlined_call_operand.vmem [shape: f32[32,256], index: 2, kind: input, shape index: {}]
  %s3 = inlined_call_operand.vmem [shape: f32[1,256], index: 3, kind: input, shape index: {}]
  %s4 = inlined_call_operand.hbm [shape: f32[3,64,64], index: 4, kind: input, shape index: {}]
  %s5 = inlined_call_operand.vmem [shape: f32[1,64], index: 5, kind: input, shape index: {}]
  %s6 = inlined_call_operand.vmem [shape: f32[64,64], index: 6, kind: input, shape index: {}]
  %s7 = inlined_call_operand.vmem [shape: f32[1,64], index: 7, kind: input, shape index: {}]
  %s8 = inlined_call_operand.vmem [shape: f32[1,64], index: 8, kind: input, shape index: {}]
  %s9 = inlined_call_operand.<no memory space> [shape: f32[1,1], index: 9, kind: input, shape index: {}]
  %s10 = inlined_call_operand.vmem [shape: f32[64,32], index: 10, kind: input, shape index: {}]
  %s11 = inlined_call_operand.vmem [shape: f32[8,32], index: 11, kind: input, shape index: {}]
  %s12 = inlined_call_operand.vmem [shape: f32[1,32], index: 12, kind: input, shape index: {}]
  %s13 = inlined_call_operand.hbm [shape: f32[2,64], index: 13, kind: output, shape index: {}]
  %s14 = sld [smem:[#allocation0]]
  $region70: #{tpu_custom_call.1} parent=0
    _
  %s16 = ssub.s32 1, %s14
  %s17 = scalar_select 0, %s16, %s14
  %v18 = vstv %s9
  %19 = vst [vmem:[#allocation2] sm:$0x1] %v18
  $region1: #{tpu_custom_call.1} parent=0
    #allocation3 [shape = 'u8[8192]{0}', space=vmem, size = 0x2000, scoped, tag = 'input window, operand 1, single buffered']
    #allocation4 [shape = 's32[1]{0}', space=sflag, size = 0x4, scoped, tag = 'scoped memory for tpu_custom_call.1']
    #allocation5 [shape = 's32[1]{0}', space=sflag, size = 0x4, scoped, tag = 'scoped memory for tpu_custom_call.1']
    #allocation6 [shape = 'u8[98304]{0}', space=vmem, size = 0x18000, scoped, tag = 'input window, operand 4, single buffered']
    #allocation7 [shape = 's32[1]{0}', space=sflag, size = 0x4, scoped, tag = 'scoped memory for tpu_custom_call.1']
    #allocation8 [shape = 'u8[1024]{0}', space=vmem, size = 0x400, scoped, tag = 'output window, operand 0, single buffered']
    %20 = vsyncpa [#allocation4], 0
    %21 = vsyncpa [#allocation7], 0
    %22 = vsyncpa [#allocation5], 0
    // Predicated region
    $region2: #{tpu_custom_call.1} parent=1 // pred_check
      _
    $region3: #{tpu_custom_call.1} parent=1 // pred_check_branch
      %24 = sbr.rel (0) target = $region5
    $region4: #{tpu_custom_call.1} parent=1 // pred_region
      _
    $region5: #{tpu_custom_call.1} parent=1 // pred_fallthru
      _
    // Predicated region
    $region6: #{tpu_custom_call.1} parent=1 // pred_check
      _
    $region7: #{tpu_custom_call.1} parent=1 // pred_check_branch
      %26 = sbr.rel (0) target = $region9
    $region8: #{tpu_custom_call.1} parent=1 // pred_region
      %s28 = ssub.s32 256, 256
      %29 = vsyncadd [#allocation4], %s28
      %s31 = sshll.u32 [#allocation3], 4
      %s32 = int_to_ptr.vmem [resolvable:$true] %s31
      %34 = dma.hbm_to_vmem [thread:$0]  %s1, 256, %s32, [#allocation4]
    $region9: #{tpu_custom_call.1} parent=1 // pred_fallthru
      _
    // Predicated region
    $region10: #{tpu_custom_call.1} parent=1 // pred_check
      _
    $region11: #{tpu_custom_call.1} parent=1 // pred_check_branch
      %36 = sbr.rel (0) target = $region13
    $region12: #{tpu_custom_call.1} parent=1 // pred_region
      _
    $region13: #{tpu_custom_call.1} parent=1 // pred_fallthru
      _
    // Predicated region
    $region14: #{tpu_custom_call.1} parent=1 // pred_check
      _
    $region15: #{tpu_custom_call.1} parent=1 // pred_check_branch
      %38 = sbr.rel (0) target = $region17
    $region16: #{tpu_custom_call.1} parent=1 // pred_region
      _
    $region17: #{tpu_custom_call.1} parent=1 // pred_fallthru
      _
    // Predicated region
    $region18: #{tpu_custom_call.1} parent=1 // pred_check
      _
    $region19: #{tpu_custom_call.1} parent=1 // pred_check_branch
      %40 = sbr.rel (0) target = $region21
    $region20: #{tpu_custom_call.1} parent=1 // pred_region
      %s42 = ssub.s32 3072, 3072
      %43 = vsyncadd [#allocation7], %s42
      %s44 = sshll.u32 [#allocation6], 4
      %s45 = int_to_ptr.vmem [resolvable:$true] %s44
      %50 = dma.hbm_to_vmem [thread:$0]  %s4, 3072, %s45, [#allocation7], 128, 128, 8
    $region21: #{tpu_custom_call.1} parent=1 // pred_fallthru
      _
    // Predicated region
    $region22: #{tpu_custom_call.1} parent=1 // pred_check
      _
    $region23: #{tpu_custom_call.1} parent=1 // pred_check_branch
      %52 = sbr.rel (0) target = $region25
    $region24: #{tpu_custom_call.1} parent=1 // pred_region
      _
    $region25: #{tpu_custom_call.1} parent=1 // pred_fallthru
      _
    // Predicated region
    $region26: #{tpu_custom_call.1} parent=1 // pred_check
      _
    $region27: #{tpu_custom_call.1} parent=1 // pred_check_branch
      %54 = sbr.rel (0) target = $region29
    $region28: #{tpu_custom_call.1} parent=1 // pred_region
      _
    $region29: #{tpu_custom_call.1} parent=1 // pred_fallthru
      _
    // Predicated region
    $region30: #{tpu_custom_call.1} parent=1 // pred_check
      _
    $region31: #{tpu_custom_call.1} parent=1 // pred_check_branch
      %56 = sbr.rel (0) target = $region33
    $region32: #{tpu_custom_call.1} parent=1 // pred_region
      _
    $region33: #{tpu_custom_call.1} parent=1 // pred_fallthru
      _
    // Predicated region
    $region34: #{tpu_custom_call.1} parent=1 // pred_check
      _
    $region35: #{tpu_custom_call.1} parent=1 // pred_check_branch
      %58 = sbr.rel (0) target = $region37
    $region36: #{tpu_custom_call.1} parent=1 // pred_region
      _
    $region37: #{tpu_custom_call.1} parent=1 // pred_fallthru
      _
    // Predicated region
    $region38: #{tpu_custom_call.1} parent=1 // pred_check
      _
    $region39: #{tpu_custom_call.1} parent=1 // pred_check_branch
      %60 = sbr.rel (0) target = $region41
    $region40: #{tpu_custom_call.1} parent=1 // pred_region
      _
    $region41: #{tpu_custom_call.1} parent=1 // pred_fallthru
      _
    // Predicated region
    $region42: #{tpu_custom_call.1} parent=1 // pred_check
      _
    $region43: #{tpu_custom_call.1} parent=1 // pred_check_branch
      %62 = sbr.rel (0) target = $region45
    $region44: #{tpu_custom_call.1} parent=1 // pred_region
      _
    $region45: #{tpu_custom_call.1} parent=1 // pred_fallthru
      _
    // Predicated region
    $region46: #{tpu_custom_call.1} parent=1 // pred_check
      _
    $region47: #{tpu_custom_call.1} parent=1 // pred_check_branch
      %64 = sbr.rel (0) target = $region49
    $region48: #{tpu_custom_call.1} parent=1 // pred_region
      _
    $region49: #{tpu_custom_call.1} parent=1 // pred_fallthru
      _
    // Predicated region
    $region50: #{tpu_custom_call.1} parent=1 // pred_check
      _
    $region51: #{tpu_custom_call.1} parent=1 // pred_check_branch
      %66 = sbr.rel (0) target = $region53
    $region52: #{tpu_custom_call.1} parent=1 // pred_region
      _
    $region53: #{tpu_custom_call.1} parent=1 // pred_fallthru
      _
    // Predicated region
    $region54: #{tpu_custom_call.1} parent=1 // pred_check
      _
    $region55: #{tpu_custom_call.1} parent=1 // pred_check_branch
      %68 = sbr.rel (0) target = $region57
    $region56: #{tpu_custom_call.1} parent=1 // pred_region
      %69 = dma.done [#allocation4], 256
    $region57: #{tpu_custom_call.1} parent=1 // pred_fallthru
      _
    // Predicated region
    $region58: #{tpu_custom_call.1} parent=1 // pred_check
      _
    $region59: #{tpu_custom_call.1} parent=1 // pred_check_branch
      %71 = sbr.rel (0) target = $region61
    $region60: #{tpu_custom_call.1} parent=1 // pred_region
      %72 = dma.done [#allocation7], 3072
    $region61: #{tpu_custom_call.1} parent=1 // pred_fallthru
      _
    %v73 = vld [vmem:[%s0] sm:$0xff]
    %v74 = vld [vmem:[%s0 + $0x8] sm:$0xff]
    %v75 = vld [vmem:[#allocation3] sm:$0xff]
    %v76 = vld [vmem:[#allocation3 + $0x8] sm:$0xff]
    %v77 = vld [vmem:[%s3] sm:$0x3]
    %v79 = vlaneseq
    %v80 = vshrl.u32 %v79, 7
    %v81 = vsub.s32 0, %v80
    %v82 = vrot.slane %v77, %v81
    %v83 = vlaneseq
    %v84 = vshrl.u32 %v83, 7
    %v85 = vsub.s32 1, %v84
    %v86 = vrot.slane %v77, %v85
    %vm89 = vcmask 64512
    %v91 = vsel %vm89, %v73, 0
    %v94 = vsel %vm89, %v74, 0
    %96 = vmatprep.subr.mxu0 %v76
    %97 = vmatpush1.msra.mxu0 %v75
    %98 = vmatprep.subr.mxu0 0.0
    %99 = vmatpush1.msra.mxu0 0.0
    %100 = vmatprep.subr.mxu0 0.0
    %101 = vmatpush1.msra.mxu0 0.0
    %102 = vmatprep.subr.mxu0 0.0
    %103 = vmatpush1.msra.mxu0 0.0
    %104 = vmatprep.subr.mxu0 0.0
    %105 = vmatpush1.msra.mxu0 0.0
    %106 = vmatprep.subr.mxu0 0.0
    %107 = vmatpush1.msra.mxu0 0.0
    %108 = vmatprep.subr.mxu0 0.0
    %109 = vmatpush1.msra.mxu0 0.0
    %110 = vmatprep.subr.mxu0 0.0
    %111 = vmatpush1.msra.mxu0 0.0
    %112 = vmatprep.subr.mxu0 0.0
    %113 = vmatpush1.msra.mxu0 0.0
    %114 = vmatprep.subr.mxu0 0.0
    %115 = vmatpush1.msra.mxu0 0.0
    %116 = vmatprep.subr.mxu0 0.0
    %117 = vmatpush1.msra.mxu0 0.0
    %118 = vmatprep.subr.mxu0 0.0
    %119 = vmatpush1.msra.mxu0 0.0
    %120 = vmatprep.subr.mxu0 0.0
    %121 = vmatpush1.msra.mxu0 0.0
    %122 = vmatprep.subr.mxu0 0.0
    %123 = vmatpush1.msra.mxu0 0.0
    %124 = vmatprep.subr.mxu0 0.0
    %125 = vmatpush1.msra.mxu0 0.0
    %126 = vmatprep.subr.mxu0 0.0
    %127 = vmatpush1.msra.mxu0 0.0
    %128 = vmatprep.subr.mxu0 0.0
    %129 = vmatpush1.msra.mxu0 0.0
    %130 = vmatprep.subr.mxu0 0.0
    %131 = vmatpush1.msra.mxu0 0.0
    %132 = vmatprep.subr.mxu0 0.0
    %133 = vmatpush1.msra.mxu0 0.0
    %134 = vmatprep.subr.mxu0 0.0
    %135 = vmatpush1.msra.mxu0 0.0
    %136 = vmatprep.subr.mxu0 0.0
    %137 = vmatpush1.msra.mxu0 0.0
    %138 = vmatprep.subr.mxu0 0.0
    %139 = vmatpush1.msra.mxu0 0.0
    %140 = vmatprep.subr.mxu0 0.0
    %141 = vmatpush1.msra.mxu0 0.0
    %142 = vmatprep.subr.mxu0 0.0
    %143 = vmatpush1.msra.mxu0 0.0
    %144 = vmatprep.subr.mxu0 0.0
    %145 = vmatpush1.msra.mxu0 0.0
    %146 = vmatprep.subr.mxu0 0.0
    %147 = vmatpush1.msra.mxu0 0.0
    %148 = vmatprep.subr.mxu0 0.0
    %149 = vmatpush1.msra.mxu0 0.0
    %150 = vmatprep.subr.mxu0 0.0
    %151 = vmatpush1.msra.mxu0 0.0
    %152 = vmatprep.subr.mxu0 0.0
    %153 = vmatpush1.msra.mxu0 0.0
    %154 = vmatprep.subr.mxu0 0.0
    %155 = vmatpush1.msra.mxu0 0.0
    %156 = vmatprep.subr.mxu0 0.0
    %157 = vmatpush1.msra.mxu0 0.0
    %158 = vmatprep.subr.mxu0 0.0
    %159 = vmatpush1.msra.mxu0 0.0
    %160 = vmatprep.mubr.f32.mxu0 0.0
    %161 = vmatmul.mubr.f32.gmra.mrb[0].mxu0 %v91
    %v162 = vpop.f32.mrb[0].mxu0
    %v163 = vadd.f32 %v82, %v162
    %v164 = vpop.f32.mrb[0].mxu0
    %v165 = vadd.f32 %v86, %v164
    %166 = vmatprep.mubr.f32.mxu0 0.0
    %167 = vmatmul.mubr.f32.gmra.mrb[0].mxu0 %v94
    %v168 = vpop.f32.mrb[0].mxu0
    %v169 = vadd.f32 %v82, %v168
    %v170 = vpop.f32.mrb[0].mxu0
    %v171 = vadd.f32 %v86, %v170
    %172 = vdwg.mxu0
    %v173 = vld [vmem:[%s2] sm:$0xff]
    %v174 = vld [vmem:[%s2 + $0x8] sm:$0xff]
    %v175 = vld [vmem:[%s2 + $0x10] sm:$0xff]
    %v176 = vld [vmem:[%s2 + $0x18] sm:$0xff]
    %v177 = vld [vmem:[%s2 + $0x20] sm:$0xff]
    %v178 = vld [vmem:[%s2 + $0x28] sm:$0xff]
    %v179 = vld [vmem:[%s2 + $0x30] sm:$0xff]
    %v180 = vld [vmem:[%s2 + $0x38] sm:$0xff]
    %v181 = vlaneseq
    %v182 = vand.u32 %v181, 127
    %vm183 = vcmp.ge.s32.totalorder %v182, 64
    %vm184 = vcmp.lt.s32.totalorder %v182, 96
    %vm185 = vmand %vm183, %vm184
    %v186 = vsel %vm185, 1.0, 0.5
    %v187 = vlaneseq
    %v188 = vshrl.u32 %v187, 7
    %vm189 = vcmp.lt.s32.totalorder %v188, 2
    %vm190 = vcmask 261120
    %v192 = vsel %vm190, 0.0, 0
    %194 = vmatprep.subr.mxu0 %v174
    %195 = vmatpush1.msra.mxu0 %v173
    %196 = vmatprep.subr.mxu0 %v176
    %197 = vmatpush1.msra.mxu0 %v175
    %198 = vmatprep.subr.mxu0 %v178
    %199 = vmatpush1.msra.mxu0 %v177
    %200 = vmatprep.subr.mxu0 %v180
    %201 = vmatpush1.msra.mxu0 %v179
    %202 = vmatprep.subr.mxu0 0.0
    %203 = vmatpush1.msra.mxu0 0.0
    %204 = vmatprep.subr.mxu0 0.0
    %205 = vmatpush1.msra.mxu0 0.0
    %206 = vmatprep.subr.mxu0 0.0
    %207 = vmatpush1.msra.mxu0 0.0
    %208 = vmatprep.subr.mxu0 0.0
    %209 = vmatpush1.msra.mxu0 0.0
    %210 = vmatprep.subr.mxu0 0.0
    %211 = vmatpush1.msra.mxu0 0.0
    %212 = vmatprep.subr.mxu0 0.0
    %213 = vmatpush1.msra.mxu0 0.0
    %214 = vmatprep.subr.mxu0 0.0
    %215 = vmatpush1.msra.mxu0 0.0
    %216 = vmatprep.subr.mxu0 0.0
    %217 = vmatpush1.msra.mxu0 0.0
    %218 = vmatprep.subr.mxu0 0.0
    %219 = vmatpush1.msra.mxu0 0.0
    %220 = vmatprep.subr.mxu0 0.0
    %221 = vmatpush1.msra.mxu0 0.0
    %222 = vmatprep.subr.mxu0 0.0
    %223 = vmatpush1.msra.mxu0 0.0
    %224 = vmatprep.subr.mxu0 0.0
    %225 = vmatpush1.msra.mxu0 0.0
    %226 = vmatprep.subr.mxu0 0.0
    %227 = vmatpush1.msra.mxu0 0.0
    %228 = vmatprep.subr.mxu0 0.0
    %229 = vmatpush1.msra.mxu0 0.0
    %230 = vmatprep.subr.mxu0 0.0
    %231 = vmatpush1.msra.mxu0 0.0
    %232 = vmatprep.subr.mxu0 0.0
    %233 = vmatpush1.msra.mxu0 0.0
    %234 = vmatprep.subr.mxu0 0.0
    %235 = vmatpush1.msra.mxu0 0.0
    %236 = vmatprep.subr.mxu0 0.0
    %237 = vmatpush1.msra.mxu0 0.0
    %238 = vmatprep.subr.mxu0 0.0
    %239 = vmatpush1.msra.mxu0 0.0
    %240 = vmatprep.subr.mxu0 0.0
    %241 = vmatpush1.msra.mxu0 0.0
    %242 = vmatprep.subr.mxu0 0.0
    %243 = vmatpush1.msra.mxu0 0.0
    %244 = vmatprep.subr.mxu0 0.0
    %245 = vmatpush1.msra.mxu0 0.0
    %246 = vmatprep.subr.mxu0 0.0
    %247 = vmatpush1.msra.mxu0 0.0
    %248 = vmatprep.subr.mxu0 0.0
    %249 = vmatpush1.msra.mxu0 0.0
    %250 = vmatprep.subr.mxu0 0.0
    %251 = vmatpush1.msra.mxu0 0.0
    %252 = vmatprep.subr.mxu0 0.0
    %253 = vmatpush1.msra.mxu0 0.0
    %254 = vmatprep.subr.mxu0 0.0
    %255 = vmatpush1.msra.mxu0 0.0
    %256 = vmatprep.subr.mxu0 0.0
    %257 = vmatpush1.msra.mxu0 0.0
    %258 = vmatprep.mubr.f32.mxu0 0.0
    %259 = vmatmul.mubr.f32.gmra.mrb[0].mxu0 %v192
    %v260 = vpop.f32.mrb[0].mxu0
    %v261 = vadd.f32 0.0, %v260
    %v262 = vpop.f32.mrb[0].mxu0
    %v263 = vadd.f32 0.0, %v262
    %264 = vdwg.mxu0
    %v265 = vsel %vm189, %v261, %v263
    %v267 = vrot.slane %v171, 4
    %vm269 = vcmask 1041408
    %v270 = vsel %vm269, %v163, %v267
    %v271 = vadd.f32 %v270, %v265
    %v272 = vmul.f32 %v271, %v186
    %v273 = vtanh.pop %v272
    %v274 = vadd.f32 %v273, 1.0
    %v275 = vmul.f32 %v274, 0.5
    %v276 = vsel %vm185, %v273, %v275
    %v277 = vmul.f32 %v276, 0.0
    %279 = vrot.lane.b32.xlu0 %v276, 64
    %v280 = vpop.permute.xlu0 %279
    %v282 = vmul.f32 %v276, %v280
    %284 = vrot.lane.b32.xlu0 %v282, 32
    %v285 = vpop.permute.xlu0 %284
    %v287 = vadd.f32 %v277, %v285
    %v288 = vtanh.pop %v287
    %290 = vrot.lane.b32.xlu0 %v288, 64
    %v291 = vpop.permute.xlu0 %290
    %v293 = vmul.f32 %v276, %v291
    %295 = vrot.lane.b32.xlu0 %v293, 32
    %v296 = vpop.permute.xlu0 %295
    %v297 = vsel %vm190, %v296, 0
    %299 = vmatprep.subr.mxu0 %v174
    %300 = vmatpush1.msra.mxu0 %v173
    %301 = vmatprep.subr.mxu0 %v176
    %302 = vmatpush1.msra.mxu0 %v175
    %303 = vmatprep.subr.mxu0 %v178
    %304 = vmatpush1.msra.mxu0 %v177
    %305 = vmatprep.subr.mxu0 %v180
    %306 = vmatpush1.msra.mxu0 %v179
    %307 = vmatprep.subr.mxu0 0.0
    %308 = vmatpush1.msra.mxu0 0.0
    %309 = vmatprep.subr.mxu0 0.0
    %310 = vmatpush1.msra.mxu0 0.0
    %311 = vmatprep.subr.mxu0 0.0
    %312 = vmatpush1.msra.mxu0 0.0
    %313 = vmatprep.subr.mxu0 0.0
    %314 = vmatpush1.msra.mxu0 0.0
    %315 = vmatprep.subr.mxu0 0.0
    %316 = vmatpush1.msra.mxu0 0.0
    %317 = vmatprep.subr.mxu0 0.0
    %318 = vmatpush1.msra.mxu0 0.0
    %319 = vmatprep.subr.mxu0 0.0
    %320 = vmatpush1.msra.mxu0 0.0
    %321 = vmatprep.subr.mxu0 0.0
    %322 = vmatpush1.msra.mxu0 0.0
    %323 = vmatprep.subr.mxu0 0.0
    %324 = vmatpush1.msra.mxu0 0.0
    %325 = vmatprep.subr.mxu0 0.0
    %326 = vmatpush1.msra.mxu0 0.0
    %327 = vmatprep.subr.mxu0 0.0
    %328 = vmatpush1.msra.mxu0 0.0
    %329 = vmatprep.subr.mxu0 0.0
    %330 = vmatpush1.msra.mxu0 0.0
    %331 = vmatprep.subr.mxu0 0.0
    %332 = vmatpush1.msra.mxu0 0.0
    %333 = vmatprep.subr.mxu0 0.0
    %334 = vmatpush1.msra.mxu0 0.0
    %335 = vmatprep.subr.mxu0 0.0
    %336 = vmatpush1.msra.mxu0 0.0
    %337 = vmatprep.subr.mxu0 0.0
    %338 = vmatpush1.msra.mxu0 0.0
    %339 = vmatprep.subr.mxu0 0.0
    %340 = vmatpush1.msra.mxu0 0.0
    %341 = vmatprep.subr.mxu0 0.0
    %342 = vmatpush1.msra.mxu0 0.0
    %343 = vmatprep.subr.mxu0 0.0
    %344 = vmatpush1.msra.mxu0 0.0
    %345 = vmatprep.subr.mxu0 0.0
    %346 = vmatpush1.msra.mxu0 0.0
    %347 = vmatprep.subr.mxu0 0.0
    %348 = vmatpush1.msra.mxu0 0.0
    %349 = vmatprep.subr.mxu0 0.0
    %350 = vmatpush1.msra.mxu0 0.0
    %351 = vmatprep.subr.mxu0 0.0
    %352 = vmatpush1.msra.mxu0 0.0
    %353 = vmatprep.subr.mxu0 0.0
    %354 = vmatpush1.msra.mxu0 0.0
    %355 = vmatprep.subr.mxu0 0.0
    %356 = vmatpush1.msra.mxu0 0.0
    %357 = vmatprep.subr.mxu0 0.0
    %358 = vmatpush1.msra.mxu0 0.0
    %359 = vmatprep.subr.mxu0 0.0
    %360 = vmatpush1.msra.mxu0 0.0
    %361 = vmatprep.subr.mxu0 0.0
    %362 = vmatpush1.msra.mxu0 0.0
    %363 = vmatprep.mubr.f32.mxu0 0.0
    %364 = vmatmul.mubr.f32.gmra.mrb[0].mxu0 %v297
    %v365 = vpop.f32.mrb[0].mxu0
    %v366 = vadd.f32 0.0, %v365
    %v367 = vpop.f32.mrb[0].mxu0
    %v368 = vadd.f32 0.0, %v367
    %369 = vdwg.mxu0
    %v370 = vsel %vm189, %v366, %v368
    %v372 = vrot.slane %v163, 2
    %v374 = vrot.slane %v171, 2
    %v376 = vsel %vm269, %v372, %v374
    %v377 = vadd.f32 %v376, %v370
    %v378 = vmul.f32 %v377, %v186
    %v379 = vtanh.pop %v378
    %v380 = vadd.f32 %v379, 1.0
    %v381 = vmul.f32 %v380, 0.5
    %v382 = vsel %vm185, %v379, %v381
    %v383 = vmul.f32 %v382, %v287
    %385 = vrot.lane.b32.xlu0 %v382, 64
    %v386 = vpop.permute.xlu0 %385
    %v388 = vmul.f32 %v382, %v386
    %390 = vrot.lane.b32.xlu0 %v388, 32
    %v391 = vpop.permute.xlu0 %390
    %v393 = vadd.f32 %v383, %v391
    %v394 = vtanh.pop %v393
    %396 = vrot.lane.b32.xlu0 %v394, 64
    %v397 = vpop.permute.xlu0 %396
    %v399 = vmul.f32 %v382, %v397
    %401 = vrot.lane.b32.xlu0 %v399, 32
    %v402 = vpop.permute.xlu0 %401
    %v403 = vsel %vm190, %v402, 0
    %405 = vmatprep.subr.mxu0 %v174
    %406 = vmatpush1.msra.mxu0 %v173
    %407 = vmatprep.subr.mxu0 %v176
    %408 = vmatpush1.msra.mxu0 %v175
    %409 = vmatprep.subr.mxu0 %v178
    %410 = vmatpush1.msra.mxu0 %v177
    %411 = vmatprep.subr.mxu0 %v180
    %412 = vmatpush1.msra.mxu0 %v179
    %413 = vmatprep.subr.mxu0 0.0
    %414 = vmatpush1.msra.mxu0 0.0
    %415 = vmatprep.subr.mxu0 0.0
    %416 = vmatpush1.msra.mxu0 0.0
    %417 = vmatprep.subr.mxu0 0.0
    %418 = vmatpush1.msra.mxu0 0.0
    %419 = vmatprep.subr.mxu0 0.0
    %420 = vmatpush1.msra.mxu0 0.0
    %421 = vmatprep.subr.mxu0 0.0
    %422 = vmatpush1.msra.mxu0 0.0
    %423 = vmatprep.subr.mxu0 0.0
    %424 = vmatpush1.msra.mxu0 0.0
    %425 = vmatprep.subr.mxu0 0.0
    %426 = vmatpush1.msra.mxu0 0.0
    %427 = vmatprep.subr.mxu0 0.0
    %428 = vmatpush1.msra.mxu0 0.0
    %429 = vmatprep.subr.mxu0 0.0
    %430 = vmatpush1.msra.mxu0 0.0
    %431 = vmatprep.subr.mxu0 0.0
    %432 = vmatpush1.msra.mxu0 0.0
    %433 = vmatprep.subr.mxu0 0.0
    %434 = vmatpush1.msra.mxu0 0.0
    %435 = vmatprep.subr.mxu0 0.0
    %436 = vmatpush1.msra.mxu0 0.0
    %437 = vmatprep.subr.mxu0 0.0
    %438 = vmatpush1.msra.mxu0 0.0
    %439 = vmatprep.subr.mxu0 0.0
    %440 = vmatpush1.msra.mxu0 0.0
    %441 = vmatprep.subr.mxu0 0.0
    %442 = vmatpush1.msra.mxu0 0.0
    %443 = vmatprep.subr.mxu0 0.0
    %444 = vmatpush1.msra.mxu0 0.0
    %445 = vmatprep.subr.mxu0 0.0
    %446 = vmatpush1.msra.mxu0 0.0
    %447 = vmatprep.subr.mxu0 0.0
    %448 = vmatpush1.msra.mxu0 0.0
    %449 = vmatprep.subr.mxu0 0.0
    %450 = vmatpush1.msra.mxu0 0.0
    %451 = vmatprep.subr.mxu0 0.0
    %452 = vmatpush1.msra.mxu0 0.0
    %453 = vmatprep.subr.mxu0 0.0
    %454 = vmatpush1.msra.mxu0 0.0
    %455 = vmatprep.subr.mxu0 0.0
    %456 = vmatpush1.msra.mxu0 0.0
    %457 = vmatprep.subr.mxu0 0.0
    %458 = vmatpush1.msra.mxu0 0.0
    %459 = vmatprep.subr.mxu0 0.0
    %460 = vmatpush1.msra.mxu0 0.0
    %461 = vmatprep.subr.mxu0 0.0
    %462 = vmatpush1.msra.mxu0 0.0
    %463 = vmatprep.subr.mxu0 0.0
    %464 = vmatpush1.msra.mxu0 0.0
    %465 = vmatprep.subr.mxu0 0.0
    %466 = vmatpush1.msra.mxu0 0.0
    %467 = vmatprep.subr.mxu0 0.0
    %468 = vmatpush1.msra.mxu0 0.0
    %469 = vmatprep.mubr.f32.mxu0 0.0
    %470 = vmatmul.mubr.f32.gmra.mrb[0].mxu0 %v403
    %v471 = vpop.f32.mrb[0].mxu0
    %v472 = vadd.f32 0.0, %v471
    %v473 = vpop.f32.mrb[0].mxu0
    %v474 = vadd.f32 0.0, %v473
    %475 = vdwg.mxu0
    %v476 = vsel %vm189, %v472, %v474
    %v477 = vrot.slane %v163, 4
    %v479 = vsel %vm269, %v477, %v171
    %v480 = vadd.f32 %v479, %v476
    %v481 = vmul.f32 %v480, %v186
    %v482 = vtanh.pop %v481
    %v483 = vadd.f32 %v482, 1.0
    %v484 = vmul.f32 %v483, 0.5
    %v485 = vsel %vm185, %v482, %v484
    %v486 = vmul.f32 %v485, %v393
    %488 = vrot.lane.b32.xlu0 %v485, 64
    %v489 = vpop.permute.xlu0 %488
    %v491 = vmul.f32 %v485, %v489
    %493 = vrot.lane.b32.xlu0 %v491, 32
    %v494 = vpop.permute.xlu0 %493
    %v496 = vadd.f32 %v486, %v494
    %v497 = vtanh.pop %v496
    %499 = vrot.lane.b32.xlu0 %v497, 64
    %v500 = vpop.permute.xlu0 %499
    %v502 = vmul.f32 %v485, %v500
    %504 = vrot.lane.b32.xlu0 %v502, 32
    %v505 = vpop.permute.xlu0 %504
    %v506 = vsel %vm190, %v505, 0
    %508 = vmatprep.subr.mxu0 %v174
    %509 = vmatpush1.msra.mxu0 %v173
    %510 = vmatprep.subr.mxu0 %v176
    %511 = vmatpush1.msra.mxu0 %v175
    %512 = vmatprep.subr.mxu0 %v178
    %513 = vmatpush1.msra.mxu0 %v177
    %514 = vmatprep.subr.mxu0 %v180
    %515 = vmatpush1.msra.mxu0 %v179
    %516 = vmatprep.subr.mxu0 0.0
    %517 = vmatpush1.msra.mxu0 0.0
    %518 = vmatprep.subr.mxu0 0.0
    %519 = vmatpush1.msra.mxu0 0.0
    %520 = vmatprep.subr.mxu0 0.0
    %521 = vmatpush1.msra.mxu0 0.0
    %522 = vmatprep.subr.mxu0 0.0
    %523 = vmatpush1.msra.mxu0 0.0
    %524 = vmatprep.subr.mxu0 0.0
    %525 = vmatpush1.msra.mxu0 0.0
    %526 = vmatprep.subr.mxu0 0.0
    %527 = vmatpush1.msra.mxu0 0.0
    %528 = vmatprep.subr.mxu0 0.0
    %529 = vmatpush1.msra.mxu0 0.0
    %530 = vmatprep.subr.mxu0 0.0
    %531 = vmatpush1.msra.mxu0 0.0
    %532 = vmatprep.subr.mxu0 0.0
    %533 = vmatpush1.msra.mxu0 0.0
    %534 = vmatprep.subr.mxu0 0.0
    %535 = vmatpush1.msra.mxu0 0.0
    %536 = vmatprep.subr.mxu0 0.0
    %537 = vmatpush1.msra.mxu0 0.0
    %538 = vmatprep.subr.mxu0 0.0
    %539 = vmatpush1.msra.mxu0 0.0
    %540 = vmatprep.subr.mxu0 0.0
    %541 = vmatpush1.msra.mxu0 0.0
    %542 = vmatprep.subr.mxu0 0.0
    %543 = vmatpush1.msra.mxu0 0.0
    %544 = vmatprep.subr.mxu0 0.0
    %545 = vmatpush1.msra.mxu0 0.0
    %546 = vmatprep.subr.mxu0 0.0
    %547 = vmatpush1.msra.mxu0 0.0
    %548 = vmatprep.subr.mxu0 0.0
    %549 = vmatpush1.msra.mxu0 0.0
    %550 = vmatprep.subr.mxu0 0.0
    %551 = vmatpush1.msra.mxu0 0.0
    %552 = vmatprep.subr.mxu0 0.0
    %553 = vmatpush1.msra.mxu0 0.0
    %554 = vmatprep.subr.mxu0 0.0
    %555 = vmatpush1.msra.mxu0 0.0
    %556 = vmatprep.subr.mxu0 0.0
    %557 = vmatpush1.msra.mxu0 0.0
    %558 = vmatprep.subr.mxu0 0.0
    %559 = vmatpush1.msra.mxu0 0.0
    %560 = vmatprep.subr.mxu0 0.0
    %561 = vmatpush1.msra.mxu0 0.0
    %562 = vmatprep.subr.mxu0 0.0
    %563 = vmatpush1.msra.mxu0 0.0
    %564 = vmatprep.subr.mxu0 0.0
    %565 = vmatpush1.msra.mxu0 0.0
    %566 = vmatprep.subr.mxu0 0.0
    %567 = vmatpush1.msra.mxu0 0.0
    %568 = vmatprep.subr.mxu0 0.0
    %569 = vmatpush1.msra.mxu0 0.0
    %570 = vmatprep.subr.mxu0 0.0
    %571 = vmatpush1.msra.mxu0 0.0
    %572 = vmatprep.mubr.f32.mxu0 0.0
    %573 = vmatmul.mubr.f32.gmra.mrb[0].mxu0 %v506
    %v574 = vpop.f32.mrb[0].mxu0
    %v575 = vadd.f32 0.0, %v574
    %v576 = vpop.f32.mrb[0].mxu0
    %v577 = vadd.f32 0.0, %v576
    %578 = vdwg.mxu0
    %v579 = vsel %vm189, %v575, %v577
    %v580 = vrot.slane %v163, 6
    %v582 = vrot.slane %v171, 6
    %v584 = vsel %vm269, %v580, %v582
    %v585 = vadd.f32 %v584, %v579
    %v586 = vmul.f32 %v585, %v186
    %v587 = vtanh.pop %v586
    %v588 = vadd.f32 %v587, 1.0
    %v589 = vmul.f32 %v588, 0.5
    %v590 = vsel %vm185, %v587, %v589
    %v591 = vmul.f32 %v590, %v496
    %593 = vrot.lane.b32.xlu0 %v590, 64
    %v594 = vpop.permute.xlu0 %593
    %v596 = vmul.f32 %v590, %v594
    %598 = vrot.lane.b32.xlu0 %v596, 32
    %v599 = vpop.permute.xlu0 %598
    %v601 = vadd.f32 %v591, %v599
    %v602 = vtanh.pop %v601
    %604 = vrot.lane.b32.xlu0 %v602, 64
    %v605 = vpop.permute.xlu0 %604
    %v607 = vmul.f32 %v590, %v605
    %609 = vrot.lane.b32.xlu0 %v607, 32
    %v610 = vpop.permute.xlu0 %609
    %v611 = vsel %vm190, %v610, 0
    %613 = vmatprep.subr.mxu0 %v174
    %614 = vmatpush1.msra.mxu0 %v173
    %615 = vmatprep.subr.mxu0 %v176
    %616 = vmatpush1.msra.mxu0 %v175
    %617 = vmatprep.subr.mxu0 %v178
    %618 = vmatpush1.msra.mxu0 %v177
    %619 = vmatprep.subr.mxu0 %v180
    %620 = vmatpush1.msra.mxu0 %v179
    %621 = vmatprep.subr.mxu0 0.0
    %622 = vmatpush1.msra.mxu0 0.0
    %623 = vmatprep.subr.mxu0 0.0
    %624 = vmatpush1.msra.mxu0 0.0
    %625 = vmatprep.subr.mxu0 0.0
    %626 = vmatpush1.msra.mxu0 0.0
    %627 = vmatprep.subr.mxu0 0.0
    %628 = vmatpush1.msra.mxu0 0.0
    %629 = vmatprep.subr.mxu0 0.0
    %630 = vmatpush1.msra.mxu0 0.0
    %631 = vmatprep.subr.mxu0 0.0
    %632 = vmatpush1.msra.mxu0 0.0
    %633 = vmatprep.subr.mxu0 0.0
    %634 = vmatpush1.msra.mxu0 0.0
    %635 = vmatprep.subr.mxu0 0.0
    %636 = vmatpush1.msra.mxu0 0.0
    %637 = vmatprep.subr.mxu0 0.0
    %638 = vmatpush1.msra.mxu0 0.0
    %639 = vmatprep.subr.mxu0 0.0
    %640 = vmatpush1.msra.mxu0 0.0
    %641 = vmatprep.subr.mxu0 0.0
    %642 = vmatpush1.msra.mxu0 0.0
    %643 = vmatprep.subr.mxu0 0.0
    %644 = vmatpush1.msra.mxu0 0.0
    %645 = vmatprep.subr.mxu0 0.0
    %646 = vmatpush1.msra.mxu0 0.0
    %647 = vmatprep.subr.mxu0 0.0
    %648 = vmatpush1.msra.mxu0 0.0
    %649 = vmatprep.subr.mxu0 0.0
    %650 = vmatpush1.msra.mxu0 0.0
    %651 = vmatprep.subr.mxu0 0.0
    %652 = vmatpush1.msra.mxu0 0.0
    %653 = vmatprep.subr.mxu0 0.0
    %654 = vmatpush1.msra.mxu0 0.0
    %655 = vmatprep.subr.mxu0 0.0
    %656 = vmatpush1.msra.mxu0 0.0
    %657 = vmatprep.subr.mxu0 0.0
    %658 = vmatpush1.msra.mxu0 0.0
    %659 = vmatprep.subr.mxu0 0.0
    %660 = vmatpush1.msra.mxu0 0.0
    %661 = vmatprep.subr.mxu0 0.0
    %662 = vmatpush1.msra.mxu0 0.0
    %663 = vmatprep.subr.mxu0 0.0
    %664 = vmatpush1.msra.mxu0 0.0
    %665 = vmatprep.subr.mxu0 0.0
    %666 = vmatpush1.msra.mxu0 0.0
    %667 = vmatprep.subr.mxu0 0.0
    %668 = vmatpush1.msra.mxu0 0.0
    %669 = vmatprep.subr.mxu0 0.0
    %670 = vmatpush1.msra.mxu0 0.0
    %671 = vmatprep.subr.mxu0 0.0
    %672 = vmatpush1.msra.mxu0 0.0
    %673 = vmatprep.subr.mxu0 0.0
    %674 = vmatpush1.msra.mxu0 0.0
    %675 = vmatprep.subr.mxu0 0.0
    %676 = vmatpush1.msra.mxu0 0.0
    %677 = vmatprep.mubr.f32.mxu0 0.0
    %678 = vmatmul.mubr.f32.gmra.mrb[0].mxu0 %v611
    %v679 = vpop.f32.mrb[0].mxu0
    %v680 = vadd.f32 0.0, %v679
    %v681 = vpop.f32.mrb[0].mxu0
    %v682 = vadd.f32 0.0, %v681
    %683 = vdwg.mxu0
    %v684 = vsel %vm189, %v680, %v682
    %v686 = vrot.slane %v165, 4
    %v688 = vsel %vm269, %v169, %v686
    %v689 = vadd.f32 %v688, %v684
    %v690 = vmul.f32 %v689, %v186
    %v691 = vtanh.pop %v690
    %v692 = vadd.f32 %v691, 1.0
    %v693 = vmul.f32 %v692, 0.5
    %v694 = vsel %vm185, %v691, %v693
    %v695 = vmul.f32 %v694, %v601
    %697 = vrot.lane.b32.xlu0 %v694, 64
    %v698 = vpop.permute.xlu0 %697
    %v700 = vmul.f32 %v694, %v698
    %702 = vrot.lane.b32.xlu0 %v700, 32
    %v703 = vpop.permute.xlu0 %702
    %v705 = vadd.f32 %v695, %v703
    %v706 = vtanh.pop %v705
    %708 = vrot.lane.b32.xlu0 %v706, 64
    %v709 = vpop.permute.xlu0 %708
    %v711 = vmul.f32 %v694, %v709
    %713 = vrot.lane.b32.xlu0 %v711, 32
    %v714 = vpop.permute.xlu0 %713
    %v715 = vsel %vm190, %v714, 0
    %717 = vmatprep.subr.mxu0 %v174
    %718 = vmatpush1.msra.mxu0 %v173
    %719 = vmatprep.subr.mxu0 %v176
    %720 = vmatpush1.msra.mxu0 %v175
    %721 = vmatprep.subr.mxu0 %v178
    %722 = vmatpush1.msra.mxu0 %v177
    %723 = vmatprep.subr.mxu0 %v180
    %724 = vmatpush1.msra.mxu0 %v179
    %725 = vmatprep.subr.mxu0 0.0
    %726 = vmatpush1.msra.mxu0 0.0
    %727 = vmatprep.subr.mxu0 0.0
    %728 = vmatpush1.msra.mxu0 0.0
    %729 = vmatprep.subr.mxu0 0.0
    %730 = vmatpush1.msra.mxu0 0.0
    %731 = vmatprep.subr.mxu0 0.0
    %732 = vmatpush1.msra.mxu0 0.0
    %733 = vmatprep.subr.mxu0 0.0
    %734 = vmatpush1.msra.mxu0 0.0
    %735 = vmatprep.subr.mxu0 0.0
    %736 = vmatpush1.msra.mxu0 0.0
    %737 = vmatprep.subr.mxu0 0.0
    %738 = vmatpush1.msra.mxu0 0.0
    %739 = vmatprep.subr.mxu0 0.0
    %740 = vmatpush1.msra.mxu0 0.0
    %741 = vmatprep.subr.mxu0 0.0
    %742 = vmatpush1.msra.mxu0 0.0
    %743 = vmatprep.subr.mxu0 0.0
    %744 = vmatpush1.msra.mxu0 0.0
    %745 = vmatprep.subr.mxu0 0.0
    %746 = vmatpush1.msra.mxu0 0.0
    %747 = vmatprep.subr.mxu0 0.0
    %748 = vmatpush1.msra.mxu0 0.0
    %749 = vmatprep.subr.mxu0 0.0
    %750 = vmatpush1.msra.mxu0 0.0
    %751 = vmatprep.subr.mxu0 0.0
    %752 = vmatpush1.msra.mxu0 0.0
    %753 = vmatprep.subr.mxu0 0.0
    %754 = vmatpush1.msra.mxu0 0.0
    %755 = vmatprep.subr.mxu0 0.0
    %756 = vmatpush1.msra.mxu0 0.0
    %757 = vmatprep.subr.mxu0 0.0
    %758 = vmatpush1.msra.mxu0 0.0
    %759 = vmatprep.subr.mxu0 0.0
    %760 = vmatpush1.msra.mxu0 0.0
    %761 = vmatprep.subr.mxu0 0.0
    %762 = vmatpush1.msra.mxu0 0.0
    %763 = vmatprep.subr.mxu0 0.0
    %764 = vmatpush1.msra.mxu0 0.0
    %765 = vmatprep.subr.mxu0 0.0
    %766 = vmatpush1.msra.mxu0 0.0
    %767 = vmatprep.subr.mxu0 0.0
    %768 = vmatpush1.msra.mxu0 0.0
    %769 = vmatprep.subr.mxu0 0.0
    %770 = vmatpush1.msra.mxu0 0.0
    %771 = vmatprep.subr.mxu0 0.0
    %772 = vmatpush1.msra.mxu0 0.0
    %773 = vmatprep.subr.mxu0 0.0
    %774 = vmatpush1.msra.mxu0 0.0
    %775 = vmatprep.subr.mxu0 0.0
    %776 = vmatpush1.msra.mxu0 0.0
    %777 = vmatprep.subr.mxu0 0.0
    %778 = vmatpush1.msra.mxu0 0.0
    %779 = vmatprep.subr.mxu0 0.0
    %780 = vmatpush1.msra.mxu0 0.0
    %781 = vmatprep.mubr.f32.mxu0 0.0
    %782 = vmatmul.mubr.f32.gmra.mrb[0].mxu0 %v715
    %v783 = vpop.f32.mrb[0].mxu0
    %v784 = vadd.f32 0.0, %v783
    %v785 = vpop.f32.mrb[0].mxu0
    %v786 = vadd.f32 0.0, %v785
    %787 = vdwg.mxu0
    %v788 = vsel %vm189, %v784, %v786
    %v790 = vrot.slane %v169, 2
    %v792 = vrot.slane %v165, 2
    %v794 = vsel %vm269, %v790, %v792
    %v795 = vadd.f32 %v794, %v788
    %v796 = vmul.f32 %v795, %v186
    %v797 = vtanh.pop %v796
    %v798 = vadd.f32 %v797, 1.0
    %v799 = vmul.f32 %v798, 0.5
    %v800 = vsel %vm185, %v797, %v799
    %v801 = vmul.f32 %v800, %v705
    %803 = vrot.lane.b32.xlu0 %v800, 64
    %v804 = vpop.permute.xlu0 %803
    %v806 = vmul.f32 %v800, %v804
    %808 = vrot.lane.b32.xlu0 %v806, 32
    %v809 = vpop.permute.xlu0 %808
    %v811 = vadd.f32 %v801, %v809
    %v812 = vtanh.pop %v811
    %814 = vrot.lane.b32.xlu0 %v812, 64
    %v815 = vpop.permute.xlu0 %814
    %v817 = vmul.f32 %v800, %v815
    %819 = vrot.lane.b32.xlu0 %v817, 32
    %v820 = vpop.permute.xlu0 %819
    %v821 = vsel %vm190, %v820, 0
    %823 = vmatprep.subr.mxu0 %v174
    %824 = vmatpush1.msra.mxu0 %v173
    %825 = vmatprep.subr.mxu0 %v176
    %826 = vmatpush1.msra.mxu0 %v175
    %827 = vmatprep.subr.mxu0 %v178
    %828 = vmatpush1.msra.mxu0 %v177
    %829 = vmatprep.subr.mxu0 %v180
    %830 = vmatpush1.msra.mxu0 %v179
    %831 = vmatprep.subr.mxu0 0.0
    %832 = vmatpush1.msra.mxu0 0.0
    %833 = vmatprep.subr.mxu0 0.0
    %834 = vmatpush1.msra.mxu0 0.0
    %835 = vmatprep.subr.mxu0 0.0
    %836 = vmatpush1.msra.mxu0 0.0
    %837 = vmatprep.subr.mxu0 0.0
    %838 = vmatpush1.msra.mxu0 0.0
    %839 = vmatprep.subr.mxu0 0.0
    %840 = vmatpush1.msra.mxu0 0.0
    %841 = vmatprep.subr.mxu0 0.0
    %842 = vmatpush1.msra.mxu0 0.0
    %843 = vmatprep.subr.mxu0 0.0
    %844 = vmatpush1.msra.mxu0 0.0
    %845 = vmatprep.subr.mxu0 0.0
    %846 = vmatpush1.msra.mxu0 0.0
    %847 = vmatprep.subr.mxu0 0.0
    %848 = vmatpush1.msra.mxu0 0.0
    %849 = vmatprep.subr.mxu0 0.0
    %850 = vmatpush1.msra.mxu0 0.0
    %851 = vmatprep.subr.mxu0 0.0
    %852 = vmatpush1.msra.mxu0 0.0
    %853 = vmatprep.subr.mxu0 0.0
    %854 = vmatpush1.msra.mxu0 0.0
    %855 = vmatprep.subr.mxu0 0.0
    %856 = vmatpush1.msra.mxu0 0.0
    %857 = vmatprep.subr.mxu0 0.0
    %858 = vmatpush1.msra.mxu0 0.0
    %859 = vmatprep.subr.mxu0 0.0
    %860 = vmatpush1.msra.mxu0 0.0
    %861 = vmatprep.subr.mxu0 0.0
    %862 = vmatpush1.msra.mxu0 0.0
    %863 = vmatprep.subr.mxu0 0.0
    %864 = vmatpush1.msra.mxu0 0.0
    %865 = vmatprep.subr.mxu0 0.0
    %866 = vmatpush1.msra.mxu0 0.0
    %867 = vmatprep.subr.mxu0 0.0
    %868 = vmatpush1.msra.mxu0 0.0
    %869 = vmatprep.subr.mxu0 0.0
    %870 = vmatpush1.msra.mxu0 0.0
    %871 = vmatprep.subr.mxu0 0.0
    %872 = vmatpush1.msra.mxu0 0.0
    %873 = vmatprep.subr.mxu0 0.0
    %874 = vmatpush1.msra.mxu0 0.0
    %875 = vmatprep.subr.mxu0 0.0
    %876 = vmatpush1.msra.mxu0 0.0
    %877 = vmatprep.subr.mxu0 0.0
    %878 = vmatpush1.msra.mxu0 0.0
    %879 = vmatprep.subr.mxu0 0.0
    %880 = vmatpush1.msra.mxu0 0.0
    %881 = vmatprep.subr.mxu0 0.0
    %882 = vmatpush1.msra.mxu0 0.0
    %883 = vmatprep.subr.mxu0 0.0
    %884 = vmatpush1.msra.mxu0 0.0
    %885 = vmatprep.subr.mxu0 0.0
    %886 = vmatpush1.msra.mxu0 0.0
    %887 = vmatprep.mubr.f32.mxu0 0.0
    %888 = vmatmul.mubr.f32.gmra.mrb[0].mxu0 %v821
    %v889 = vpop.f32.mrb[0].mxu0
    %v890 = vadd.f32 0.0, %v889
    %v891 = vpop.f32.mrb[0].mxu0
    %v892 = vadd.f32 0.0, %v891
    %893 = vdwg.mxu0
    %v894 = vsel %vm189, %v890, %v892
    %v895 = vrot.slane %v169, 4
    %v897 = vsel %vm269, %v895, %v165
    %v898 = vadd.f32 %v897, %v894
    %v899 = vmul.f32 %v898, %v186
    %v900 = vtanh.pop %v899
    %v901 = vadd.f32 %v900, 1.0
    %v902 = vmul.f32 %v901, 0.5
    %v903 = vsel %vm185, %v900, %v902
    %v904 = vmul.f32 %v903, %v811
    %906 = vrot.lane.b32.xlu0 %v903, 64
    %v907 = vpop.permute.xlu0 %906
    %v909 = vmul.f32 %v903, %v907
    %911 = vrot.lane.b32.xlu0 %v909, 32
    %v912 = vpop.permute.xlu0 %911
    %v914 = vadd.f32 %v904, %v912
    %v915 = vtanh.pop %v914
    %917 = vrot.lane.b32.xlu0 %v915, 64
    %v918 = vpop.permute.xlu0 %917
    %v920 = vmul.f32 %v903, %v918
    %922 = vrot.lane.b32.xlu0 %v920, 32
    %v923 = vpop.permute.xlu0 %922
    %v924 = vsel %vm190, %v923, 0
    %926 = vmatprep.subr.mxu0 %v174
    %927 = vmatpush1.msra.mxu0 %v173
    %928 = vmatprep.subr.mxu0 %v176
    %929 = vmatpush1.msra.mxu0 %v175
    %930 = vmatprep.subr.mxu0 %v178
    %931 = vmatpush1.msra.mxu0 %v177
    %932 = vmatprep.subr.mxu0 %v180
    %933 = vmatpush1.msra.mxu0 %v179
    %934 = vmatprep.subr.mxu0 0.0
    %935 = vmatpush1.msra.mxu0 0.0
    %936 = vmatprep.subr.mxu0 0.0
    %937 = vmatpush1.msra.mxu0 0.0
    %938 = vmatprep.subr.mxu0 0.0
    %939 = vmatpush1.msra.mxu0 0.0
    %940 = vmatprep.subr.mxu0 0.0
    %941 = vmatpush1.msra.mxu0 0.0
    %942 = vmatprep.subr.mxu0 0.0
    %943 = vmatpush1.msra.mxu0 0.0
    %944 = vmatprep.subr.mxu0 0.0
    %945 = vmatpush1.msra.mxu0 0.0
    %946 = vmatprep.subr.mxu0 0.0
    %947 = vmatpush1.msra.mxu0 0.0
    %948 = vmatprep.subr.mxu0 0.0
    %949 = vmatpush1.msra.mxu0 0.0
    %950 = vmatprep.subr.mxu0 0.0
    %951 = vmatpush1.msra.mxu0 0.0
    %952 = vmatprep.subr.mxu0 0.0
    %953 = vmatpush1.msra.mxu0 0.0
    %954 = vmatprep.subr.mxu0 0.0
    %955 = vmatpush1.msra.mxu0 0.0
    %956 = vmatprep.subr.mxu0 0.0
    %957 = vmatpush1.msra.mxu0 0.0
    %958 = vmatprep.subr.mxu0 0.0
    %959 = vmatpush1.msra.mxu0 0.0
    %960 = vmatprep.subr.mxu0 0.0
    %961 = vmatpush1.msra.mxu0 0.0
    %962 = vmatprep.subr.mxu0 0.0
    %963 = vmatpush1.msra.mxu0 0.0
    %964 = vmatprep.subr.mxu0 0.0
    %965 = vmatpush1.msra.mxu0 0.0
    %966 = vmatprep.subr.mxu0 0.0
    %967 = vmatpush1.msra.mxu0 0.0
    %968 = vmatprep.subr.mxu0 0.0
    %969 = vmatpush1.msra.mxu0 0.0
    %970 = vmatprep.subr.mxu0 0.0
    %971 = vmatpush1.msra.mxu0 0.0
    %972 = vmatprep.subr.mxu0 0.0
    %973 = vmatpush1.msra.mxu0 0.0
    %974 = vmatprep.subr.mxu0 0.0
    %975 = vmatpush1.msra.mxu0 0.0
    %976 = vmatprep.subr.mxu0 0.0
    %977 = vmatpush1.msra.mxu0 0.0
    %978 = vmatprep.subr.mxu0 0.0
    %979 = vmatpush1.msra.mxu0 0.0
    %980 = vmatprep.subr.mxu0 0.0
    %981 = vmatpush1.msra.mxu0 0.0
    %982 = vmatprep.subr.mxu0 0.0
    %983 = vmatpush1.msra.mxu0 0.0
    %984 = vmatprep.subr.mxu0 0.0
    %985 = vmatpush1.msra.mxu0 0.0
    %986 = vmatprep.subr.mxu0 0.0
    %987 = vmatpush1.msra.mxu0 0.0
    %988 = vmatprep.subr.mxu0 0.0
    %989 = vmatpush1.msra.mxu0 0.0
    %990 = vmatprep.mubr.f32.mxu0 0.0
    %991 = vmatmul.mubr.f32.gmra.mrb[0].mxu0 %v924
    %v992 = vpop.f32.mrb[0].mxu0
    %v993 = vadd.f32 0.0, %v992
    %v994 = vpop.f32.mrb[0].mxu0
    %v995 = vadd.f32 0.0, %v994
    %996 = vdwg.mxu0
    %v997 = vsel %vm189, %v993, %v995
    %v998 = vrot.slane %v169, 6
    %v1000 = vrot.slane %v165, 6
    %v1002 = vsel %vm269, %v998, %v1000
    %v1003 = vadd.f32 %v1002, %v997
    %v1004 = vmul.f32 %v1003, %v186
    %v1005 = vtanh.pop %v1004
    %v1006 = vadd.f32 %v1005, 1.0
    %v1007 = vmul.f32 %v1006, 0.5
    %v1008 = vsel %vm185, %v1005, %v1007
    %v1009 = vmul.f32 %v1008, %v914
    %1011 = vrot.lane.b32.xlu0 %v1008, 64
    %v1012 = vpop.permute.xlu0 %1011
    %v1014 = vmul.f32 %v1008, %v1012
    %1016 = vrot.lane.b32.xlu0 %v1014, 32
    %v1017 = vpop.permute.xlu0 %1016
    %v1019 = vadd.f32 %v1009, %v1017
    %v1020 = vtanh.pop %v1019
    %1022 = vrot.lane.b32.xlu0 %v1020, 64
    %v1023 = vpop.permute.xlu0 %1022
    %v1025 = vmul.f32 %v1008, %v1023
    %v1028 = vrot.slane %v1025, 2
    %1029 = vrot.lane.b32.xlu0 %v1028, 64
    %v1030 = vpop.permute.xlu0 %1029
    %v1032 = vsel %vm190, %v296, %v1030
    %v1034 = vrot.slane %v920, 2
    %1035 = vrot.lane.b32.xlu0 %v1034, 64
    %v1036 = vpop.permute.xlu0 %1035
    %v1038 = vsel %vm190, %v402, %v1036
    %v1040 = vrot.slane %v817, 2
    %1041 = vrot.lane.b32.xlu0 %v1040, 64
    %v1042 = vpop.permute.xlu0 %1041
    %v1044 = vsel %vm190, %v505, %v1042
    %v1046 = vrot.slane %v711, 2
    %1047 = vrot.lane.b32.xlu0 %v1046, 64
    %v1048 = vpop.permute.xlu0 %1047
    %v1050 = vsel %vm190, %v610, %v1048
    %v1052 = vrot.slane %v607, 2
    %1053 = vrot.lane.b32.xlu0 %v1052, 64
    %v1054 = vpop.permute.xlu0 %1053
    %v1056 = vsel %vm190, %v714, %v1054
    %v1058 = vrot.slane %v502, 2
    %1059 = vrot.lane.b32.xlu0 %v1058, 64
    %v1060 = vpop.permute.xlu0 %1059
    %v1062 = vsel %vm190, %v820, %v1060
    %v1064 = vrot.slane %v399, 2
    %1065 = vrot.lane.b32.xlu0 %v1064, 64
    %v1066 = vpop.permute.xlu0 %1065
    %v1068 = vsel %vm190, %v923, %v1066
    %1069 = vrot.lane.b32.xlu0 %v1025, 32
    %v1070 = vpop.permute.xlu0 %1069
    %v1072 = vrot.slane %v293, 2
    %1073 = vrot.lane.b32.xlu0 %v1072, 64
    %v1074 = vpop.permute.xlu0 %1073
    %v1076 = vsel %vm190, %v1070, %v1074
    %v1078 = vrot.slane %v1038, 6
    %v1081 = vrot.slane %v1044, 4
    %v1084 = vrot.slane %v1050, 2
    %v1087 = vrot.slane %v1062, 6
    %v1090 = vrot.slane %v1068, 4
    %v1093 = vrot.slane %v1076, 2
    %v1095 = vsel %vm269, %v1032, %v1078
    %vm1096 = vcmask 1043456
    %v1097 = vsel %vm1096, %v1095, %v1081
    %vm1098 = vcmask 1045504
    %v1099 = vsel %vm1098, %v1097, %v1084
    %v1100 = vsel %vm269, %v1056, %v1087
    %v1101 = vsel %vm1096, %v1100, %v1090
    %v1102 = vsel %vm1098, %v1101, %v1093
    %v1103 = vld [vmem:[#allocation6] sm:$0xff]
    %v1104 = vld [vmem:[#allocation6 + $0x8] sm:$0xff]
    %v1105 = vld [vmem:[#allocation6 + $0x10] sm:$0xff]
    %v1106 = vld [vmem:[#allocation6 + $0x18] sm:$0xff]
    %v1107 = vld [vmem:[#allocation6 + $0x20] sm:$0xff]
    %v1108 = vld [vmem:[#allocation6 + $0x28] sm:$0xff]
    %v1109 = vld [vmem:[#allocation6 + $0x30] sm:$0xff]
    %v1110 = vld [vmem:[#allocation6 + $0x38] sm:$0xff]
    %vm1111 = vcmask 523264
    %v1113 = vsel %vm1111, %v1099, 0
    %v1116 = vsel %vm1111, %v1102, 0
    %1118 = vmatprep.subr.mxu0 0.0
    %1119 = vmatpush1.msra.mxu0 %v1103
    %1120 = vmatprep.subr.mxu0 0.0
    %1121 = vmatpush1.msra.mxu0 %v1104
    %1122 = vmatprep.subr.mxu0 0.0
    %1123 = vmatpush1.msra.mxu0 %v1105
    %1124 = vmatprep.subr.mxu0 0.0
    %1125 = vmatpush1.msra.mxu0 %v1106
    %1126 = vmatprep.subr.mxu0 0.0
    %1127 = vmatpush1.msra.mxu0 %v1107
    %1128 = vmatprep.subr.mxu0 0.0
    %1129 = vmatpush1.msra.mxu0 %v1108
    %1130 = vmatprep.subr.mxu0 0.0
    %1131 = vmatpush1.msra.mxu0 %v1109
    %1132 = vmatprep.subr.mxu0 0.0
    %1133 = vmatpush1.msra.mxu0 %v1110
    %1134 = vmatprep.subr.mxu0 0.0
    %1135 = vmatpush1.msra.mxu0 0.0
    %1136 = vmatprep.subr.mxu0 0.0
    %1137 = vmatpush1.msra.mxu0 0.0
    %1138 = vmatprep.subr.mxu0 0.0
    %1139 = vmatpush1.msra.mxu0 0.0
    %1140 = vmatprep.subr.mxu0 0.0
    %1141 = vmatpush1.msra.mxu0 0.0
    %1142 = vmatprep.subr.mxu0 0.0
    %1143 = vmatpush1.msra.mxu0 0.0
    %1144 = vmatprep.subr.mxu0 0.0
    %1145 = vmatpush1.msra.mxu0 0.0
    %1146 = vmatprep.subr.mxu0 0.0
    %1147 = vmatpush1.msra.mxu0 0.0
    %1148 = vmatprep.subr.mxu0 0.0
    %1149 = vmatpush1.msra.mxu0 0.0
    %1150 = vmatprep.subr.mxu0 0.0
    %1151 = vmatpush1.msra.mxu0 0.0
    %1152 = vmatprep.subr.mxu0 0.0
    %1153 = vmatpush1.msra.mxu0 0.0
    %1154 = vmatprep.subr.mxu0 0.0
    %1155 = vmatpush1.msra.mxu0 0.0
    %1156 = vmatprep.subr.mxu0 0.0
    %1157 = vmatpush1.msra.mxu0 0.0
    %1158 = vmatprep.subr.mxu0 0.0
    %1159 = vmatpush1.msra.mxu0 0.0
    %1160 = vmatprep.subr.mxu0 0.0
    %1161 = vmatpush1.msra.mxu0 0.0
    %1162 = vmatprep.subr.mxu0 0.0
    %1163 = vmatpush1.msra.mxu0 0.0
    %1164 = vmatprep.subr.mxu0 0.0
    %1165 = vmatpush1.msra.mxu0 0.0
    %1166 = vmatprep.subr.mxu0 0.0
    %1167 = vmatpush1.msra.mxu0 0.0
    %1168 = vmatprep.subr.mxu0 0.0
    %1169 = vmatpush1.msra.mxu0 0.0
    %1170 = vmatprep.subr.mxu0 0.0
    %1171 = vmatpush1.msra.mxu0 0.0
    %1172 = vmatprep.subr.mxu0 0.0
    %1173 = vmatpush1.msra.mxu0 0.0
    %1174 = vmatprep.subr.mxu0 0.0
    %1175 = vmatpush1.msra.mxu0 0.0
    %1176 = vmatprep.subr.mxu0 0.0
    %1177 = vmatpush1.msra.mxu0 0.0
    %1178 = vmatprep.subr.mxu0 0.0
    %1179 = vmatpush1.msra.mxu0 0.0
    %1180 = vmatprep.subr.mxu0 0.0
    %1181 = vmatpush1.msra.mxu0 0.0
    %1182 = vmatprep.mubr.f32.mxu0 0.0
    %1183 = vmatmul.mubr.f32.gmra.mrb[0].mxu0 %v1113
    %v1184 = vpop.f32.mrb[0].mxu0
    %v1185 = vadd.f32 0.0, %v1184
    %v1186 = vpop.f32.mrb[0].mxu0
    %1187 = vmatprep.mubr.f32.mxu0 0.0
    %1188 = vmatmul.mubr.f32.gmra.mrb[0].mxu0 %v1116
    %v1189 = vpop.f32.mrb[0].mxu0
    %v1190 = vadd.f32 0.0, %v1189
    %v1191 = vpop.f32.mrb[0].mxu0
    %1192 = vdwg.mxu0
    %s1193 = scalar_lea.vmem [#allocation6], 64
    %v1194 = vld [vmem:[%s1193] sm:$0xff]
    %v1195 = vld [vmem:[%s1193 + $0x8] sm:$0xff]
    %v1196 = vld [vmem:[%s1193 + $0x10] sm:$0xff]
    %v1197 = vld [vmem:[%s1193 + $0x18] sm:$0xff]
    %v1198 = vld [vmem:[%s1193 + $0x20] sm:$0xff]
    %v1199 = vld [vmem:[%s1193 + $0x28] sm:$0xff]
    %v1200 = vld [vmem:[%s1193 + $0x30] sm:$0xff]
    %v1201 = vld [vmem:[%s1193 + $0x38] sm:$0xff]
    %s1202 = scalar_lea.vmem [#allocation6], 128
    %v1203 = vld [vmem:[%s1202] sm:$0xff]
    %v1204 = vld [vmem:[%s1202 + $0x8] sm:$0xff]
    %v1205 = vld [vmem:[%s1202 + $0x10] sm:$0xff]
    %v1206 = vld [vmem:[%s1202 + $0x18] sm:$0xff]
    %v1207 = vld [vmem:[%s1202 + $0x20] sm:$0xff]
    %v1208 = vld [vmem:[%s1202 + $0x28] sm:$0xff]
    %v1209 = vld [vmem:[%s1202 + $0x30] sm:$0xff]
    %v1210 = vld [vmem:[%s1202 + $0x38] sm:$0xff]
    %1211 = vmatprep.subr.mxu0 0.0
    %1212 = vmatpush1.msra.mxu0 %v1203
    %1213 = vmatprep.subr.mxu0 0.0
    %1214 = vmatpush1.msra.mxu0 %v1204
    %1215 = vmatprep.subr.mxu0 0.0
    %1216 = vmatpush1.msra.mxu0 %v1205
    %1217 = vmatprep.subr.mxu0 0.0
    %1218 = vmatpush1.msra.mxu0 %v1206
    %1219 = vmatprep.subr.mxu0 0.0
    %1220 = vmatpush1.msra.mxu0 %v1207
    %1221 = vmatprep.subr.mxu0 0.0
    %1222 = vmatpush1.msra.mxu0 %v1208
    %1223 = vmatprep.subr.mxu0 0.0
    %1224 = vmatpush1.msra.mxu0 %v1209
    %1225 = vmatprep.subr.mxu0 0.0
    %1226 = vmatpush1.msra.mxu0 %v1210
    %1227 = vmatprep.subr.mxu0 0.0
    %1228 = vmatpush1.msra.mxu0 0.0
    %1229 = vmatprep.subr.mxu0 0.0
    %1230 = vmatpush1.msra.mxu0 0.0
    %1231 = vmatprep.subr.mxu0 0.0
    %1232 = vmatpush1.msra.mxu0 0.0
    %1233 = vmatprep.subr.mxu0 0.0
    %1234 = vmatpush1.msra.mxu0 0.0
    %1235 = vmatprep.subr.mxu0 0.0
    %1236 = vmatpush1.msra.mxu0 0.0
    %1237 = vmatprep.subr.mxu0 0.0
    %1238 = vmatpush1.msra.mxu0 0.0
    %1239 = vmatprep.subr.mxu0 0.0
    %1240 = vmatpush1.msra.mxu0 0.0
    %1241 = vmatprep.subr.mxu0 0.0
    %1242 = vmatpush1.msra.mxu0 0.0
    %1243 = vmatprep.subr.mxu0 0.0
    %1244 = vmatpush1.msra.mxu0 0.0
    %1245 = vmatprep.subr.mxu0 0.0
    %1246 = vmatpush1.msra.mxu0 0.0
    %1247 = vmatprep.subr.mxu0 0.0
    %1248 = vmatpush1.msra.mxu0 0.0
    %1249 = vmatprep.subr.mxu0 0.0
    %1250 = vmatpush1.msra.mxu0 0.0
    %1251 = vmatprep.subr.mxu0 0.0
    %1252 = vmatpush1.msra.mxu0 0.0
    %1253 = vmatprep.subr.mxu0 0.0
    %1254 = vmatpush1.msra.mxu0 0.0
    %1255 = vmatprep.subr.mxu0 0.0
    %1256 = vmatpush1.msra.mxu0 0.0
    %1257 = vmatprep.subr.mxu0 0.0
    %1258 = vmatpush1.msra.mxu0 0.0
    %1259 = vmatprep.subr.mxu0 0.0
    %1260 = vmatpush1.msra.mxu0 0.0
    %1261 = vmatprep.subr.mxu0 0.0
    %1262 = vmatpush1.msra.mxu0 0.0
    %1263 = vmatprep.subr.mxu0 0.0
    %1264 = vmatpush1.msra.mxu0 0.0
    %1265 = vmatprep.subr.mxu0 0.0
    %1266 = vmatpush1.msra.mxu0 0.0
    %1267 = vmatprep.subr.mxu0 0.0
    %1268 = vmatpush1.msra.mxu0 0.0
    %1269 = vmatprep.subr.mxu0 0.0
    %1270 = vmatpush1.msra.mxu0 0.0
    %1271 = vmatprep.subr.mxu0 0.0
    %1272 = vmatpush1.msra.mxu0 0.0
    %1273 = vmatprep.subr.mxu0 0.0
    %1274 = vmatpush1.msra.mxu0 0.0
    %1275 = vmatprep.mubr.f32.mxu0 0.0
    %1276 = vmatmul.mubr.f32.gmra.mrb[0].mxu0 %v1113
    %v1277 = vpop.f32.mrb[0].mxu0
    %v1278 = vadd.f32 0.0, %v1277
    %v1279 = vpop.f32.mrb[0].mxu0
    %1280 = vmatprep.mubr.f32.mxu0 0.0
    %1281 = vmatmul.mubr.f32.gmra.mrb[0].mxu0 %v1116
    %v1282 = vpop.f32.mrb[0].mxu0
    %v1283 = vadd.f32 0.0, %v1282
    %v1284 = vpop.f32.mrb[0].mxu0
    %1285 = vdwg.mxu0
    %v1288 = vrot.slane %v1185, 6
    %v1289 = vrot.slane %v1190, 6
    %v1290 = vsel %vm269, %v1288, %v1289
    %v1293 = vsel %vm269, 0.0, %v1288
    %v1296 = vrot.slane %v1278, 2
    %v1297 = vrot.slane %v1283, 2
    %v1298 = vsel %vm1098, %v1296, %v1297
    %v1301 = vsel %vm1098, %v1297, 0.0
    %1302 = vmatprep.subr.mxu0 0.0
    %1303 = vmatpush1.msra.mxu0 %v1194
    %1304 = vmatprep.subr.mxu0 0.0
    %1305 = vmatpush1.msra.mxu0 %v1195
    %1306 = vmatprep.subr.mxu0 0.0
    %1307 = vmatpush1.msra.mxu0 %v1196
    %1308 = vmatprep.subr.mxu0 0.0
    %1309 = vmatpush1.msra.mxu0 %v1197
    %1310 = vmatprep.subr.mxu0 0.0
    %1311 = vmatpush1.msra.mxu0 %v1198
    %1312 = vmatprep.subr.mxu0 0.0
    %1313 = vmatpush1.msra.mxu0 %v1199
    %1314 = vmatprep.subr.mxu0 0.0
    %1315 = vmatpush1.msra.mxu0 %v1200
    %1316 = vmatprep.subr.mxu0 0.0
    %1317 = vmatpush1.msra.mxu0 %v1201
    %1318 = vmatprep.subr.mxu0 0.0
    %1319 = vmatpush1.msra.mxu0 0.0
    %1320 = vmatprep.subr.mxu0 0.0
    %1321 = vmatpush1.msra.mxu0 0.0
    %1322 = vmatprep.subr.mxu0 0.0
    %1323 = vmatpush1.msra.mxu0 0.0
    %1324 = vmatprep.subr.mxu0 0.0
    %1325 = vmatpush1.msra.mxu0 0.0
    %1326 = vmatprep.subr.mxu0 0.0
    %1327 = vmatpush1.msra.mxu0 0.0
    %1328 = vmatprep.subr.mxu0 0.0
    %1329 = vmatpush1.msra.mxu0 0.0
    %1330 = vmatprep.subr.mxu0 0.0
    %1331 = vmatpush1.msra.mxu0 0.0
    %1332 = vmatprep.subr.mxu0 0.0
    %1333 = vmatpush1.msra.mxu0 0.0
    %1334 = vmatprep.subr.mxu0 0.0
    %1335 = vmatpush1.msra.mxu0 0.0
    %1336 = vmatprep.subr.mxu0 0.0
    %1337 = vmatpush1.msra.mxu0 0.0
    %1338 = vmatprep.subr.mxu0 0.0
    %1339 = vmatpush1.msra.mxu0 0.0
    %1340 = vmatprep.subr.mxu0 0.0
    %1341 = vmatpush1.msra.mxu0 0.0
    %1342 = vmatprep.subr.mxu0 0.0
    %1343 = vmatpush1.msra.mxu0 0.0
    %1344 = vmatprep.subr.mxu0 0.0
    %1345 = vmatpush1.msra.mxu0 0.0
    %1346 = vmatprep.subr.mxu0 0.0
    %1347 = vmatpush1.msra.mxu0 0.0
    %1348 = vmatprep.subr.mxu0 0.0
    %1349 = vmatpush1.msra.mxu0 0.0
    %1350 = vmatprep.subr.mxu0 0.0
    %1351 = vmatpush1.msra.mxu0 0.0
    %1352 = vmatprep.subr.mxu0 0.0
    %1353 = vmatpush1.msra.mxu0 0.0
    %1354 = vmatprep.subr.mxu0 0.0
    %1355 = vmatpush1.msra.mxu0 0.0
    %1356 = vmatprep.subr.mxu0 0.0
    %1357 = vmatpush1.msra.mxu0 0.0
    %1358 = vmatprep.subr.mxu0 0.0
    %1359 = vmatpush1.msra.mxu0 0.0
    %1360 = vmatprep.subr.mxu0 0.0
    %1361 = vmatpush1.msra.mxu0 0.0
    %1362 = vmatprep.subr.mxu0 0.0
    %1363 = vmatpush1.msra.mxu0 0.0
    %1364 = vmatprep.subr.mxu0 0.0
    %1365 = vmatpush1.msra.mxu0 0.0
    %1366 = vmatprep.mubr.f32.mxu0 0.0
    %1367 = vmatmul.mubr.f32.gmra.mrb[0].mxu0 %v1113
    %v1368 = vpop.f32.mrb[0].mxu0
    %v1369 = vadd.f32 %v1293, %v1368
    %v1370 = vpop.f32.mrb[0].mxu0
    %1371 = vmatprep.mubr.f32.mxu0 0.0
    %1372 = vmatmul.mubr.f32.gmra.mrb[0].mxu0 %v1116
    %v1373 = vpop.f32.mrb[0].mxu0
    %v1374 = vadd.f32 %v1290, %v1373
    %v1375 = vpop.f32.mrb[0].mxu0
    %1376 = vdwg.mxu0
    %v1377 = vadd.f32 %v1369, %v1298
    %v1378 = vadd.f32 %v1374, %v1301
    %v1379 = vld [vmem:[%s5] sm:$0x1]
    %v1381 = vlaneseq
    %v1382 = vshrl.u32 %v1381, 7
    %v1383 = vsub.s32 0, %v1382
    %v1384 = vrot.slane %v1379, %v1383
    %v1386 = vadd.f32 %v1377, %v1384
    %v1387 = vadd.f32 %v1378, %v1384
    %v1388 = vld [vmem:[%s6] sm:$0xff]
    %v1389 = vld [vmem:[%s6 + $0x8] sm:$0xff]
    %v1390 = vld [vmem:[%s6 + $0x10] sm:$0xff]
    %v1391 = vld [vmem:[%s6 + $0x18] sm:$0xff]
    %v1392 = vld [vmem:[%s6 + $0x20] sm:$0xff]
    %v1393 = vld [vmem:[%s6 + $0x28] sm:$0xff]
    %v1394 = vld [vmem:[%s6 + $0x30] sm:$0xff]
    %v1395 = vld [vmem:[%s6 + $0x38] sm:$0xff]
    %v1396 = vld [vmem:[%s7] sm:$0x1]
    %v1398 = vlaneseq
    %v1399 = vshrl.u32 %v1398, 7
    %v1400 = vsub.s32 0, %v1399
    %v1401 = vrot.slane %v1396, %v1400
    %v1404 = vsel %vm1111, %v1386, 0
    %v1407 = vsel %vm1111, %v1387, 0
    %1409 = vmatprep.subr.mxu0 0.0
    %1410 = vmatpush1.msra.mxu0 %v1388
    %1411 = vmatprep.subr.mxu0 0.0
    %1412 = vmatpush1.msra.mxu0 %v1389
    %1413 = vmatprep.subr.mxu0 0.0
    %1414 = vmatpush1.msra.mxu0 %v1390
    %1415 = vmatprep.subr.mxu0 0.0
    %1416 = vmatpush1.msra.mxu0 %v1391
    %1417 = vmatprep.subr.mxu0 0.0
    %1418 = vmatpush1.msra.mxu0 %v1392
    %1419 = vmatprep.subr.mxu0 0.0
    %1420 = vmatpush1.msra.mxu0 %v1393
    %1421 = vmatprep.subr.mxu0 0.0
    %1422 = vmatpush1.msra.mxu0 %v1394
    %1423 = vmatprep.subr.mxu0 0.0
    %1424 = vmatpush1.msra.mxu0 %v1395
    %1425 = vmatprep.subr.mxu0 0.0
    %1426 = vmatpush1.msra.mxu0 0.0
    %1427 = vmatprep.subr.mxu0 0.0
    %1428 = vmatpush1.msra.mxu0 0.0
    %1429 = vmatprep.subr.mxu0 0.0
    %1430 = vmatpush1.msra.mxu0 0.0
    %1431 = vmatprep.subr.mxu0 0.0
    %1432 = vmatpush1.msra.mxu0 0.0
    %1433 = vmatprep.subr.mxu0 0.0
    %1434 = vmatpush1.msra.mxu0 0.0
    %1435 = vmatprep.subr.mxu0 0.0
    %1436 = vmatpush1.msra.mxu0 0.0
    %1437 = vmatprep.subr.mxu0 0.0
    %1438 = vmatpush1.msra.mxu0 0.0
    %1439 = vmatprep.subr.mxu0 0.0
    %1440 = vmatpush1.msra.mxu0 0.0
    %1441 = vmatprep.subr.mxu0 0.0
    %1442 = vmatpush1.msra.mxu0 0.0
    %1443 = vmatprep.subr.mxu0 0.0
    %1444 = vmatpush1.msra.mxu0 0.0
    %1445 = vmatprep.subr.mxu0 0.0
    %1446 = vmatpush1.msra.mxu0 0.0
    %1447 = vmatprep.subr.mxu0 0.0
    %1448 = vmatpush1.msra.mxu0 0.0
    %1449 = vmatprep.subr.mxu0 0.0
    %1450 = vmatpush1.msra.mxu0 0.0
    %1451 = vmatprep.subr.mxu0 0.0
    %1452 = vmatpush1.msra.mxu0 0.0
    %1453 = vmatprep.subr.mxu0 0.0
    %1454 = vmatpush1.msra.mxu0 0.0
    %1455 = vmatprep.subr.mxu0 0.0
    %1456 = vmatpush1.msra.mxu0 0.0
    %1457 = vmatprep.subr.mxu0 0.0
    %1458 = vmatpush1.msra.mxu0 0.0
    %1459 = vmatprep.subr.mxu0 0.0
    %1460 = vmatpush1.msra.mxu0 0.0
    %1461 = vmatprep.subr.mxu0 0.0
    %1462 = vmatpush1.msra.mxu0 0.0
    %1463 = vmatprep.subr.mxu0 0.0
    %1464 = vmatpush1.msra.mxu0 0.0
    %1465 = vmatprep.subr.mxu0 0.0
    %1466 = vmatpush1.msra.mxu0 0.0
    %1467 = vmatprep.subr.mxu0 0.0
    %1468 = vmatpush1.msra.mxu0 0.0
    %1469 = vmatprep.subr.mxu0 0.0
    %1470 = vmatpush1.msra.mxu0 0.0
    %1471 = vmatprep.subr.mxu0 0.0
    %1472 = vmatpush1.msra.mxu0 0.0
    %1473 = vmatprep.mubr.f32.mxu0 0.0
    %1474 = vmatmul.mubr.f32.gmra.mrb[0].mxu0 %v1404
    %v1475 = vpop.f32.mrb[0].mxu0
    %v1476 = vadd.f32 %v1401, %v1475
    %v1477 = vpop.f32.mrb[0].mxu0
    %1478 = vmatprep.mubr.f32.mxu0 0.0
    %1479 = vmatmul.mubr.f32.gmra.mrb[0].mxu0 %v1407
    %v1480 = vpop.f32.mrb[0].mxu0
    %v1481 = vadd.f32 %v1401, %v1480
    %v1482 = vpop.f32.mrb[0].mxu0
    %1483 = vdwg.mxu0
    %v1484 = vtanh.pop %v1476
    %v1485 = vtanh.pop %v1481
    %v1486 = vld [vmem:[%s8] sm:$0x1]
    %v1488 = vlaneseq
    %v1489 = vshrl.u32 %v1488, 7
    %v1490 = vsub.s32 0, %v1489
    %v1491 = vrot.slane %v1486, %v1490
    %v1493 = vmul.f32 %v1484, %v1491
    %v1494 = vmul.f32 %v1485, %v1491
    %v1495 = vsel %vm1111, %v1493, 0.0
    %1496 = vadd.xlane.f32.xlu0 %v1495
    %v1497 = vpop.xlane.xlu0 %1496
    %v1498 = vsel %vm1111, %v1494, 0.0
    %1499 = vadd.xlane.f32.xlu0 %v1498
    %v1500 = vpop.xlane.xlu0 %1499
    %v1501 = vld [vmem:[#allocation2] sm:$0x1]
    %v1503 = vlaneseq
    %v1504 = vshrl.u32 %v1503, 7
    %v1505 = vsub.s32 0, %v1504
    %v1506 = vrot.slane %v1501, %v1505
    %v1508 = vadd.f32 %v1497, %v1506
    %v1509 = vadd.f32 %v1500, %v1506
    %v1512 = vcombine.high %v1508, %v1508
    %v1514 = vunpack.c.l.s4 1983009808
    %v1515 = vunpack.c.0.s8 %v1514
    %v1516 = vlaneseq
    %v1517 = vshrl.u32 %v1516, 7
    %v1518 = vsub.s32 %v1515, %v1517
    %v1519 = vrot.slane %v1508, %v1518
    %v1521 = vunpack.c.l.s4 1983009808
    %v1522 = vunpack.c.0.s8 %v1521
    %v1523 = vlaneseq
    %v1524 = vshrl.u32 %v1523, 7
    %v1525 = vsub.s32 %v1522, %v1524
    %v1526 = vrot.slane %v1512, %v1525
    %v1527 = vcombine.high %v1519, %v1519
    %v1528 = vcombine.high %v1526, %v1526
    %v1529 = vcombine.high %v1509, %v1509
    %v1531 = vunpack.c.l.s4 1983009808
    %v1532 = vunpack.c.0.s8 %v1531
    %v1533 = vlaneseq
    %v1534 = vshrl.u32 %v1533, 7
    %v1535 = vsub.s32 %v1532, %v1534
    %v1536 = vrot.slane %v1509, %v1535
    %v1538 = vunpack.c.l.s4 1983009808
    %v1539 = vunpack.c.0.s8 %v1538
    %v1540 = vlaneseq
    %v1541 = vshrl.u32 %v1540, 7
    %v1542 = vsub.s32 %v1539, %v1541
    %v1543 = vrot.slane %v1529, %v1542
    %v1544 = vcombine.high %v1536, %v1536
    %v1545 = vcombine.high %v1543, %v1543
    %vm1554 = vcmask 1024
    %v1555 = vsel %vm1554, %v1519, -inf
    %v1556 = vsel %vm1554, %v1527, -inf
    %v1557 = vsel %vm1554, %v1526, -inf
    %v1558 = vsel %vm1554, %v1528, -inf
    %v1559 = vsel %vm1554, %v1536, -inf
    %v1560 = vmax.f32 %v1555, %v1559
    %v1561 = vsel %vm1554, %v1544, -inf
    %v1562 = vmax.f32 %v1556, %v1561
    %v1563 = vsel %vm1554, %v1543, -inf
    %v1564 = vmax.f32 %v1557, %v1563
    %v1565 = vsel %vm1554, %v1545, -inf
    %v1566 = vmax.f32 %v1558, %v1565
    %v1567 = vmax.f32 %v1560, %v1562
    %v1568 = vmax.f32 %v1564, %v1566
    %v1569 = vmax.f32 %v1567, %v1568
    %v1570 = vsub.f32 %v1519, %v1569
    %v1571 = vsub.f32 %v1527, %v1569
    %v1572 = vsub.f32 %v1526, %v1569
    %v1573 = vsub.f32 %v1528, %v1569
    %v1574 = vsub.f32 %v1536, %v1569
    %v1575 = vsub.f32 %v1544, %v1569
    %v1576 = vsub.f32 %v1543, %v1569
    %v1577 = vsub.f32 %v1545, %v1569
    %v1578 = vmul.f32 %v1570, 1.442695
    %v1579 = vpow.pop %v1578
    %v1580 = vmul.f32 %v1571, 1.442695
    %v1581 = vpow.pop %v1580
    %v1582 = vmul.f32 %v1572, 1.442695
    %v1583 = vpow.pop %v1582
    %v1584 = vmul.f32 %v1573, 1.442695
    %v1585 = vpow.pop %v1584
    %v1586 = vmul.f32 %v1574, 1.442695
    %v1587 = vpow.pop %v1586
    %v1588 = vmul.f32 %v1575, 1.442695
    %v1589 = vpow.pop %v1588
    %v1590 = vmul.f32 %v1576, 1.442695
    %v1591 = vpow.pop %v1590
    %v1592 = vmul.f32 %v1577, 1.442695
    %v1593 = vpow.pop %v1592
    %v1594 = vsel %vm1554, %v1579, 0.0
    %v1595 = vsel %vm1554, %v1581, 0.0
    %v1596 = vadd.f32 %v1594, %v1595
    %v1597 = vsel %vm1554, %v1583, 0.0
    %v1598 = vadd.f32 %v1596, %v1597
    %v1599 = vsel %vm1554, %v1585, 0.0
    %v1600 = vadd.f32 %v1598, %v1599
    %v1601 = vsel %vm1554, %v1587, 0.0
    %v1602 = vadd.f32 %v1600, %v1601
    %v1603 = vsel %vm1554, %v1589, 0.0
    %v1604 = vadd.f32 %v1602, %v1603
    %v1605 = vsel %vm1554, %v1591, 0.0
    %v1606 = vadd.f32 %v1604, %v1605
    %v1607 = vsel %vm1554, %v1593, 0.0
    %v1608 = vadd.f32 %v1606, %v1607
    %v1609 = vrcp.pop %v1608
    %v1610 = vmul.f32 %v1579, %v1609
    %v1611 = vmul.f32 %v1581, %v1609
    %v1612 = vmul.f32 %v1583, %v1609
    %v1613 = vmul.f32 %v1585, %v1609
    %v1614 = vmul.f32 %v1587, %v1609
    %v1615 = vmul.f32 %v1589, %v1609
    %v1616 = vmul.f32 %v1591, %v1609
    %v1617 = vmul.f32 %v1593, %v1609
    %v1618 = vcombine.high %v1386, %v1386
    %v1620 = vunpack.c.l.s4 1983009808
    %v1621 = vunpack.c.0.s8 %v1620
    %v1622 = vlaneseq
    %v1623 = vshrl.u32 %v1622, 7
    %v1624 = vsub.s32 %v1621, %v1623
    %v1625 = vrot.slane %v1386, %v1624
    %v1627 = vunpack.c.l.s4 1983009808
    %v1628 = vunpack.c.0.s8 %v1627
    %v1629 = vlaneseq
    %v1630 = vshrl.u32 %v1629, 7
    %v1631 = vsub.s32 %v1628, %v1630
    %v1632 = vrot.slane %v1618, %v1631
    %v1633 = vcombine.high %v1625, %v1625
    %v1634 = vcombine.high %v1632, %v1632
    %v1635 = vcombine.high %v1387, %v1387
    %v1637 = vunpack.c.l.s4 1983009808
    %v1638 = vunpack.c.0.s8 %v1637
    %v1639 = vlaneseq
    %v1640 = vshrl.u32 %v1639, 7
    %v1641 = vsub.s32 %v1638, %v1640
    %v1642 = vrot.slane %v1387, %v1641
    %v1644 = vunpack.c.l.s4 1983009808
    %v1645 = vunpack.c.0.s8 %v1644
    %v1646 = vlaneseq
    %v1647 = vshrl.u32 %v1646, 7
    %v1648 = vsub.s32 %v1645, %v1647
    %v1649 = vrot.slane %v1635, %v1648
    %v1650 = vcombine.high %v1642, %v1642
    %v1651 = vcombine.high %v1649, %v1649
    %1661 = vset.pattern.permute.xlu0 0
    %1662 = vperm.xlu0 %1661, %v1610
    %v1663 = vpop.permute.xlu0 %1662
    %v1666 = vunpack.c.l.s4 269488144
    %v1667 = vunpack.c.0.s8 %v1666
    %v1668 = vlaneseq
    %v1669 = vshrl.u32 %v1668, 7
    %v1670 = vsub.s32 %v1667, %v1669
    %v1671 = vrot.slane %v1663, %v1670
    %1673 = vset.pattern.permute.xlu0 0
    %1674 = vperm.xlu0 %1673, %v1611
    %v1675 = vpop.permute.xlu0 %1674
    %v1678 = vunpack.c.l.s4 269488144
    %v1679 = vunpack.c.0.s8 %v1678
    %v1680 = vlaneseq
    %v1681 = vshrl.u32 %v1680, 7
    %v1682 = vsub.s32 %v1679, %v1681
    %v1683 = vrot.slane %v1675, %v1682
    %1685 = vset.pattern.permute.xlu0 0
    %1686 = vperm.xlu0 %1685, %v1612
    %v1687 = vpop.permute.xlu0 %1686
    %v1690 = vunpack.c.l.s4 269488144
    %v1691 = vunpack.c.0.s8 %v1690
    %v1692 = vlaneseq
    %v1693 = vshrl.u32 %v1692, 7
    %v1694 = vsub.s32 %v1691, %v1693
    %v1695 = vrot.slane %v1687, %v1694
    %1697 = vset.pattern.permute.xlu0 0
    %1698 = vperm.xlu0 %1697, %v1613
    %v1699 = vpop.permute.xlu0 %1698
    %v1702 = vunpack.c.l.s4 269488144
    %v1703 = vunpack.c.0.s8 %v1702
    %v1704 = vlaneseq
    %v1705 = vshrl.u32 %v1704, 7
    %v1706 = vsub.s32 %v1703, %v1705
    %v1707 = vrot.slane %v1699, %v1706
    %1709 = vset.pattern.permute.xlu0 0
    %1710 = vperm.xlu0 %1709, %v1614
    %v1711 = vpop.permute.xlu0 %1710
    %v1714 = vunpack.c.l.s4 269488144
    %v1715 = vunpack.c.0.s8 %v1714
    %v1716 = vlaneseq
    %v1717 = vshrl.u32 %v1716, 7
    %v1718 = vsub.s32 %v1715, %v1717
    %v1719 = vrot.slane %v1711, %v1718
    %1721 = vset.pattern.permute.xlu0 0
    %1722 = vperm.xlu0 %1721, %v1615
    %v1723 = vpop.permute.xlu0 %1722
    %v1726 = vunpack.c.l.s4 269488144
    %v1727 = vunpack.c.0.s8 %v1726
    %v1728 = vlaneseq
    %v1729 = vshrl.u32 %v1728, 7
    %v1730 = vsub.s32 %v1727, %v1729
    %v1731 = vrot.slane %v1723, %v1730
    %1733 = vset.pattern.permute.xlu0 0
    %1734 = vperm.xlu0 %1733, %v1616
    %v1735 = vpop.permute.xlu0 %1734
    %v1738 = vunpack.c.l.s4 269488144
    %v1739 = vunpack.c.0.s8 %v1738
    %v1740 = vlaneseq
    %v1741 = vshrl.u32 %v1740, 7
    %v1742 = vsub.s32 %v1739, %v1741
    %v1743 = vrot.slane %v1735, %v1742
    %1745 = vset.pattern.permute.xlu0 0
    %1746 = vperm.xlu0 %1745, %v1617
    %v1747 = vpop.permute.xlu0 %1746
    %v1750 = vunpack.c.l.s4 269488144
    %v1751 = vunpack.c.0.s8 %v1750
    %v1752 = vlaneseq
    %v1753 = vshrl.u32 %v1752, 7
    %v1754 = vsub.s32 %v1751, %v1753
    %v1755 = vrot.slane %v1747, %v1754
    %v1756 = vmul.f32 %v1625, %v1671
    %v1757 = vmul.f32 %v1633, %v1683
    %v1758 = vmul.f32 %v1632, %v1695
    %v1759 = vmul.f32 %v1634, %v1707
    %v1760 = vmul.f32 %v1642, %v1719
    %v1761 = vmul.f32 %v1650, %v1731
    %v1762 = vmul.f32 %v1649, %v1743
    %v1763 = vmul.f32 %v1651, %v1755
    %vm1764 = vcmask 517120
    %v1765 = vsel %vm1764, %v1756, 0.0
    %v1766 = vsel %vm1764, %v1757, 0.0
    %v1767 = vadd.f32 %v1765, %v1766
    %v1768 = vsel %vm1764, %v1758, 0.0
    %v1769 = vadd.f32 %v1767, %v1768
    %v1770 = vsel %vm1764, %v1759, 0.0
    %v1771 = vadd.f32 %v1769, %v1770
    %v1772 = vsel %vm1764, %v1760, 0.0
    %v1773 = vadd.f32 %v1771, %v1772
    %v1774 = vsel %vm1764, %v1761, 0.0
    %v1775 = vadd.f32 %v1773, %v1774
    %v1776 = vsel %vm1764, %v1762, 0.0
    %v1777 = vadd.f32 %v1775, %v1776
    %v1778 = vsel %vm1764, %v1763, 0.0
    %v1779 = vadd.f32 %v1777, %v1778
    %v1780 = vld [vmem:[%s10] sm:$0xff]
    %v1781 = vld [vmem:[%s10 + $0x8] sm:$0xff]
    %v1782 = vld [vmem:[%s10 + $0x10] sm:$0xff]
    %v1783 = vld [vmem:[%s10 + $0x18] sm:$0xff]
    %v1784 = vld [vmem:[%s10 + $0x20] sm:$0xff]
    %v1785 = vld [vmem:[%s10 + $0x28] sm:$0xff]
    %v1786 = vld [vmem:[%s10 + $0x30] sm:$0xff]
    %v1787 = vld [vmem:[%s10 + $0x38] sm:$0xff]
    %v1788 = vld [vmem:[%s12] sm:$0x1]
    %v1790 = vlaneseq
    %v1791 = vshrl.u32 %v1790, 7
    %v1792 = vsub.s32 0, %v1791
    %v1793 = vrot.slane %v1788, %v1792
    %v1796 = vsel %vm1111, %v1779, 0
    %1798 = vmatprep.subr.mxu0 0.0
    %1799 = vmatpush1.msra.mxu0 %v1780
    %1800 = vmatprep.subr.mxu0 0.0
    %1801 = vmatpush1.msra.mxu0 %v1781
    %1802 = vmatprep.subr.mxu0 0.0
    %1803 = vmatpush1.msra.mxu0 %v1782
    %1804 = vmatprep.subr.mxu0 0.0
    %1805 = vmatpush1.msra.mxu0 %v1783
    %1806 = vmatprep.subr.mxu0 0.0
    %1807 = vmatpush1.msra.mxu0 %v1784
    %1808 = vmatprep.subr.mxu0 0.0
    %1809 = vmatpush1.msra.mxu0 %v1785
    %1810 = vmatprep.subr.mxu0 0.0
    %1811 = vmatpush1.msra.mxu0 %v1786
    %1812 = vmatprep.subr.mxu0 0.0
    %1813 = vmatpush1.msra.mxu0 %v1787
    %1814 = vmatprep.subr.mxu0 0.0
    %1815 = vmatpush1.msra.mxu0 0.0
    %1816 = vmatprep.subr.mxu0 0.0
    %1817 = vmatpush1.msra.mxu0 0.0
    %1818 = vmatprep.subr.mxu0 0.0
    %1819 = vmatpush1.msra.mxu0 0.0
    %1820 = vmatprep.subr.mxu0 0.0
    %1821 = vmatpush1.msra.mxu0 0.0
    %1822 = vmatprep.subr.mxu0 0.0
    %1823 = vmatpush1.msra.mxu0 0.0
    %1824 = vmatprep.subr.mxu0 0.0
    %1825 = vmatpush1.msra.mxu0 0.0
    %1826 = vmatprep.subr.mxu0 0.0
    %1827 = vmatpush1.msra.mxu0 0.0
    %1828 = vmatprep.subr.mxu0 0.0
    %1829 = vmatpush1.msra.mxu0 0.0
    %1830 = vmatprep.subr.mxu0 0.0
    %1831 = vmatpush1.msra.mxu0 0.0
    %1832 = vmatprep.subr.mxu0 0.0
    %1833 = vmatpush1.msra.mxu0 0.0
    %1834 = vmatprep.subr.mxu0 0.0
    %1835 = vmatpush1.msra.mxu0 0.0
    %1836 = vmatprep.subr.mxu0 0.0
    %1837 = vmatpush1.msra.mxu0 0.0
    %1838 = vmatprep.subr.mxu0 0.0
    %1839 = vmatpush1.msra.mxu0 0.0
    %1840 = vmatprep.subr.mxu0 0.0
    %1841 = vmatpush1.msra.mxu0 0.0
    %1842 = vmatprep.subr.mxu0 0.0
    %1843 = vmatpush1.msra.mxu0 0.0
    %1844 = vmatprep.subr.mxu0 0.0
    %1845 = vmatpush1.msra.mxu0 0.0
    %1846 = vmatprep.subr.mxu0 0.0
    %1847 = vmatpush1.msra.mxu0 0.0
    %1848 = vmatprep.subr.mxu0 0.0
    %1849 = vmatpush1.msra.mxu0 0.0
    %1850 = vmatprep.subr.mxu0 0.0
    %1851 = vmatpush1.msra.mxu0 0.0
    %1852 = vmatprep.subr.mxu0 0.0
    %1853 = vmatpush1.msra.mxu0 0.0
    %1854 = vmatprep.subr.mxu0 0.0
    %1855 = vmatpush1.msra.mxu0 0.0
    %1856 = vmatprep.subr.mxu0 0.0
    %1857 = vmatpush1.msra.mxu0 0.0
    %1858 = vmatprep.subr.mxu0 0.0
    %1859 = vmatpush1.msra.mxu0 0.0
    %1860 = vmatprep.subr.mxu0 0.0
    %1861 = vmatpush1.msra.mxu0 0.0
    %1862 = vmatprep.mubr.f32.mxu0 0.0
    %1863 = vmatmul.mubr.f32.gmra.mrb[0].mxu0 %v1796
    %v1864 = vpop.f32.mrb[0].mxu0
    %v1865 = vadd.f32 %v1793, %v1864
    %v1866 = vpop.f32.mrb[0].mxu0
    %1867 = vdwg.mxu0
    %v1868 = vld [vmem:[%s11] sm:$0xff]
    %vm1869 = vcmp.ge.s32.totalorder %v182, 16
    %vm1870 = vcmp.lt.s32.totalorder %v182, 24
    %vm1871 = vmand %vm1869, %vm1870
    %v1872 = vsel %vm1871, 1.0, 0.5
    %v1873 = vsel %vm89, 0.0, 0
    %1875 = vmatprep.subr.mxu0 0.0
    %1876 = vmatpush1.msra.mxu0 %v1868
    %1877 = vmatprep.subr.mxu0 0.0
    %1878 = vmatpush1.msra.mxu0 0.0
    %1879 = vmatprep.subr.mxu0 0.0
    %1880 = vmatpush1.msra.mxu0 0.0
    %1881 = vmatprep.subr.mxu0 0.0
    %1882 = vmatpush1.msra.mxu0 0.0
    %1883 = vmatprep.subr.mxu0 0.0
    %1884 = vmatpush1.msra.mxu0 0.0
    %1885 = vmatprep.subr.mxu0 0.0
    %1886 = vmatpush1.msra.mxu0 0.0
    %1887 = vmatprep.subr.mxu0 0.0
    %1888 = vmatpush1.msra.mxu0 0.0
    %1889 = vmatprep.subr.mxu0 0.0
    %1890 = vmatpush1.msra.mxu0 0.0
    %1891 = vmatprep.subr.mxu0 0.0
    %1892 = vmatpush1.msra.mxu0 0.0
    %1893 = vmatprep.subr.mxu0 0.0
    %1894 = vmatpush1.msra.mxu0 0.0
    %1895 = vmatprep.subr.mxu0 0.0
    %1896 = vmatpush1.msra.mxu0 0.0
    %1897 = vmatprep.subr.mxu0 0.0
    %1898 = vmatpush1.msra.mxu0 0.0
    %1899 = vmatprep.subr.mxu0 0.0
    %1900 = vmatpush1.msra.mxu0 0.0
    %1901 = vmatprep.subr.mxu0 0.0
    %1902 = vmatpush1.msra.mxu0 0.0
    %1903 = vmatprep.subr.mxu0 0.0
    %1904 = vmatpush1.msra.mxu0 0.0
    %1905 = vmatprep.subr.mxu0 0.0
    %1906 = vmatpush1.msra.mxu0 0.0
    %1907 = vmatprep.subr.mxu0 0.0
    %1908 = vmatpush1.msra.mxu0 0.0
    %1909 = vmatprep.subr.mxu0 0.0
    %1910 = vmatpush1.msra.mxu0 0.0
    %1911 = vmatprep.subr.mxu0 0.0
    %1912 = vmatpush1.msra.mxu0 0.0
    %1913 = vmatprep.subr.mxu0 0.0
    %1914 = vmatpush1.msra.mxu0 0.0
    %1915 = vmatprep.subr.mxu0 0.0
    %1916 = vmatpush1.msra.mxu0 0.0
    %1917 = vmatprep.subr.mxu0 0.0
    %1918 = vmatpush1.msra.mxu0 0.0
    %1919 = vmatprep.subr.mxu0 0.0
    %1920 = vmatpush1.msra.mxu0 0.0
    %1921 = vmatprep.subr.mxu0 0.0
    %1922 = vmatpush1.msra.mxu0 0.0
    %1923 = vmatprep.subr.mxu0 0.0
    %1924 = vmatpush1.msra.mxu0 0.0
    %1925 = vmatprep.subr.mxu0 0.0
    %1926 = vmatpush1.msra.mxu0 0.0
    %1927 = vmatprep.subr.mxu0 0.0
    %1928 = vmatpush1.msra.mxu0 0.0
    %1929 = vmatprep.subr.mxu0 0.0
    %1930 = vmatpush1.msra.mxu0 0.0
    %1931 = vmatprep.subr.mxu0 0.0
    %1932 = vmatpush1.msra.mxu0 0.0
    %1933 = vmatprep.subr.mxu0 0.0
    %1934 = vmatpush1.msra.mxu0 0.0
    %1935 = vmatprep.subr.mxu0 0.0
    %1936 = vmatpush1.msra.mxu0 0.0
    %1937 = vmatprep.subr.mxu0 0.0
    %1938 = vmatpush1.msra.mxu0 0.0
    %1939 = vmatprep.mubr.f32.mxu0 0.0
    %1940 = vmatmul.mubr.f32.gmra.mrb[0].mxu0 %v1873
    %v1941 = vpop.f32.mrb[0].mxu0
    %v1942 = vadd.f32 0.0, %v1941
    %v1943 = vpop.f32.mrb[0].mxu0
    %1944 = vdwg.mxu0
    %v1945 = vadd.f32 %v1865, %v1942
    %v1946 = vmul.f32 %v1945, %v1872
    %v1947 = vtanh.pop %v1946
    %v1948 = vadd.f32 %v1947, 1.0
    %v1949 = vmul.f32 %v1948, 0.5
    %v1950 = vsel %vm1871, %v1947, %v1949
    %v1951 = vmul.f32 %v1950, 0.0
    %1953 = vrot.lane.b32.xlu0 %v1950, 112
    %v1954 = vpop.permute.xlu0 %1953
    %v1956 = vmul.f32 %v1950, %v1954
    %1958 = vrot.lane.b32.xlu0 %v1956, 8
    %v1959 = vpop.permute.xlu0 %1958
    %v1961 = vadd.f32 %v1951, %v1959
    %v1962 = vtanh.pop %v1961
    %1964 = vrot.lane.b32.xlu0 %v1962, 16
    %v1965 = vpop.permute.xlu0 %1964
    %v1967 = vmul.f32 %v1950, %v1965
    %1969 = vrot.lane.b32.xlu0 %v1967, 104
    %v1970 = vpop.permute.xlu0 %1969
    %v1971 = vsel %vm89, %v1970, 0
    %1973 = vmatprep.subr.mxu0 0.0
    %1974 = vmatpush1.msra.mxu0 %v1868
    %1975 = vmatprep.subr.mxu0 0.0
    %1976 = vmatpush1.msra.mxu0 0.0
    %1977 = vmatprep.subr.mxu0 0.0
    %1978 = vmatpush1.msra.mxu0 0.0
    %1979 = vmatprep.subr.mxu0 0.0
    %1980 = vmatpush1.msra.mxu0 0.0
    %1981 = vmatprep.subr.mxu0 0.0
    %1982 = vmatpush1.msra.mxu0 0.0
    %1983 = vmatprep.subr.mxu0 0.0
    %1984 = vmatpush1.msra.mxu0 0.0
    %1985 = vmatprep.subr.mxu0 0.0
    %1986 = vmatpush1.msra.mxu0 0.0
    %1987 = vmatprep.subr.mxu0 0.0
    %1988 = vmatpush1.msra.mxu0 0.0
    %1989 = vmatprep.subr.mxu0 0.0
    %1990 = vmatpush1.msra.mxu0 0.0
    %1991 = vmatprep.subr.mxu0 0.0
    %1992 = vmatpush1.msra.mxu0 0.0
    %1993 = vmatprep.subr.mxu0 0.0
    %1994 = vmatpush1.msra.mxu0 0.0
    %1995 = vmatprep.subr.mxu0 0.0
    %1996 = vmatpush1.msra.mxu0 0.0
    %1997 = vmatprep.subr.mxu0 0.0
    %1998 = vmatpush1.msra.mxu0 0.0
    %1999 = vmatprep.subr.mxu0 0.0
    %2000 = vmatpush1.msra.mxu0 0.0
    %2001 = vmatprep.subr.mxu0 0.0
    %2002 = vmatpush1.msra.mxu0 0.0
    %2003 = vmatprep.subr.mxu0 0.0
    %2004 = vmatpush1.msra.mxu0 0.0
    %2005 = vmatprep.subr.mxu0 0.0
    %2006 = vmatpush1.msra.mxu0 0.0
    %2007 = vmatprep.subr.mxu0 0.0
    %2008 = vmatpush1.msra.mxu0 0.0
    %2009 = vmatprep.subr.mxu0 0.0
    %2010 = vmatpush1.msra.mxu0 0.0
    %2011 = vmatprep.subr.mxu0 0.0
    %2012 = vmatpush1.msra.mxu0 0.0
    %2013 = vmatprep.subr.mxu0 0.0
    %2014 = vmatpush1.msra.mxu0 0.0
    %2015 = vmatprep.subr.mxu0 0.0
    %2016 = vmatpush1.msra.mxu0 0.0
    %2017 = vmatprep.subr.mxu0 0.0
    %2018 = vmatpush1.msra.mxu0 0.0
    %2019 = vmatprep.subr.mxu0 0.0
    %2020 = vmatpush1.msra.mxu0 0.0
    %2021 = vmatprep.subr.mxu0 0.0
    %2022 = vmatpush1.msra.mxu0 0.0
    %2023 = vmatprep.subr.mxu0 0.0
    %2024 = vmatpush1.msra.mxu0 0.0
    %2025 = vmatprep.subr.mxu0 0.0
    %2026 = vmatpush1.msra.mxu0 0.0
    %2027 = vmatprep.subr.mxu0 0.0
    %2028 = vmatpush1.msra.mxu0 0.0
    %2029 = vmatprep.subr.mxu0 0.0
    %2030 = vmatpush1.msra.mxu0 0.0
    %2031 = vmatprep.subr.mxu0 0.0
    %2032 = vmatpush1.msra.mxu0 0.0
    %2033 = vmatprep.subr.mxu0 0.0
    %2034 = vmatpush1.msra.mxu0 0.0
    %2035 = vmatprep.subr.mxu0 0.0
    %2036 = vmatpush1.msra.mxu0 0.0
    %2037 = vmatprep.mubr.f32.mxu0 0.0
    %2038 = vmatmul.mubr.f32.gmra.mrb[0].mxu0 %v1971
    %v2039 = vpop.f32.mrb[0].mxu0
    %v2040 = vadd.f32 0.0, %v2039
    %v2041 = vpop.f32.mrb[0].mxu0
    %2042 = vdwg.mxu0
    %v2043 = vadd.f32 %v1865, %v2040
    %v2044 = vmul.f32 %v2043, %v1872
    %v2045 = vtanh.pop %v2044
    %v2046 = vadd.f32 %v2045, 1.0
    %v2047 = vmul.f32 %v2046, 0.5
    %v2048 = vsel %vm1871, %v2045, %v2047
    %v2049 = vmul.f32 %v2048, %v1961
    %2051 = vrot.lane.b32.xlu0 %v2048, 112
    %v2052 = vpop.permute.xlu0 %2051
    %v2054 = vmul.f32 %v2048, %v2052
    %2056 = vrot.lane.b32.xlu0 %v2054, 8
    %v2057 = vpop.permute.xlu0 %2056
    %v2059 = vadd.f32 %v2049, %v2057
    %v2060 = vtanh.pop %v2059
    %2062 = vrot.lane.b32.xlu0 %v2060, 16
    %v2063 = vpop.permute.xlu0 %2062
    %v2065 = vmul.f32 %v2048, %v2063
    %2067 = vrot.lane.b32.xlu0 %v2065, 104
    %v2068 = vpop.permute.xlu0 %2067
    %v2069 = vsel %vm89, %v2068, 0
    %2071 = vmatprep.subr.mxu0 0.0
    %2072 = vmatpush1.msra.mxu0 %v1868
    %2073 = vmatprep.subr.mxu0 0.0
    %2074 = vmatpush1.msra.mxu0 0.0
    %2075 = vmatprep.subr.mxu0 0.0
    %2076 = vmatpush1.msra.mxu0 0.0
    %2077 = vmatprep.subr.mxu0 0.0
    %2078 = vmatpush1.msra.mxu0 0.0
    %2079 = vmatprep.subr.mxu0 0.0
    %2080 = vmatpush1.msra.mxu0 0.0
    %2081 = vmatprep.subr.mxu0 0.0
    %2082 = vmatpush1.msra.mxu0 0.0
    %2083 = vmatprep.subr.mxu0 0.0
    %2084 = vmatpush1.msra.mxu0 0.0
    %2085 = vmatprep.subr.mxu0 0.0
    %2086 = vmatpush1.msra.mxu0 0.0
    %2087 = vmatprep.subr.mxu0 0.0
    %2088 = vmatpush1.msra.mxu0 0.0
    %2089 = vmatprep.subr.mxu0 0.0
    %2090 = vmatpush1.msra.mxu0 0.0
    %2091 = vmatprep.subr.mxu0 0.0
    %2092 = vmatpush1.msra.mxu0 0.0
    %2093 = vmatprep.subr.mxu0 0.0
    %2094 = vmatpush1.msra.mxu0 0.0
    %2095 = vmatprep.subr.mxu0 0.0
    %2096 = vmatpush1.msra.mxu0 0.0
    %2097 = vmatprep.subr.mxu0 0.0
    %2098 = vmatpush1.msra.mxu0 0.0
    %2099 = vmatprep.subr.mxu0 0.0
    %2100 = vmatpush1.msra.mxu0 0.0
    %2101 = vmatprep.subr.mxu0 0.0
    %2102 = vmatpush1.msra.mxu0 0.0
    %2103 = vmatprep.subr.mxu0 0.0
    %2104 = vmatpush1.msra.mxu0 0.0
    %2105 = vmatprep.subr.mxu0 0.0
    %2106 = vmatpush1.msra.mxu0 0.0
    %2107 = vmatprep.subr.mxu0 0.0
    %2108 = vmatpush1.msra.mxu0 0.0
    %2109 = vmatprep.subr.mxu0 0.0
    %2110 = vmatpush1.msra.mxu0 0.0
    %2111 = vmatprep.subr.mxu0 0.0
    %2112 = vmatpush1.msra.mxu0 0.0
    %2113 = vmatprep.subr.mxu0 0.0
    %2114 = vmatpush1.msra.mxu0 0.0
    %2115 = vmatprep.subr.mxu0 0.0
    %2116 = vmatpush1.msra.mxu0 0.0
    %2117 = vmatprep.subr.mxu0 0.0
    %2118 = vmatpush1.msra.mxu0 0.0
    %2119 = vmatprep.subr.mxu0 0.0
    %2120 = vmatpush1.msra.mxu0 0.0
    %2121 = vmatprep.subr.mxu0 0.0
    %2122 = vmatpush1.msra.mxu0 0.0
    %2123 = vmatprep.subr.mxu0 0.0
    %2124 = vmatpush1.msra.mxu0 0.0
    %2125 = vmatprep.subr.mxu0 0.0
    %2126 = vmatpush1.msra.mxu0 0.0
    %2127 = vmatprep.subr.mxu0 0.0
    %2128 = vmatpush1.msra.mxu0 0.0
    %2129 = vmatprep.subr.mxu0 0.0
    %2130 = vmatpush1.msra.mxu0 0.0
    %2131 = vmatprep.subr.mxu0 0.0
    %2132 = vmatpush1.msra.mxu0 0.0
    %2133 = vmatprep.subr.mxu0 0.0
    %2134 = vmatpush1.msra.mxu0 0.0
    %2135 = vmatprep.mubr.f32.mxu0 0.0
    %2136 = vmatmul.mubr.f32.gmra.mrb[0].mxu0 %v2069
    %v2137 = vpop.f32.mrb[0].mxu0
    %v2138 = vadd.f32 0.0, %v2137
    %v2139 = vpop.f32.mrb[0].mxu0
    %2140 = vdwg.mxu0
    %v2141 = vadd.f32 %v1865, %v2138
    %v2142 = vmul.f32 %v2141, %v1872
    %v2143 = vtanh.pop %v2142
    %v2144 = vadd.f32 %v2143, 1.0
    %v2145 = vmul.f32 %v2144, 0.5
    %v2146 = vsel %vm1871, %v2143, %v2145
    %v2147 = vmul.f32 %v2146, %v2059
    %2149 = vrot.lane.b32.xlu0 %v2146, 112
    %v2150 = vpop.permute.xlu0 %2149
    %v2152 = vmul.f32 %v2146, %v2150
    %2154 = vrot.lane.b32.xlu0 %v2152, 8
    %v2155 = vpop.permute.xlu0 %2154
    %v2157 = vadd.f32 %v2147, %v2155
    %v2158 = vtanh.pop %v2157
    %2160 = vrot.lane.b32.xlu0 %v2158, 16
    %v2161 = vpop.permute.xlu0 %2160
    %v2163 = vmul.f32 %v2146, %v2161
    %2165 = vrot.lane.b32.xlu0 %v2163, 104
    %v2166 = vpop.permute.xlu0 %2165
    %v2167 = vsel %vm89, %v2166, 0
    %2169 = vmatprep.subr.mxu0 0.0
    %2170 = vmatpush1.msra.mxu0 %v1868
    %2171 = vmatprep.subr.mxu0 0.0
    %2172 = vmatpush1.msra.mxu0 0.0
    %2173 = vmatprep.subr.mxu0 0.0
    %2174 = vmatpush1.msra.mxu0 0.0
    %2175 = vmatprep.subr.mxu0 0.0
    %2176 = vmatpush1.msra.mxu0 0.0
    %2177 = vmatprep.subr.mxu0 0.0
    %2178 = vmatpush1.msra.mxu0 0.0
    %2179 = vmatprep.subr.mxu0 0.0
    %2180 = vmatpush1.msra.mxu0 0.0
    %2181 = vmatprep.subr.mxu0 0.0
    %2182 = vmatpush1.msra.mxu0 0.0
    %2183 = vmatprep.subr.mxu0 0.0
    %2184 = vmatpush1.msra.mxu0 0.0
    %2185 = vmatprep.subr.mxu0 0.0
    %2186 = vmatpush1.msra.mxu0 0.0
    %2187 = vmatprep.subr.mxu0 0.0
    %2188 = vmatpush1.msra.mxu0 0.0
    %2189 = vmatprep.subr.mxu0 0.0
    %2190 = vmatpush1.msra.mxu0 0.0
    %2191 = vmatprep.subr.mxu0 0.0
    %2192 = vmatpush1.msra.mxu0 0.0
    %2193 = vmatprep.subr.mxu0 0.0
    %2194 = vmatpush1.msra.mxu0 0.0
    %2195 = vmatprep.subr.mxu0 0.0
    %2196 = vmatpush1.msra.mxu0 0.0
    %2197 = vmatprep.subr.mxu0 0.0
    %2198 = vmatpush1.msra.mxu0 0.0
    %2199 = vmatprep.subr.mxu0 0.0
    %2200 = vmatpush1.msra.mxu0 0.0
    %2201 = vmatprep.subr.mxu0 0.0
    %2202 = vmatpush1.msra.mxu0 0.0
    %2203 = vmatprep.subr.mxu0 0.0
    %2204 = vmatpush1.msra.mxu0 0.0
    %2205 = vmatprep.subr.mxu0 0.0
    %2206 = vmatpush1.msra.mxu0 0.0
    %2207 = vmatprep.subr.mxu0 0.0
    %2208 = vmatpush1.msra.mxu0 0.0
    %2209 = vmatprep.subr.mxu0 0.0
    %2210 = vmatpush1.msra.mxu0 0.0
    %2211 = vmatprep.subr.mxu0 0.0
    %2212 = vmatpush1.msra.mxu0 0.0
    %2213 = vmatprep.subr.mxu0 0.0
    %2214 = vmatpush1.msra.mxu0 0.0
    %2215 = vmatprep.subr.mxu0 0.0
    %2216 = vmatpush1.msra.mxu0 0.0
    %2217 = vmatprep.subr.mxu0 0.0
    %2218 = vmatpush1.msra.mxu0 0.0
    %2219 = vmatprep.subr.mxu0 0.0
    %2220 = vmatpush1.msra.mxu0 0.0
    %2221 = vmatprep.subr.mxu0 0.0
    %2222 = vmatpush1.msra.mxu0 0.0
    %2223 = vmatprep.subr.mxu0 0.0
    %2224 = vmatpush1.msra.mxu0 0.0
    %2225 = vmatprep.subr.mxu0 0.0
    %2226 = vmatpush1.msra.mxu0 0.0
    %2227 = vmatprep.subr.mxu0 0.0
    %2228 = vmatpush1.msra.mxu0 0.0
    %2229 = vmatprep.subr.mxu0 0.0
    %2230 = vmatpush1.msra.mxu0 0.0
    %2231 = vmatprep.subr.mxu0 0.0
    %2232 = vmatpush1.msra.mxu0 0.0
    %2233 = vmatprep.mubr.f32.mxu0 0.0
    %2234 = vmatmul.mubr.f32.gmra.mrb[0].mxu0 %v2167
    %v2235 = vpop.f32.mrb[0].mxu0
    %v2236 = vadd.f32 0.0, %v2235
    %v2237 = vpop.f32.mrb[0].mxu0
    %2238 = vdwg.mxu0
    %v2239 = vadd.f32 %v1865, %v2236
    %v2240 = vmul.f32 %v2239, %v1872
    %v2241 = vtanh.pop %v2240
    %v2242 = vadd.f32 %v2241, 1.0
    %v2243 = vmul.f32 %v2242, 0.5
    %v2244 = vsel %vm1871, %v2241, %v2243
    %v2245 = vmul.f32 %v2244, %v2157
    %2247 = vrot.lane.b32.xlu0 %v2244, 112
    %v2248 = vpop.permute.xlu0 %2247
    %v2250 = vmul.f32 %v2244, %v2248
    %2252 = vrot.lane.b32.xlu0 %v2250, 8
    %v2253 = vpop.permute.xlu0 %2252
    %v2255 = vadd.f32 %v2245, %v2253
    %v2256 = vtanh.pop %v2255
    %2258 = vrot.lane.b32.xlu0 %v2256, 16
    %v2259 = vpop.permute.xlu0 %2258
    %v2261 = vmul.f32 %v2244, %v2259
    %2263 = vrot.lane.b32.xlu0 %v2261, 104
    %v2264 = vpop.permute.xlu0 %2263
    %v2265 = vsel %vm89, %v2264, 0
    %2267 = vmatprep.subr.mxu0 0.0
    %2268 = vmatpush1.msra.mxu0 %v1868
    %2269 = vmatprep.subr.mxu0 0.0
    %2270 = vmatpush1.msra.mxu0 0.0
    %2271 = vmatprep.subr.mxu0 0.0
    %2272 = vmatpush1.msra.mxu0 0.0
    %2273 = vmatprep.subr.mxu0 0.0
    %2274 = vmatpush1.msra.mxu0 0.0
    %2275 = vmatprep.subr.mxu0 0.0
    %2276 = vmatpush1.msra.mxu0 0.0
    %2277 = vmatprep.subr.mxu0 0.0
    %2278 = vmatpush1.msra.mxu0 0.0
    %2279 = vmatprep.subr.mxu0 0.0
    %2280 = vmatpush1.msra.mxu0 0.0
    %2281 = vmatprep.subr.mxu0 0.0
    %2282 = vmatpush1.msra.mxu0 0.0
    %2283 = vmatprep.subr.mxu0 0.0
    %2284 = vmatpush1.msra.mxu0 0.0
    %2285 = vmatprep.subr.mxu0 0.0
    %2286 = vmatpush1.msra.mxu0 0.0
    %2287 = vmatprep.subr.mxu0 0.0
    %2288 = vmatpush1.msra.mxu0 0.0
    %2289 = vmatprep.subr.mxu0 0.0
    %2290 = vmatpush1.msra.mxu0 0.0
    %2291 = vmatprep.subr.mxu0 0.0
    %2292 = vmatpush1.msra.mxu0 0.0
    %2293 = vmatprep.subr.mxu0 0.0
    %2294 = vmatpush1.msra.mxu0 0.0
    %2295 = vmatprep.subr.mxu0 0.0
    %2296 = vmatpush1.msra.mxu0 0.0
    %2297 = vmatprep.subr.mxu0 0.0
    %2298 = vmatpush1.msra.mxu0 0.0
    %2299 = vmatprep.subr.mxu0 0.0
    %2300 = vmatpush1.msra.mxu0 0.0
    %2301 = vmatprep.subr.mxu0 0.0
    %2302 = vmatpush1.msra.mxu0 0.0
    %2303 = vmatprep.subr.mxu0 0.0
    %2304 = vmatpush1.msra.mxu0 0.0
    %2305 = vmatprep.subr.mxu0 0.0
    %2306 = vmatpush1.msra.mxu0 0.0
    %2307 = vmatprep.subr.mxu0 0.0
    %2308 = vmatpush1.msra.mxu0 0.0
    %2309 = vmatprep.subr.mxu0 0.0
    %2310 = vmatpush1.msra.mxu0 0.0
    %2311 = vmatprep.subr.mxu0 0.0
    %2312 = vmatpush1.msra.mxu0 0.0
    %2313 = vmatprep.subr.mxu0 0.0
    %2314 = vmatpush1.msra.mxu0 0.0
    %2315 = vmatprep.subr.mxu0 0.0
    %2316 = vmatpush1.msra.mxu0 0.0
    %2317 = vmatprep.subr.mxu0 0.0
    %2318 = vmatpush1.msra.mxu0 0.0
    %2319 = vmatprep.subr.mxu0 0.0
    %2320 = vmatpush1.msra.mxu0 0.0
    %2321 = vmatprep.subr.mxu0 0.0
    %2322 = vmatpush1.msra.mxu0 0.0
    %2323 = vmatprep.subr.mxu0 0.0
    %2324 = vmatpush1.msra.mxu0 0.0
    %2325 = vmatprep.subr.mxu0 0.0
    %2326 = vmatpush1.msra.mxu0 0.0
    %2327 = vmatprep.subr.mxu0 0.0
    %2328 = vmatpush1.msra.mxu0 0.0
    %2329 = vmatprep.subr.mxu0 0.0
    %2330 = vmatpush1.msra.mxu0 0.0
    %2331 = vmatprep.mubr.f32.mxu0 0.0
    %2332 = vmatmul.mubr.f32.gmra.mrb[0].mxu0 %v2265
    %v2333 = vpop.f32.mrb[0].mxu0
    %v2334 = vadd.f32 0.0, %v2333
    %v2335 = vpop.f32.mrb[0].mxu0
    %2336 = vdwg.mxu0
    %v2337 = vadd.f32 %v1865, %v2334
    %v2338 = vmul.f32 %v2337, %v1872
    %v2339 = vtanh.pop %v2338
    %v2340 = vadd.f32 %v2339, 1.0
    %v2341 = vmul.f32 %v2340, 0.5
    %v2342 = vsel %vm1871, %v2339, %v2341
    %v2343 = vmul.f32 %v2342, %v2255
    %2345 = vrot.lane.b32.xlu0 %v2342, 112
    %v2346 = vpop.permute.xlu0 %2345
    %v2348 = vmul.f32 %v2342, %v2346
    %2350 = vrot.lane.b32.xlu0 %v2348, 8
    %v2351 = vpop.permute.xlu0 %2350
    %v2353 = vadd.f32 %v2343, %v2351
    %v2354 = vtanh.pop %v2353
    %2356 = vrot.lane.b32.xlu0 %v2354, 16
    %v2357 = vpop.permute.xlu0 %2356
    %v2359 = vmul.f32 %v2342, %v2357
    %2361 = vrot.lane.b32.xlu0 %v2359, 104
    %v2362 = vpop.permute.xlu0 %2361
    %v2363 = vsel %vm89, %v2362, 0
    %2365 = vmatprep.subr.mxu0 0.0
    %2366 = vmatpush1.msra.mxu0 %v1868
    %2367 = vmatprep.subr.mxu0 0.0
    %2368 = vmatpush1.msra.mxu0 0.0
    %2369 = vmatprep.subr.mxu0 0.0
    %2370 = vmatpush1.msra.mxu0 0.0
    %2371 = vmatprep.subr.mxu0 0.0
    %2372 = vmatpush1.msra.mxu0 0.0
    %2373 = vmatprep.subr.mxu0 0.0
    %2374 = vmatpush1.msra.mxu0 0.0
    %2375 = vmatprep.subr.mxu0 0.0
    %2376 = vmatpush1.msra.mxu0 0.0
    %2377 = vmatprep.subr.mxu0 0.0
    %2378 = vmatpush1.msra.mxu0 0.0
    %2379 = vmatprep.subr.mxu0 0.0
    %2380 = vmatpush1.msra.mxu0 0.0
    %2381 = vmatprep.subr.mxu0 0.0
    %2382 = vmatpush1.msra.mxu0 0.0
    %2383 = vmatprep.subr.mxu0 0.0
    %2384 = vmatpush1.msra.mxu0 0.0
    %2385 = vmatprep.subr.mxu0 0.0
    %2386 = vmatpush1.msra.mxu0 0.0
    %2387 = vmatprep.subr.mxu0 0.0
    %2388 = vmatpush1.msra.mxu0 0.0
    %2389 = vmatprep.subr.mxu0 0.0
    %2390 = vmatpush1.msra.mxu0 0.0
    %2391 = vmatprep.subr.mxu0 0.0
    %2392 = vmatpush1.msra.mxu0 0.0
    %2393 = vmatprep.subr.mxu0 0.0
    %2394 = vmatpush1.msra.mxu0 0.0
    %2395 = vmatprep.subr.mxu0 0.0
    %2396 = vmatpush1.msra.mxu0 0.0
    %2397 = vmatprep.subr.mxu0 0.0
    %2398 = vmatpush1.msra.mxu0 0.0
    %2399 = vmatprep.subr.mxu0 0.0
    %2400 = vmatpush1.msra.mxu0 0.0
    %2401 = vmatprep.subr.mxu0 0.0
    %2402 = vmatpush1.msra.mxu0 0.0
    %2403 = vmatprep.subr.mxu0 0.0
    %2404 = vmatpush1.msra.mxu0 0.0
    %2405 = vmatprep.subr.mxu0 0.0
    %2406 = vmatpush1.msra.mxu0 0.0
    %2407 = vmatprep.subr.mxu0 0.0
    %2408 = vmatpush1.msra.mxu0 0.0
    %2409 = vmatprep.subr.mxu0 0.0
    %2410 = vmatpush1.msra.mxu0 0.0
    %2411 = vmatprep.subr.mxu0 0.0
    %2412 = vmatpush1.msra.mxu0 0.0
    %2413 = vmatprep.subr.mxu0 0.0
    %2414 = vmatpush1.msra.mxu0 0.0
    %2415 = vmatprep.subr.mxu0 0.0
    %2416 = vmatpush1.msra.mxu0 0.0
    %2417 = vmatprep.subr.mxu0 0.0
    %2418 = vmatpush1.msra.mxu0 0.0
    %2419 = vmatprep.subr.mxu0 0.0
    %2420 = vmatpush1.msra.mxu0 0.0
    %2421 = vmatprep.subr.mxu0 0.0
    %2422 = vmatpush1.msra.mxu0 0.0
    %2423 = vmatprep.subr.mxu0 0.0
    %2424 = vmatpush1.msra.mxu0 0.0
    %2425 = vmatprep.subr.mxu0 0.0
    %2426 = vmatpush1.msra.mxu0 0.0
    %2427 = vmatprep.subr.mxu0 0.0
    %2428 = vmatpush1.msra.mxu0 0.0
    %2429 = vmatprep.mubr.f32.mxu0 0.0
    %2430 = vmatmul.mubr.f32.gmra.mrb[0].mxu0 %v2363
    %v2431 = vpop.f32.mrb[0].mxu0
    %v2432 = vadd.f32 0.0, %v2431
    %v2433 = vpop.f32.mrb[0].mxu0
    %2434 = vdwg.mxu0
    %v2435 = vadd.f32 %v1865, %v2432
    %v2436 = vmul.f32 %v2435, %v1872
    %v2437 = vtanh.pop %v2436
    %v2438 = vadd.f32 %v2437, 1.0
    %v2439 = vmul.f32 %v2438, 0.5
    %v2440 = vsel %vm1871, %v2437, %v2439
    %v2441 = vmul.f32 %v2440, %v2353
    %2443 = vrot.lane.b32.xlu0 %v2440, 112
    %v2444 = vpop.permute.xlu0 %2443
    %v2446 = vmul.f32 %v2440, %v2444
    %2448 = vrot.lane.b32.xlu0 %v2446, 8
    %v2449 = vpop.permute.xlu0 %2448
    %v2451 = vadd.f32 %v2441, %v2449
    %v2452 = vtanh.pop %v2451
    %2454 = vrot.lane.b32.xlu0 %v2452, 16
    %v2455 = vpop.permute.xlu0 %2454
    %v2457 = vmul.f32 %v2440, %v2455
    %2459 = vrot.lane.b32.xlu0 %v2457, 104
    %v2460 = vpop.permute.xlu0 %2459
    %v2461 = vsel %vm89, %v2460, 0
    %2463 = vmatprep.subr.mxu0 0.0
    %2464 = vmatpush1.msra.mxu0 %v1868
    %2465 = vmatprep.subr.mxu0 0.0
    %2466 = vmatpush1.msra.mxu0 0.0
    %2467 = vmatprep.subr.mxu0 0.0
    %2468 = vmatpush1.msra.mxu0 0.0
    %2469 = vmatprep.subr.mxu0 0.0
    %2470 = vmatpush1.msra.mxu0 0.0
    %2471 = vmatprep.subr.mxu0 0.0
    %2472 = vmatpush1.msra.mxu0 0.0
    %2473 = vmatprep.subr.mxu0 0.0
    %2474 = vmatpush1.msra.mxu0 0.0
    %2475 = vmatprep.subr.mxu0 0.0
    %2476 = vmatpush1.msra.mxu0 0.0
    %2477 = vmatprep.subr.mxu0 0.0
    %2478 = vmatpush1.msra.mxu0 0.0
    %2479 = vmatprep.subr.mxu0 0.0
    %2480 = vmatpush1.msra.mxu0 0.0
    %2481 = vmatprep.subr.mxu0 0.0
    %2482 = vmatpush1.msra.mxu0 0.0
    %2483 = vmatprep.subr.mxu0 0.0
    %2484 = vmatpush1.msra.mxu0 0.0
    %2485 = vmatprep.subr.mxu0 0.0
    %2486 = vmatpush1.msra.mxu0 0.0
    %2487 = vmatprep.subr.mxu0 0.0
    %2488 = vmatpush1.msra.mxu0 0.0
    %2489 = vmatprep.subr.mxu0 0.0
    %2490 = vmatpush1.msra.mxu0 0.0
    %2491 = vmatprep.subr.mxu0 0.0
    %2492 = vmatpush1.msra.mxu0 0.0
    %2493 = vmatprep.subr.mxu0 0.0
    %2494 = vmatpush1.msra.mxu0 0.0
    %2495 = vmatprep.subr.mxu0 0.0
    %2496 = vmatpush1.msra.mxu0 0.0
    %2497 = vmatprep.subr.mxu0 0.0
    %2498 = vmatpush1.msra.mxu0 0.0
    %2499 = vmatprep.subr.mxu0 0.0
    %2500 = vmatpush1.msra.mxu0 0.0
    %2501 = vmatprep.subr.mxu0 0.0
    %2502 = vmatpush1.msra.mxu0 0.0
    %2503 = vmatprep.subr.mxu0 0.0
    %2504 = vmatpush1.msra.mxu0 0.0
    %2505 = vmatprep.subr.mxu0 0.0
    %2506 = vmatpush1.msra.mxu0 0.0
    %2507 = vmatprep.subr.mxu0 0.0
    %2508 = vmatpush1.msra.mxu0 0.0
    %2509 = vmatprep.subr.mxu0 0.0
    %2510 = vmatpush1.msra.mxu0 0.0
    %2511 = vmatprep.subr.mxu0 0.0
    %2512 = vmatpush1.msra.mxu0 0.0
    %2513 = vmatprep.subr.mxu0 0.0
    %2514 = vmatpush1.msra.mxu0 0.0
    %2515 = vmatprep.subr.mxu0 0.0
    %2516 = vmatpush1.msra.mxu0 0.0
    %2517 = vmatprep.subr.mxu0 0.0
    %2518 = vmatpush1.msra.mxu0 0.0
    %2519 = vmatprep.subr.mxu0 0.0
    %2520 = vmatpush1.msra.mxu0 0.0
    %2521 = vmatprep.subr.mxu0 0.0
    %2522 = vmatpush1.msra.mxu0 0.0
    %2523 = vmatprep.subr.mxu0 0.0
    %2524 = vmatpush1.msra.mxu0 0.0
    %2525 = vmatprep.subr.mxu0 0.0
    %2526 = vmatpush1.msra.mxu0 0.0
    %2527 = vmatprep.mubr.f32.mxu0 0.0
    %2528 = vmatmul.mubr.f32.gmra.mrb[0].mxu0 %v2461
    %v2529 = vpop.f32.mrb[0].mxu0
    %v2530 = vadd.f32 0.0, %v2529
    %v2531 = vpop.f32.mrb[0].mxu0
    %2532 = vdwg.mxu0
    %v2533 = vadd.f32 %v1865, %v2530
    %v2534 = vmul.f32 %v2533, %v1872
    %v2535 = vtanh.pop %v2534
    %v2536 = vadd.f32 %v2535, 1.0
    %v2537 = vmul.f32 %v2536, 0.5
    %v2538 = vsel %vm1871, %v2535, %v2537
    %v2539 = vmul.f32 %v2538, %v2451
    %2541 = vrot.lane.b32.xlu0 %v2538, 112
    %v2542 = vpop.permute.xlu0 %2541
    %v2544 = vmul.f32 %v2538, %v2542
    %2546 = vrot.lane.b32.xlu0 %v2544, 8
    %v2547 = vpop.permute.xlu0 %2546
    %v2549 = vadd.f32 %v2539, %v2547
    %v2550 = vtanh.pop %v2549
    %2552 = vrot.lane.b32.xlu0 %v2550, 16
    %v2553 = vpop.permute.xlu0 %2552
    %v2555 = vmul.f32 %v2538, %v2553
    %2557 = vrot.lane.b32.xlu0 %v2555, 104
    %v2558 = vpop.permute.xlu0 %2557
    %v2559 = vsel %vm89, %v2558, 0
    %2561 = vmatprep.subr.mxu0 0.0
    %2562 = vmatpush1.msra.mxu0 %v1868
    %2563 = vmatprep.subr.mxu0 0.0
    %2564 = vmatpush1.msra.mxu0 0.0
    %2565 = vmatprep.subr.mxu0 0.0
    %2566 = vmatpush1.msra.mxu0 0.0
    %2567 = vmatprep.subr.mxu0 0.0
    %2568 = vmatpush1.msra.mxu0 0.0
    %2569 = vmatprep.subr.mxu0 0.0
    %2570 = vmatpush1.msra.mxu0 0.0
    %2571 = vmatprep.subr.mxu0 0.0
    %2572 = vmatpush1.msra.mxu0 0.0
    %2573 = vmatprep.subr.mxu0 0.0
    %2574 = vmatpush1.msra.mxu0 0.0
    %2575 = vmatprep.subr.mxu0 0.0
    %2576 = vmatpush1.msra.mxu0 0.0
    %2577 = vmatprep.subr.mxu0 0.0
    %2578 = vmatpush1.msra.mxu0 0.0
    %2579 = vmatprep.subr.mxu0 0.0
    %2580 = vmatpush1.msra.mxu0 0.0
    %2581 = vmatprep.subr.mxu0 0.0
    %2582 = vmatpush1.msra.mxu0 0.0
    %2583 = vmatprep.subr.mxu0 0.0
    %2584 = vmatpush1.msra.mxu0 0.0
    %2585 = vmatprep.subr.mxu0 0.0
    %2586 = vmatpush1.msra.mxu0 0.0
    %2587 = vmatprep.subr.mxu0 0.0
    %2588 = vmatpush1.msra.mxu0 0.0
    %2589 = vmatprep.subr.mxu0 0.0
    %2590 = vmatpush1.msra.mxu0 0.0
    %2591 = vmatprep.subr.mxu0 0.0
    %2592 = vmatpush1.msra.mxu0 0.0
    %2593 = vmatprep.subr.mxu0 0.0
    %2594 = vmatpush1.msra.mxu0 0.0
    %2595 = vmatprep.subr.mxu0 0.0
    %2596 = vmatpush1.msra.mxu0 0.0
    %2597 = vmatprep.subr.mxu0 0.0
    %2598 = vmatpush1.msra.mxu0 0.0
    %2599 = vmatprep.subr.mxu0 0.0
    %2600 = vmatpush1.msra.mxu0 0.0
    %2601 = vmatprep.subr.mxu0 0.0
    %2602 = vmatpush1.msra.mxu0 0.0
    %2603 = vmatprep.subr.mxu0 0.0
    %2604 = vmatpush1.msra.mxu0 0.0
    %2605 = vmatprep.subr.mxu0 0.0
    %2606 = vmatpush1.msra.mxu0 0.0
    %2607 = vmatprep.subr.mxu0 0.0
    %2608 = vmatpush1.msra.mxu0 0.0
    %2609 = vmatprep.subr.mxu0 0.0
    %2610 = vmatpush1.msra.mxu0 0.0
    %2611 = vmatprep.subr.mxu0 0.0
    %2612 = vmatpush1.msra.mxu0 0.0
    %2613 = vmatprep.subr.mxu0 0.0
    %2614 = vmatpush1.msra.mxu0 0.0
    %2615 = vmatprep.subr.mxu0 0.0
    %2616 = vmatpush1.msra.mxu0 0.0
    %2617 = vmatprep.subr.mxu0 0.0
    %2618 = vmatpush1.msra.mxu0 0.0
    %2619 = vmatprep.subr.mxu0 0.0
    %2620 = vmatpush1.msra.mxu0 0.0
    %2621 = vmatprep.subr.mxu0 0.0
    %2622 = vmatpush1.msra.mxu0 0.0
    %2623 = vmatprep.subr.mxu0 0.0
    %2624 = vmatpush1.msra.mxu0 0.0
    %2625 = vmatprep.mubr.f32.mxu0 0.0
    %2626 = vmatmul.mubr.f32.gmra.mrb[0].mxu0 %v2559
    %v2627 = vpop.f32.mrb[0].mxu0
    %v2628 = vadd.f32 0.0, %v2627
    %v2629 = vpop.f32.mrb[0].mxu0
    %2630 = vdwg.mxu0
    %v2631 = vadd.f32 %v1865, %v2628
    %v2632 = vmul.f32 %v2631, %v1872
    %v2633 = vtanh.pop %v2632
    %v2634 = vadd.f32 %v2633, 1.0
    %v2635 = vmul.f32 %v2634, 0.5
    %v2636 = vsel %vm1871, %v2633, %v2635
    %v2637 = vmul.f32 %v2636, %v2549
    %2639 = vrot.lane.b32.xlu0 %v2636, 112
    %v2640 = vpop.permute.xlu0 %2639
    %v2642 = vmul.f32 %v2636, %v2640
    %2644 = vrot.lane.b32.xlu0 %v2642, 8
    %v2645 = vpop.permute.xlu0 %2644
    %v2647 = vadd.f32 %v2637, %v2645
    %v2648 = vtanh.pop %v2647
    %2650 = vrot.lane.b32.xlu0 %v2648, 16
    %v2651 = vpop.permute.xlu0 %2650
    %v2653 = vmul.f32 %v2636, %v2651
    %2655 = vrot.lane.b32.xlu0 %v2065, 112
    %v2656 = vpop.permute.xlu0 %2655
    %2658 = vrot.lane.b32.xlu0 %v2163, 120
    %v2659 = vpop.permute.xlu0 %2658
    %2661 = vrot.lane.b32.xlu0 %v2359, 8
    %v2662 = vpop.permute.xlu0 %2661
    %2664 = vrot.lane.b32.xlu0 %v2457, 16
    %v2665 = vpop.permute.xlu0 %2664
    %2667 = vrot.lane.b32.xlu0 %v2555, 24
    %v2668 = vpop.permute.xlu0 %2667
    %2671 = vrot.lane.b32.xlu0 %v2653, 32
    %v2672 = vpop.permute.xlu0 %2671
    %v2674 = vsel %vm89, %v1970, %v2656
    %vm2675 = vcmask 130048
    %v2676 = vsel %vm2675, %v2674, %v2659
    %vm2677 = vcmask 195584
    %v2678 = vsel %vm2677, %v2676, %v2261
    %v2679 = vsel %vm190, %v2678, %v2662
    %vm2680 = vcmask 326656
    %v2681 = vsel %vm2680, %v2679, %v2665
    %vm2682 = vcmask 392192
    %v2683 = vsel %vm2682, %v2681, %v2668
    %vm2684 = vcmask 457728
    %v2685 = vsel %vm2684, %v2683, %v2672
    %2686 = vst.msk [vmem:[#allocation8] sm:$0x3] %vm1764, %v2685
    // Predicated region
    $region62: #{tpu_custom_call.1} parent=1 // pred_check
      _
    $region63: #{tpu_custom_call.1} parent=1 // pred_check_branch
      %2688 = sbr.rel (0) target = $region65
    $region64: #{tpu_custom_call.1} parent=1 // pred_region
      %s2690 = ssub.s32 32, 32
      %2691 = vsyncadd [#allocation5], %s2690
      %s2693 = sshll.u32 [#allocation8], 4
      %s2694 = int_to_ptr.vmem [resolvable:$true] %s2693
      %2696 = dma.vmem_to_hbm [thread:$0]  %s2694, 32, %s13, [#allocation5]
    $region65: #{tpu_custom_call.1} parent=1 // pred_fallthru
      _
    // Predicated region
    $region66: #{tpu_custom_call.1} parent=1 // pred_check
      _
    $region67: #{tpu_custom_call.1} parent=1 // pred_check_branch
      %2698 = sbr.rel (0) target = $region69
    $region68: #{tpu_custom_call.1} parent=1 // pred_region
      %2699 = dma.done [#allocation5], 32
    $region69: #{tpu_custom_call.1} parent=1 // pred_fallthru
      _
    %2700 = vsyncpa [#allocation4], 1
    %2701 = vsyncpa [#allocation7], 1
    %2702 = vsyncpa [#allocation5], 1

</llo_original>
